<compile_context>
chip_gen: v6e
topology: v6e:2x2x1
jax: 0.10.0
libtpu: 0.0.40
codegen_flags: <defaults>
</compile_context>

<pallas_src>
import functools

import jax
import jax.numpy as jnp
import numpy as np
from jax.experimental import pallas as pl
from jax.experimental.pallas import tpu as pltpu


# --------------------------------------------------------------------------------------
# Fused kernel: one grid step == one batch element, everything VMEM-resident
# --------------------------------------------------------------------------------------
def _fused_stage_kernel(d_ref, eps_ref,
                        tdbu_w_ref, tdbu_b_ref,
                        zp_w_ref, zp_b_ref,
                        p0_w_ref, p0_b_ref,
                        p1_w_ref, p1_b_ref,
                        sp_ref, h1_ref, dout_ref,
                        pad_ref, *, H, W, C, Z):
    M = H * W

    def conv3x3(w_ref, b_ref):
        """3x3 SAME conv over the activation currently held in pad_ref's interior."""
        xp = pad_ref[...]                                        # (H+2, W+2, C)
        acc = None
        for dy in range(3):
            for dx in range(3):
                patch = xp[dy:dy + H, dx:dx + W, :].reshape(M, C)
                t = jnp.dot(patch, w_ref[dy, dx],
                            preferred_element_type=jnp.float32)  # default MXU precision
                acc = t if acc is None else acc + t
        return acc + b_ref[...]                                  # (M, Cout)

    # Zero the halo once per grid step; the interior is overwritten before every conv.
    pad_ref[...] = jnp.zeros_like(pad_ref)

    # ---- td + bu stochastic heads fused into one 3x3 conv: C -> 4Z --------------------
    pad_ref[1:H + 1, 1:W + 1, :] = d_ref[0]
    sp = conv3x3(tdbu_w_ref, tdbu_b_ref)              # (M, 4Z) = [mu_td|mu_bu|ls_td|ls_bu]
    sp_ref[...] = sp.reshape(1, M, 4 * Z)

    mu = sp[:, :2 * Z]                                # [mu_td | mu_bu]
    log_sigma = sp[:, 2 * Z:]                         # [ls_td | ls_bu]
    z_cat = mu + jnp.exp(log_sigma) * eps_ref[0]      # (M, 2Z) = [z_td | z_bu]

    # ---- z_proj(cat([z_td, z_bu], ch)): concat + 1x1 conv fused into one matmul -------
    z = jnp.dot(z_cat, zp_w_ref[...], preferred_element_type=jnp.float32) + zp_b_ref[...]

    # ---- p_deterministic block 0 (in_residual=False): h1 = relu(conv(z)) --------------
    pad_ref[1:H + 1, 1:W + 1, :] = z.reshape(H, W, C)
    h1 = jnp.maximum(conv3x3(p0_w_ref, p0_b_ref), 0.0)           # (M, C)
    h1_ref[...] = h1.reshape(1, M, C)

    # ---- p_deterministic block 1 (residual): h2 = relu(conv(h1) + h1) -----------------
    pad_ref[1:H + 1, 1:W + 1, :] = h1.reshape(H, W, C)
    h2 = jnp.maximum(conv3x3(p1_w_ref, p1_b_ref) + h1, 0.0)
    dout_ref[...] = h2.reshape(1, M, C)


# --------------------------------------------------------------------------------------
# BivaIntermediateStage.forward (prior branch) wrapper
# --------------------------------------------------------------------------------------
def biva_intermediate_stage_forward(params, d, eps_td, eps_bu,
                                    aux=None, posterior=None, decode_from_p=False):
    if posterior is not None or decode_from_p:
        # TODO(synk): posterior / decode_from_p branch (merge + KL losses) not implemented.
        raise NotImplementedError("only the prior (posterior=None) branch is implemented")

    B, H, W, C = d.shape
    Z = eps_td.shape[-1]
    M = H * W

    # Pack both stochastic heads into one conv weight ordered [mu_td|mu_bu|ls_td|ls_bu]
    # (torch chunk(2, dim=1) ordering is mu first) so the sampled latents come out already
    # concatenated as [z_td|z_bu] and z_proj is a single matmul with the full (2Z, C) weight.
    td_w, bu_w = params["td_w"], params["bu_w"]
    td_b, bu_b = params["td_b"], params["bu_b"]
    tdbu_w = jnp.concatenate(
        [td_w[..., :Z], bu_w[..., :Z], td_w[..., Z:], bu_w[..., Z:]], axis=-1)   # (3,3,C,4Z)
    tdbu_b = jnp.concatenate(
        [td_b[:Z], bu_b[:Z], td_b[Z:], bu_b[Z:]], axis=0).reshape(1, 4 * Z)

    eps = jnp.concatenate([eps_td, eps_bu], axis=-1).reshape(B, M, 2 * Z)

    kernel = functools.partial(_fused_stage_kernel, H=H, W=W, C=C, Z=Z)
    act4 = lambda b: (b, 0, 0, 0)
    act3 = lambda b: (b, 0, 0)
    w4 = lambda b: (0, 0, 0, 0)
    w2 = lambda b: (0, 0)

    sp, h1, d_out = pl.pallas_call(
        kernel,
        out_shape=(
            jax.ShapeDtypeStruct((B, M, 4 * Z), jnp.float32),   # [mu_td|mu_bu|ls_td|ls_bu]
            jax.ShapeDtypeStruct((B, M, C), jnp.float32),       # h1 (skip)
            jax.ShapeDtypeStruct((B, M, C), jnp.float32),       # h2 (new d)
        ),
        grid=(B,),
        in_specs=[
            pl.BlockSpec((1, H, W, C), act4),          # d
            pl.BlockSpec((1, M, 2 * Z), act3),         # eps = [eps_td | eps_bu]
            pl.BlockSpec((3, 3, C, 4 * Z), w4),        # fused stochastic conv weight
            pl.BlockSpec((1, 4 * Z), w2),
            pl.BlockSpec((2 * Z, C), w2),              # z_proj (1x1 conv as matmul)
            pl.BlockSpec((1, C), w2),
            pl.BlockSpec((3, 3, C, C), w4),            # p_deterministic block 0
            pl.BlockSpec((1, C), w2),
            pl.BlockSpec((3, 3, C, C), w4),            # p_deterministic block 1
            pl.BlockSpec((1, C), w2),
        ],
        out_specs=(
            pl.BlockSpec((1, M, 4 * Z), act3),
            pl.BlockSpec((1, M, C), act3),
            pl.BlockSpec((1, M, C), act3),
        ),
        scratch_shapes=[pltpu.VMEM((H + 2, W + 2, C), jnp.float32)],   # reused halo buffer
        compiler_params=pltpu.CompilerParams(dimension_semantics=("parallel",)),
    )(d, eps, tdbu_w, tdbu_b,
      params["zproj_w"], params["zproj_b"].reshape(1, C),
      params["p0_w"], params["p0_b"].reshape(1, C),
      params["p1_w"], params["p1_b"].reshape(1, C))

    sp = sp.reshape(B, H, W, 4 * Z)
    h1 = h1.reshape(B, H, W, C)
    d_out = d_out.reshape(B, H, W, C)

    td_p_data = {"mu": sp[..., 0:Z], "log_sigma": sp[..., 2 * Z:3 * Z]}
    bu_p_data = {"mu": sp[..., Z:2 * Z], "log_sigma": sp[..., 3 * Z:4 * Z]}

    stage_data_td = {"q": None, "p": td_p_data, "loss": None,
                     "metadata": {"decode_from_p": decode_from_p, "bu_inference": False}}
    stage_data_bu = {"q": None, "p": bu_p_data, "loss": None,
                     "metadata": {"decode_from_p": decode_from_p, "bu_inference": True}}
    io_out = {"d": d_out, "aux": [h1, d_out]}
    return io_out, [stage_data_td, stage_data_bu]


# --------------------------------------------------------------------------------------
# parameter init + pure-JAX reference
# --------------------------------------------------------------------------------------
def init_params(key, C, Z):
    ks = jax.random.split(key, 10)

    def conv_w(k, kh, kw, cin, cout):
        fan_in = kh * kw * cin
        return jax.random.normal(k, (kh, kw, cin, cout), jnp.float32) / np.sqrt(fan_in)

    def bias(k, n):
        return 0.1 * jax.random.normal(k, (n,), jnp.float32)

    return {
        # td_stochastic / bu_stochastic : 3x3 conv, C -> 2Z (mu || log_sigma)
        "td_w": conv_w(ks[0], 3, 3, C, 2 * Z), "td_b": bias(ks[1], 2 * Z),
        "bu_w": conv_w(ks[2], 3, 3, C, 2 * Z), "bu_b": bias(ks[3], 2 * Z),
        # z_proj (AsFeatureMap) : 1x1 conv, 2Z -> C
        "zproj_w": conv_w(ks[4], 1, 1, 2 * Z, C)[0, 0], "zproj_b": bias(ks[5], C),
        # p_deterministic : two 3x3 blocks (filters=C, stride=1)
        "p0_w": conv_w(ks[6], 3, 3, C, C), "p0_b": bias(ks[7], C),
        "p1_w": conv_w(ks[8], 3, 3, C, C), "p1_b": bias(ks[9], C),
    }


def ref_forward(params, d, eps_td, eps_bu):
    def conv(x, w, b):
        y = jax.lax.conv_general_dilated(x, w, (1, 1), "SAME",
                                         dimension_numbers=("NHWC", "HWIO", "NHWC"))
        return y + b

    Z = eps_td.shape[-1]

    def head(x, w, b, eps):
        p = conv(x, w, b)
        mu, ls = p[..., :Z], p[..., Z:]
        return p, mu + jnp.exp(ls) * eps

    td_p, z_td = head(d, params["td_w"], params["td_b"], eps_td)
    bu_p, z_bu = head(d, params["bu_w"], params["bu_b"], eps_bu)
    z = jnp.concatenate([z_td, z_bu], axis=-1)
    z = jnp.einsum("bhwc,cf->bhwf", z, params["zproj_w"]) + params["zproj_b"]
    h1 = jax.nn.relu(conv(z, params["p0_w"], params["p0_b"]))
    h2 = jax.nn.relu(conv(h1, params["p1_w"], params["p1_b"]) + h1)
    return h2, [h1, h2], td_p, bu_p


if __name__ == "__main__":
    key = jax.random.PRNGKey(0)
    k_param, k_d, k_td, k_bu = jax.random.split(key, 4)

    B, C, H, W, Z = 2, 32, 8, 8, 16
    params = init_params(k_param, C, Z)

    # The PyTorch module receives io.d as NCHW; the kernel uses NHWC.
    d_nchw = jax.random.normal(k_d, (B, C, H, W), jnp.float32)
    d = jnp.transpose(d_nchw, (0, 2, 3, 1))
    eps_td = jax.random.normal(k_td, (B, H, W, Z), jnp.float32)
    eps_bu = jax.random.normal(k_bu, (B, H, W, Z), jnp.float32)

    io_out, stage_data = biva_intermediate_stage_forward(params, d, eps_td, eps_bu)
    jax.block_until_ready(io_out["d"])
    for s in io_out["aux"]:
        jax.block_until_ready(s)

    # sanity check against pure-JAX reference
    # (tolerance loosened because the kernel uses default MXU precision, not HIGHEST)
    d_ref, skips_ref, td_p_ref, bu_p_ref = ref_forward(params, d, eps_td, eps_bu)
    tol = dict(rtol=5e-2, atol=5e-2)
    np.testing.assert_allclose(np.asarray(io_out["d"]), np.asarray(d_ref), **tol)
    for got, want in zip(io_out["aux"], skips_ref):
        np.testing.assert_allclose(np.asarray(got), np.asarray(want), **tol)
    td_p, bu_p = stage_data[0]["p"], stage_data[1]["p"]
    np.testing.assert_allclose(np.asarray(td_p["mu"]), np.asarray(td_p_ref[..., :Z]), **tol)
    np.testing.assert_allclose(np.asarray(td_p["log_sigma"]), np.asarray(td_p_ref[..., Z:]), **tol)
    np.testing.assert_allclose(np.asarray(bu_p["mu"]), np.asarray(bu_p_ref[..., :Z]), **tol)
    np.testing.assert_allclose(np.asarray(bu_p["log_sigma"]), np.asarray(bu_p_ref[..., Z:]), **tol)

    print("KERNEL_OK")
</pallas_src>

<mosaic_0001>
module attributes {stable_mosaic.version = 11 : i64} {
  func.func @_fused_stage_kernel(%arg0: i32, %arg1: memref<1x8x8x32xf32, #tpu.memory_space<vmem>>, %arg2: memref<1x64x32xf32, #tpu.memory_space<vmem>>, %arg3: memref<3x3x32x64xf32, #tpu.memory_space<vmem>>, %arg4: memref<1x64xf32, #tpu.memory_space<vmem>>, %arg5: memref<32x32xf32, #tpu.memory_space<vmem>>, %arg6: memref<1x32xf32, #tpu.memory_space<vmem>>, %arg7: memref<3x3x32x32xf32, #tpu.memory_space<vmem>>, %arg8: memref<1x32xf32, #tpu.memory_space<vmem>>, %arg9: memref<3x3x32x32xf32, #tpu.memory_space<vmem>>, %arg10: memref<1x32xf32, #tpu.memory_space<vmem>>, %arg11: memref<1x64x64xf32, #tpu.memory_space<vmem>>, %arg12: memref<1x64x32xf32, #tpu.memory_space<vmem>>, %arg13: memref<1x64x32xf32, #tpu.memory_space<vmem>>, %arg14: memref<10x10x32xf32, #tpu.memory_space<vmem>>) attributes {dimension_semantics = [#tpu.dimension_semantics<parallel>], iteration_bounds = array<i64: 2>, scalar_prefetch = 0 : i64, scratch_operands = 1 : i64, tpu.core_type = #tpu.core_type<tc>, window_params = [{transform_indices = @transform_0, window_bounds = array<i64: 1, 8, 8, 32>}, {transform_indices = @transform_1, window_bounds = array<i64: 1, 64, 32>}, {pipeline_mode = #tpu.pipeline_mode<synchronous>, transform_indices = @transform_2, window_bounds = array<i64: 3, 3, 32, 64>}, {pipeline_mode = #tpu.pipeline_mode<synchronous>, transform_indices = @transform_3, window_bounds = array<i64: 1, 64>}, {pipeline_mode = #tpu.pipeline_mode<synchronous>, transform_indices = @transform_4, window_bounds = array<i64: 32, 32>}, {pipeline_mode = #tpu.pipeline_mode<synchronous>, transform_indices = @transform_5, window_bounds = array<i64: 1, 32>}, {pipeline_mode = #tpu.pipeline_mode<synchronous>, transform_indices = @transform_6, window_bounds = array<i64: 3, 3, 32, 32>}, {pipeline_mode = #tpu.pipeline_mode<synchronous>, transform_indices = @transform_7, window_bounds = array<i64: 1, 32>}, {pipeline_mode = #tpu.pipeline_mode<synchronous>, transform_indices = @transform_8, window_bounds = array<i64: 3, 3, 32, 32>}, {pipeline_mode = #tpu.pipeline_mode<synchronous>, transform_indices = @transform_9, window_bounds = array<i64: 1, 32>}, {transform_indices = @transform_10, window_bounds = array<i64: 1, 64, 64>}, {transform_indices = @transform_11, window_bounds = array<i64: 1, 64, 32>}, {transform_indices = @transform_12, window_bounds = array<i64: 1, 64, 32>}]} {
    %cst = arith.constant 0.000000e+00 : f32
    %0 = vector.broadcast %cst : f32 to vector<10x10x32xf32>
    %c0 = arith.constant 0 : index
    %c0_0 = arith.constant 0 : index
    %c0_1 = arith.constant 0 : index
    %1 = vector.load %arg14[%c0, %c0_0, %c0_1] : memref<10x10x32xf32, #tpu.memory_space<vmem>>, vector<10x10x32xf32>
    tpu.vector_store %arg14[%c0, %c0_0, %c0_1], %0 {strides = array<i32>} : memref<10x10x32xf32, #tpu.memory_space<vmem>>, vector<10x10x32xf32>,
    %c0_2 = arith.constant 0 : index
    %c0_3 = arith.constant 0 : index
    %c0_4 = arith.constant 0 : index
    %c0_5 = arith.constant 0 : index
    %2 = vector.load %arg1[%c0_2, %c0_3, %c0_4, %c0_5] : memref<1x8x8x32xf32, #tpu.memory_space<vmem>>, vector<1x8x8x32xf32>
    %3 = vector.shape_cast %2 : vector<1x8x8x32xf32> to vector<8x8x32xf32>
    %c1 = arith.constant 1 : index
    %c1_6 = arith.constant 1 : index
    %c0_7 = arith.constant 0 : index
    %4 = vector.load %arg14[%c1, %c1_6, %c0_7] : memref<10x10x32xf32, #tpu.memory_space<vmem>>, vector<8x8x32xf32>
    tpu.vector_store %arg14[%c1, %c1_6, %c0_7], %3 {strides = array<i32>} : memref<10x10x32xf32, #tpu.memory_space<vmem>>, vector<8x8x32xf32>,
    %c0_8 = arith.constant 0 : index
    %c0_9 = arith.constant 0 : index
    %c0_10 = arith.constant 0 : index
    %5 = vector.load %arg14[%c0_8, %c0_9, %c0_10] : memref<10x10x32xf32, #tpu.memory_space<vmem>>, vector<10x10x32xf32>
    %6 = vector.extract_strided_slice %5 {offsets = [0, 0, 0], sizes = [8, 8, 32], strides = [1, 1, 1]} : vector<10x10x32xf32> to vector<8x8x32xf32>
    %7 = vector.shape_cast %6 : vector<8x8x32xf32> to vector<64x32xf32>
    %c0_11 = arith.constant 0 : index
    %c0_12 = arith.constant 0 : index
    %c0_13 = arith.constant 0 : index
    %c0_14 = arith.constant 0 : index
    %8 = vector.load %arg3[%c0_11, %c0_12, %c0_13, %c0_14] : memref<3x3x32x64xf32, #tpu.memory_space<vmem>>, vector<1x1x32x64xf32>
    %9 = vector.shape_cast %8 : vector<1x1x32x64xf32> to vector<32x64xf32>
    %cst_15 = arith.constant dense<0.000000e+00> : vector<64x64xf32>
    %10 = tpu.matmul %7, %9, %cst_15 {dimension_numbers = #tpu.dot_dimension_numbers<[1], [0], [0], [1], [0, 0, 1, 1], [], []>} : vector<64x32xf32>, vector<32x64xf32>, vector<64x64xf32> -> vector<64x64xf32>
    %11 = vector.extract_strided_slice %5 {offsets = [0, 1, 0], sizes = [8, 8, 32], strides = [1, 1, 1]} : vector<10x10x32xf32> to vector<8x8x32xf32>
    %12 = vector.shape_cast %11 : vector<8x8x32xf32> to vector<64x32xf32>
    %c0_16 = arith.constant 0 : index
    %c1_17 = arith.constant 1 : index
    %c0_18 = arith.constant 0 : index
    %c0_19 = arith.constant 0 : index
    %13 = vector.load %arg3[%c0_16, %c1_17, %c0_18, %c0_19] : memref<3x3x32x64xf32, #tpu.memory_space<vmem>>, vector<1x1x32x64xf32>
    %14 = vector.shape_cast %13 : vector<1x1x32x64xf32> to vector<32x64xf32>
    %cst_20 = arith.constant dense<0.000000e+00> : vector<64x64xf32>
    %15 = tpu.matmul %12, %14, %cst_20 {dimension_numbers = #tpu.dot_dimension_numbers<[1], [0], [0], [1], [0, 0, 1, 1], [], []>} : vector<64x32xf32>, vector<32x64xf32>, vector<64x64xf32> -> vector<64x64xf32>
    %16 = arith.addf %10, %15 : vector<64x64xf32>
    %17 = vector.extract_strided_slice %5 {offsets = [0, 2, 0], sizes = [8, 8, 32], strides = [1, 1, 1]} : vector<10x10x32xf32> to vector<8x8x32xf32>
    %18 = vector.shape_cast %17 : vector<8x8x32xf32> to vector<64x32xf32>
    %c0_21 = arith.constant 0 : index
    %c2 = arith.constant 2 : index
    %c0_22 = arith.constant 0 : index
    %c0_23 = arith.constant 0 : index
    %19 = vector.load %arg3[%c0_21, %c2, %c0_22, %c0_23] : memref<3x3x32x64xf32, #tpu.memory_space<vmem>>, vector<1x1x32x64xf32>
    %20 = vector.shape_cast %19 : vector<1x1x32x64xf32> to vector<32x64xf32>
    %cst_24 = arith.constant dense<0.000000e+00> : vector<64x64xf32>
    %21 = tpu.matmul %18, %20, %cst_24 {dimension_numbers = #tpu.dot_dimension_numbers<[1], [0], [0], [1], [0, 0, 1, 1], [], []>} : vector<64x32xf32>, vector<32x64xf32>, vector<64x64xf32> -> vector<64x64xf32>
    %22 = arith.addf %16, %21 : vector<64x64xf32>
    %23 = vector.extract_strided_slice %5 {offsets = [1, 0, 0], sizes = [8, 8, 32], strides = [1, 1, 1]} : vector<10x10x32xf32> to vector<8x8x32xf32>
    %24 = vector.shape_cast %23 : vector<8x8x32xf32> to vector<64x32xf32>
    %c1_25 = arith.constant 1 : index
    %c0_26 = arith.constant 0 : index
    %c0_27 = arith.constant 0 : index
    %c0_28 = arith.constant 0 : index
    %25 = vector.load %arg3[%c1_25, %c0_26, %c0_27, %c0_28] : memref<3x3x32x64xf32, #tpu.memory_space<vmem>>, vector<1x1x32x64xf32>
    %26 = vector.shape_cast %25 : vector<1x1x32x64xf32> to vector<32x64xf32>
    %cst_29 = arith.constant dense<0.000000e+00> : vector<64x64xf32>
    %27 = tpu.matmul %24, %26, %cst_29 {dimension_numbers = #tpu.dot_dimension_numbers<[1], [0], [0], [1], [0, 0, 1, 1], [], []>} : vector<64x32xf32>, vector<32x64xf32>, vector<64x64xf32> -> vector<64x64xf32>
    %28 = arith.addf %22, %27 : vector<64x64xf32>
    %29 = vector.extract_strided_slice %5 {offsets = [1, 1, 0], sizes = [8, 8, 32], strides = [1, 1, 1]} : vector<10x10x32xf32> to vector<8x8x32xf32>
    %30 = vector.shape_cast %29 : vector<8x8x32xf32> to vector<64x32xf32>
    %c1_30 = arith.constant 1 : index
    %c1_31 = arith.constant 1 : index
    %c0_32 = arith.constant 0 : index
    %c0_33 = arith.constant 0 : index
    %31 = vector.load %arg3[%c1_30, %c1_31, %c0_32, %c0_33] : memref<3x3x32x64xf32, #tpu.memory_space<vmem>>, vector<1x1x32x64xf32>
    %32 = vector.shape_cast %31 : vector<1x1x32x64xf32> to vector<32x64xf32>
    %cst_34 = arith.constant dense<0.000000e+00> : vector<64x64xf32>
    %33 = tpu.matmul %30, %32, %cst_34 {dimension_numbers = #tpu.dot_dimension_numbers<[1], [0], [0], [1], [0, 0, 1, 1], [], []>} : vector<64x32xf32>, vector<32x64xf32>, vector<64x64xf32> -> vector<64x64xf32>
    %34 = arith.addf %28, %33 : vector<64x64xf32>
    %35 = vector.extract_strided_slice %5 {offsets = [1, 2, 0], sizes = [8, 8, 32], strides = [1, 1, 1]} : vector<10x10x32xf32> to vector<8x8x32xf32>
    %36 = vector.shape_cast %35 : vector<8x8x32xf32> to vector<64x32xf32>
    %c1_35 = arith.constant 1 : index
    %c2_36 = arith.constant 2 : index
    %c0_37 = arith.constant 0 : index
    %c0_38 = arith.constant 0 : index
    %37 = vector.load %arg3[%c1_35, %c2_36, %c0_37, %c0_38] : memref<3x3x32x64xf32, #tpu.memory_space<vmem>>, vector<1x1x32x64xf32>
    %38 = vector.shape_cast %37 : vector<1x1x32x64xf32> to vector<32x64xf32>
    %cst_39 = arith.constant dense<0.000000e+00> : vector<64x64xf32>
    %39 = tpu.matmul %36, %38, %cst_39 {dimension_numbers = #tpu.dot_dimension_numbers<[1], [0], [0], [1], [0, 0, 1, 1], [], []>} : vector<64x32xf32>, vector<32x64xf32>, vector<64x64xf32> -> vector<64x64xf32>
    %40 = arith.addf %34, %39 : vector<64x64xf32>
    %41 = vector.extract_strided_slice %5 {offsets = [2, 0, 0], sizes = [8, 8, 32], strides = [1, 1, 1]} : vector<10x10x32xf32> to vector<8x8x32xf32>
    %42 = vector.shape_cast %41 : vector<8x8x32xf32> to vector<64x32xf32>
    %c2_40 = arith.constant 2 : index
    %c0_41 = arith.constant 0 : index
    %c0_42 = arith.constant 0 : index
    %c0_43 = arith.constant 0 : index
    %43 = vector.load %arg3[%c2_40, %c0_41, %c0_42, %c0_43] : memref<3x3x32x64xf32, #tpu.memory_space<vmem>>, vector<1x1x32x64xf32>
    %44 = vector.shape_cast %43 : vector<1x1x32x64xf32> to vector<32x64xf32>
    %cst_44 = arith.constant dense<0.000000e+00> : vector<64x64xf32>
    %45 = tpu.matmul %42, %44, %cst_44 {dimension_numbers = #tpu.dot_dimension_numbers<[1], [0], [0], [1], [0, 0, 1, 1], [], []>} : vector<64x32xf32>, vector<32x64xf32>, vector<64x64xf32> -> vector<64x64xf32>
    %46 = arith.addf %40, %45 : vector<64x64xf32>
    %47 = vector.extract_strided_slice %5 {offsets = [2, 1, 0], sizes = [8, 8, 32], strides = [1, 1, 1]} : vector<10x10x32xf32> to vector<8x8x32xf32>
    %48 = vector.shape_cast %47 : vector<8x8x32xf32> to vector<64x32xf32>
    %c2_45 = arith.constant 2 : index
    %c1_46 = arith.constant 1 : index
    %c0_47 = arith.constant 0 : index
    %c0_48 = arith.constant 0 : index
    %49 = vector.load %arg3[%c2_45, %c1_46, %c0_47, %c0_48] : memref<3x3x32x64xf32, #tpu.memory_space<vmem>>, vector<1x1x32x64xf32>
    %50 = vector.shape_cast %49 : vector<1x1x32x64xf32> to vector<32x64xf32>
    %cst_49 = arith.constant dense<0.000000e+00> : vector<64x64xf32>
    %51 = tpu.matmul %48, %50, %cst_49 {dimension_numbers = #tpu.dot_dimension_numbers<[1], [0], [0], [1], [0, 0, 1, 1], [], []>} : vector<64x32xf32>, vector<32x64xf32>, vector<64x64xf32> -> vector<64x64xf32>
    %52 = arith.addf %46, %51 : vector<64x64xf32>
    %53 = vector.extract_strided_slice %5 {offsets = [2, 2, 0], sizes = [8, 8, 32], strides = [1, 1, 1]} : vector<10x10x32xf32> to vector<8x8x32xf32>
    %54 = vector.shape_cast %53 : vector<8x8x32xf32> to vector<64x32xf32>
    %c2_50 = arith.constant 2 : index
    %c2_51 = arith.constant 2 : index
    %c0_52 = arith.constant 0 : index
    %c0_53 = arith.constant 0 : index
    %55 = vector.load %arg3[%c2_50, %c2_51, %c0_52, %c0_53] : memref<3x3x32x64xf32, #tpu.memory_space<vmem>>, vector<1x1x32x64xf32>
    %56 = vector.shape_cast %55 : vector<1x1x32x64xf32> to vector<32x64xf32>
    %cst_54 = arith.constant dense<0.000000e+00> : vector<64x64xf32>
    %57 = tpu.matmul %54, %56, %cst_54 {dimension_numbers = #tpu.dot_dimension_numbers<[1], [0], [0], [1], [0, 0, 1, 1], [], []>} : vector<64x32xf32>, vector<32x64xf32>, vector<64x64xf32> -> vector<64x64xf32>
    %58 = arith.addf %52, %57 : vector<64x64xf32>
    %c0_55 = arith.constant 0 : index
    %c0_56 = arith.constant 0 : index
    %59 = vector.load %arg4[%c0_55, %c0_56] : memref<1x64xf32, #tpu.memory_space<vmem>>, vector<1x64xf32>
    %60 = vector.broadcast %59 : vector<1x64xf32> to vector<64x64xf32>
    %61 = arith.addf %58, %60 : vector<64x64xf32>
    %62 = vector.shape_cast %61 : vector<64x64xf32> to vector<1x64x64xf32>
    %c0_57 = arith.constant 0 : index
    %c0_58 = arith.constant 0 : index
    %c0_59 = arith.constant 0 : index
    %63 = vector.load %arg11[%c0_57, %c0_58, %c0_59] : memref<1x64x64xf32, #tpu.memory_space<vmem>>, vector<1x64x64xf32>
    tpu.vector_store %arg11[%c0_57, %c0_58, %c0_59], %62 {strides = array<i32>} : memref<1x64x64xf32, #tpu.memory_space<vmem>>, vector<1x64x64xf32>,
    %64 = vector.extract_strided_slice %61 {offsets = [0, 0], sizes = [64, 32], strides = [1, 1]} : vector<64x64xf32> to vector<64x32xf32>
    %65 = vector.extract_strided_slice %61 {offsets = [0, 32], sizes = [64, 32], strides = [1, 1]} : vector<64x64xf32> to vector<64x32xf32>
    %66 = math.exp %65 : vector<64x32xf32>
    %c0_60 = arith.constant 0 : index
    %c0_61 = arith.constant 0 : index
    %c0_62 = arith.constant 0 : index
    %67 = vector.load %arg2[%c0_60, %c0_61, %c0_62] : memref<1x64x32xf32, #tpu.memory_space<vmem>>, vector<1x64x32xf32>
    %68 = vector.shape_cast %67 : vector<1x64x32xf32> to vector<64x32xf32>
    %69 = arith.mulf %66, %68 : vector<64x32xf32>
    %70 = arith.addf %64, %69 : vector<64x32xf32>
    %c0_63 = arith.constant 0 : index
    %c0_64 = arith.constant 0 : index
    %71 = vector.load %arg5[%c0_63, %c0_64] : memref<32x32xf32, #tpu.memory_space<vmem>>, vector<32x32xf32>
    %cst_65 = arith.constant dense<0.000000e+00> : vector<64x32xf32>
    %72 = tpu.matmul %70, %71, %cst_65 {dimension_numbers = #tpu.dot_dimension_numbers<[1], [0], [0], [1], [0, 0, 1, 1], [], []>} : vector<64x32xf32>, vector<32x32xf32>, vector<64x32xf32> -> vector<64x32xf32>
    %c0_66 = arith.constant 0 : index
    %c0_67 = arith.constant 0 : index
    %73 = vector.load %arg6[%c0_66, %c0_67] : memref<1x32xf32, #tpu.memory_space<vmem>>, vector<1x32xf32>
    %74 = vector.broadcast %73 : vector<1x32xf32> to vector<64x32xf32>
    %75 = arith.addf %72, %74 : vector<64x32xf32>
    %76 = vector.shape_cast %75 : vector<64x32xf32> to vector<8x8x32xf32>
    %c1_68 = arith.constant 1 : index
    %c1_69 = arith.constant 1 : index
    %c0_70 = arith.constant 0 : index
    %77 = vector.load %arg14[%c1_68, %c1_69, %c0_70] : memref<10x10x32xf32, #tpu.memory_space<vmem>>, vector<8x8x32xf32>
    tpu.vector_store %arg14[%c1_68, %c1_69, %c0_70], %76 {strides = array<i32>} : memref<10x10x32xf32, #tpu.memory_space<vmem>>, vector<8x8x32xf32>,
    %c0_71 = arith.constant 0 : index
    %c0_72 = arith.constant 0 : index
    %c0_73 = arith.constant 0 : index
    %78 = vector.load %arg14[%c0_71, %c0_72, %c0_73] : memref<10x10x32xf32, #tpu.memory_space<vmem>>, vector<10x10x32xf32>
    %79 = vector.extract_strided_slice %78 {offsets = [0, 0, 0], sizes = [8, 8, 32], strides = [1, 1, 1]} : vector<10x10x32xf32> to vector<8x8x32xf32>
    %80 = vector.shape_cast %79 : vector<8x8x32xf32> to vector<64x32xf32>
    %c0_74 = arith.constant 0 : index
    %c0_75 = arith.constant 0 : index
    %c0_76 = arith.constant 0 : index
    %c0_77 = arith.constant 0 : index
    %81 = vector.load %arg7[%c0_74, %c0_75, %c0_76, %c0_77] : memref<3x3x32x32xf32, #tpu.memory_space<vmem>>, vector<1x1x32x32xf32>
    %82 = vector.shape_cast %81 : vector<1x1x32x32xf32> to vector<32x32xf32>
    %cst_78 = arith.constant dense<0.000000e+00> : vector<64x32xf32>
    %83 = tpu.matmul %80, %82, %cst_78 {dimension_numbers = #tpu.dot_dimension_numbers<[1], [0], [0], [1], [0, 0, 1, 1], [], []>} : vector<64x32xf32>, vector<32x32xf32>, vector<64x32xf32> -> vector<64x32xf32>
    %84 = vector.extract_strided_slice %78 {offsets = [0, 1, 0], sizes = [8, 8, 32], strides = [1, 1, 1]} : vector<10x10x32xf32> to vector<8x8x32xf32>
    %85 = vector.shape_cast %84 : vector<8x8x32xf32> to vector<64x32xf32>
    %c0_79 = arith.constant 0 : index
    %c1_80 = arith.constant 1 : index
    %c0_81 = arith.constant 0 : index
    %c0_82 = arith.constant 0 : index
    %86 = vector.load %arg7[%c0_79, %c1_80, %c0_81, %c0_82] : memref<3x3x32x32xf32, #tpu.memory_space<vmem>>, vector<1x1x32x32xf32>
    %87 = vector.shape_cast %86 : vector<1x1x32x32xf32> to vector<32x32xf32>
    %cst_83 = arith.constant dense<0.000000e+00> : vector<64x32xf32>
    %88 = tpu.matmul %85, %87, %cst_83 {dimension_numbers = #tpu.dot_dimension_numbers<[1], [0], [0], [1], [0, 0, 1, 1], [], []>} : vector<64x32xf32>, vector<32x32xf32>, vector<64x32xf32> -> vector<64x32xf32>
    %89 = arith.addf %83, %88 : vector<64x32xf32>
    %90 = vector.extract_strided_slice %78 {offsets = [0, 2, 0], sizes = [8, 8, 32], strides = [1, 1, 1]} : vector<10x10x32xf32> to vector<8x8x32xf32>
    %91 = vector.shape_cast %90 : vector<8x8x32xf32> to vector<64x32xf32>
    %c0_84 = arith.constant 0 : index
    %c2_85 = arith.constant 2 : index
    %c0_86 = arith.constant 0 : index
    %c0_87 = arith.constant 0 : index
    %92 = vector.load %arg7[%c0_84, %c2_85, %c0_86, %c0_87] : memref<3x3x32x32xf32, #tpu.memory_space<vmem>>, vector<1x1x32x32xf32>
    %93 = vector.shape_cast %92 : vector<1x1x32x32xf32> to vector<32x32xf32>
    %cst_88 = arith.constant dense<0.000000e+00> : vector<64x32xf32>
    %94 = tpu.matmul %91, %93, %cst_88 {dimension_numbers = #tpu.dot_dimension_numbers<[1], [0], [0], [1], [0, 0, 1, 1], [], []>} : vector<64x32xf32>, vector<32x32xf32>, vector<64x32xf32> -> vector<64x32xf32>
    %95 = arith.addf %89, %94 : vector<64x32xf32>
    %96 = vector.extract_strided_slice %78 {offsets = [1, 0, 0], sizes = [8, 8, 32], strides = [1, 1, 1]} : vector<10x10x32xf32> to vector<8x8x32xf32>
    %97 = vector.shape_cast %96 : vector<8x8x32xf32> to vector<64x32xf32>
    %c1_89 = arith.constant 1 : index
    %c0_90 = arith.constant 0 : index
    %c0_91 = arith.constant 0 : index
    %c0_92 = arith.constant 0 : index
    %98 = vector.load %arg7[%c1_89, %c0_90, %c0_91, %c0_92] : memref<3x3x32x32xf32, #tpu.memory_space<vmem>>, vector<1x1x32x32xf32>
    %99 = vector.shape_cast %98 : vector<1x1x32x32xf32> to vector<32x32xf32>
    %cst_93 = arith.constant dense<0.000000e+00> : vector<64x32xf32>
    %100 = tpu.matmul %97, %99, %cst_93 {dimension_numbers = #tpu.dot_dimension_numbers<[1], [0], [0], [1], [0, 0, 1, 1], [], []>} : vector<64x32xf32>, vector<32x32xf32>, vector<64x32xf32> -> vector<64x32xf32>
    %101 = arith.addf %95, %100 : vector<64x32xf32>
    %102 = vector.extract_strided_slice %78 {offsets = [1, 1, 0], sizes = [8, 8, 32], strides = [1, 1, 1]} : vector<10x10x32xf32> to vector<8x8x32xf32>
    %103 = vector.shape_cast %102 : vector<8x8x32xf32> to vector<64x32xf32>
    %c1_94 = arith.constant 1 : index
    %c1_95 = arith.constant 1 : index
    %c0_96 = arith.constant 0 : index
    %c0_97 = arith.constant 0 : index
    %104 = vector.load %arg7[%c1_94, %c1_95, %c0_96, %c0_97] : memref<3x3x32x32xf32, #tpu.memory_space<vmem>>, vector<1x1x32x32xf32>
    %105 = vector.shape_cast %104 : vector<1x1x32x32xf32> to vector<32x32xf32>
    %cst_98 = arith.constant dense<0.000000e+00> : vector<64x32xf32>
    %106 = tpu.matmul %103, %105, %cst_98 {dimension_numbers = #tpu.dot_dimension_numbers<[1], [0], [0], [1], [0, 0, 1, 1], [], []>} : vector<64x32xf32>, vector<32x32xf32>, vector<64x32xf32> -> vector<64x32xf32>
    %107 = arith.addf %101, %106 : vector<64x32xf32>
    %108 = vector.extract_strided_slice %78 {offsets = [1, 2, 0], sizes = [8, 8, 32], strides = [1, 1, 1]} : vector<10x10x32xf32> to vector<8x8x32xf32>
    %109 = vector.shape_cast %108 : vector<8x8x32xf32> to vector<64x32xf32>
    %c1_99 = arith.constant 1 : index
    %c2_100 = arith.constant 2 : index
    %c0_101 = arith.constant 0 : index
    %c0_102 = arith.constant 0 : index
    %110 = vector.load %arg7[%c1_99, %c2_100, %c0_101, %c0_102] : memref<3x3x32x32xf32, #tpu.memory_space<vmem>>, vector<1x1x32x32xf32>
    %111 = vector.shape_cast %110 : vector<1x1x32x32xf32> to vector<32x32xf32>
    %cst_103 = arith.constant dense<0.000000e+00> : vector<64x32xf32>
    %112 = tpu.matmul %109, %111, %cst_103 {dimension_numbers = #tpu.dot_dimension_numbers<[1], [0], [0], [1], [0, 0, 1, 1], [], []>} : vector<64x32xf32>, vector<32x32xf32>, vector<64x32xf32> -> vector<64x32xf32>
    %113 = arith.addf %107, %112 : vector<64x32xf32>
    %114 = vector.extract_strided_slice %78 {offsets = [2, 0, 0], sizes = [8, 8, 32], strides = [1, 1, 1]} : vector<10x10x32xf32> to vector<8x8x32xf32>
    %115 = vector.shape_cast %114 : vector<8x8x32xf32> to vector<64x32xf32>
    %c2_104 = arith.constant 2 : index
    %c0_105 = arith.constant 0 : index
    %c0_106 = arith.constant 0 : index
    %c0_107 = arith.constant 0 : index
    %116 = vector.load %arg7[%c2_104, %c0_105, %c0_106, %c0_107] : memref<3x3x32x32xf32, #tpu.memory_space<vmem>>, vector<1x1x32x32xf32>
    %117 = vector.shape_cast %116 : vector<1x1x32x32xf32> to vector<32x32xf32>
    %cst_108 = arith.constant dense<0.000000e+00> : vector<64x32xf32>
    %118 = tpu.matmul %115, %117, %cst_108 {dimension_numbers = #tpu.dot_dimension_numbers<[1], [0], [0], [1], [0, 0, 1, 1], [], []>} : vector<64x32xf32>, vector<32x32xf32>, vector<64x32xf32> -> vector<64x32xf32>
    %119 = arith.addf %113, %118 : vector<64x32xf32>
    %120 = vector.extract_strided_slice %78 {offsets = [2, 1, 0], sizes = [8, 8, 32], strides = [1, 1, 1]} : vector<10x10x32xf32> to vector<8x8x32xf32>
    %121 = vector.shape_cast %120 : vector<8x8x32xf32> to vector<64x32xf32>
    %c2_109 = arith.constant 2 : index
    %c1_110 = arith.constant 1 : index
    %c0_111 = arith.constant 0 : index
    %c0_112 = arith.constant 0 : index
    %122 = vector.load %arg7[%c2_109, %c1_110, %c0_111, %c0_112] : memref<3x3x32x32xf32, #tpu.memory_space<vmem>>, vector<1x1x32x32xf32>
    %123 = vector.shape_cast %122 : vector<1x1x32x32xf32> to vector<32x32xf32>
    %cst_113 = arith.constant dense<0.000000e+00> : vector<64x32xf32>
    %124 = tpu.matmul %121, %123, %cst_113 {dimension_numbers = #tpu.dot_dimension_numbers<[1], [0], [0], [1], [0, 0, 1, 1], [], []>} : vector<64x32xf32>, vector<32x32xf32>, vector<64x32xf32> -> vector<64x32xf32>
    %125 = arith.addf %119, %124 : vector<64x32xf32>
    %126 = vector.extract_strided_slice %78 {offsets = [2, 2, 0], sizes = [8, 8, 32], strides = [1, 1, 1]} : vector<10x10x32xf32> to vector<8x8x32xf32>
    %127 = vector.shape_cast %126 : vector<8x8x32xf32> to vector<64x32xf32>
    %c2_114 = arith.constant 2 : index
    %c2_115 = arith.constant 2 : index
    %c0_116 = arith.constant 0 : index
    %c0_117 = arith.constant 0 : index
    %128 = vector.load %arg7[%c2_114, %c2_115, %c0_116, %c0_117] : memref<3x3x32x32xf32, #tpu.memory_space<vmem>>, vector<1x1x32x32xf32>
    %129 = vector.shape_cast %128 : vector<1x1x32x32xf32> to vector<32x32xf32>
    %cst_118 = arith.constant dense<0.000000e+00> : vector<64x32xf32>
    %130 = tpu.matmul %127, %129, %cst_118 {dimension_numbers = #tpu.dot_dimension_numbers<[1], [0], [0], [1], [0, 0, 1, 1], [], []>} : vector<64x32xf32>, vector<32x32xf32>, vector<64x32xf32> -> vector<64x32xf32>
    %131 = arith.addf %125, %130 : vector<64x32xf32>
    %c0_119 = arith.constant 0 : index
    %c0_120 = arith.constant 0 : index
    %132 = vector.load %arg8[%c0_119, %c0_120] : memref<1x32xf32, #tpu.memory_space<vmem>>, vector<1x32xf32>
    %133 = vector.broadcast %132 : vector<1x32xf32> to vector<64x32xf32>
    %134 = arith.addf %131, %133 : vector<64x32xf32>
    %cst_121 = arith.constant 0.000000e+00 : f32
    %135 = vector.broadcast %cst_121 : f32 to vector<64x32xf32>
    %136 = arith.maximumf %134, %135 : vector<64x32xf32>
    %137 = vector.shape_cast %136 : vector<64x32xf32> to vector<1x64x32xf32>
    %c0_122 = arith.constant 0 : index
    %c0_123 = arith.constant 0 : index
    %c0_124 = arith.constant 0 : index
    %138 = vector.load %arg12[%c0_122, %c0_123, %c0_124] : memref<1x64x32xf32, #tpu.memory_space<vmem>>, vector<1x64x32xf32>
    tpu.vector_store %arg12[%c0_122, %c0_123, %c0_124], %137 {strides = array<i32>} : memref<1x64x32xf32, #tpu.memory_space<vmem>>, vector<1x64x32xf32>,
    %139 = vector.shape_cast %136 : vector<64x32xf32> to vector<8x8x32xf32>
    %c1_125 = arith.constant 1 : index
    %c1_126 = arith.constant 1 : index
    %c0_127 = arith.constant 0 : index
    %140 = vector.load %arg14[%c1_125, %c1_126, %c0_127] : memref<10x10x32xf32, #tpu.memory_space<vmem>>, vector<8x8x32xf32>
    tpu.vector_store %arg14[%c1_125, %c1_126, %c0_127], %139 {strides = array<i32>} : memref<10x10x32xf32, #tpu.memory_space<vmem>>, vector<8x8x32xf32>,
    %c0_128 = arith.constant 0 : index
    %c0_129 = arith.constant 0 : index
    %c0_130 = arith.constant 0 : index
    %141 = vector.load %arg14[%c0_128, %c0_129, %c0_130] : memref<10x10x32xf32, #tpu.memory_space<vmem>>, vector<10x10x32xf32>
    %142 = vector.extract_strided_slice %141 {offsets = [0, 0, 0], sizes = [8, 8, 32], strides = [1, 1, 1]} : vector<10x10x32xf32> to vector<8x8x32xf32>
    %143 = vector.shape_cast %142 : vector<8x8x32xf32> to vector<64x32xf32>
    %c0_131 = arith.constant 0 : index
    %c0_132 = arith.constant 0 : index
    %c0_133 = arith.constant 0 : index
    %c0_134 = arith.constant 0 : index
    %144 = vector.load %arg9[%c0_131, %c0_132, %c0_133, %c0_134] : memref<3x3x32x32xf32, #tpu.memory_space<vmem>>, vector<1x1x32x32xf32>
    %145 = vector.shape_cast %144 : vector<1x1x32x32xf32> to vector<32x32xf32>
    %cst_135 = arith.constant dense<0.000000e+00> : vector<64x32xf32>
    %146 = tpu.matmul %143, %145, %cst_135 {dimension_numbers = #tpu.dot_dimension_numbers<[1], [0], [0], [1], [0, 0, 1, 1], [], []>} : vector<64x32xf32>, vector<32x32xf32>, vector<64x32xf32> -> vector<64x32xf32>
    %147 = vector.extract_strided_slice %141 {offsets = [0, 1, 0], sizes = [8, 8, 32], strides = [1, 1, 1]} : vector<10x10x32xf32> to vector<8x8x32xf32>
    %148 = vector.shape_cast %147 : vector<8x8x32xf32> to vector<64x32xf32>
    %c0_136 = arith.constant 0 : index
    %c1_137 = arith.constant 1 : index
    %c0_138 = arith.constant 0 : index
    %c0_139 = arith.constant 0 : index
    %149 = vector.load %arg9[%c0_136, %c1_137, %c0_138, %c0_139] : memref<3x3x32x32xf32, #tpu.memory_space<vmem>>, vector<1x1x32x32xf32>
    %150 = vector.shape_cast %149 : vector<1x1x32x32xf32> to vector<32x32xf32>
    %cst_140 = arith.constant dense<0.000000e+00> : vector<64x32xf32>
    %151 = tpu.matmul %148, %150, %cst_140 {dimension_numbers = #tpu.dot_dimension_numbers<[1], [0], [0], [1], [0, 0, 1, 1], [], []>} : vector<64x32xf32>, vector<32x32xf32>, vector<64x32xf32> -> vector<64x32xf32>
    %152 = arith.addf %146, %151 : vector<64x32xf32>
    %153 = vector.extract_strided_slice %141 {offsets = [0, 2, 0], sizes = [8, 8, 32], strides = [1, 1, 1]} : vector<10x10x32xf32> to vector<8x8x32xf32>
    %154 = vector.shape_cast %153 : vector<8x8x32xf32> to vector<64x32xf32>
    %c0_141 = arith.constant 0 : index
    %c2_142 = arith.constant 2 : index
    %c0_143 = arith.constant 0 : index
    %c0_144 = arith.constant 0 : index
    %155 = vector.load %arg9[%c0_141, %c2_142, %c0_143, %c0_144] : memref<3x3x32x32xf32, #tpu.memory_space<vmem>>, vector<1x1x32x32xf32>
    %156 = vector.shape_cast %155 : vector<1x1x32x32xf32> to vector<32x32xf32>
    %cst_145 = arith.constant dense<0.000000e+00> : vector<64x32xf32>
    %157 = tpu.matmul %154, %156, %cst_145 {dimension_numbers = #tpu.dot_dimension_numbers<[1], [0], [0], [1], [0, 0, 1, 1], [], []>} : vector<64x32xf32>, vector<32x32xf32>, vector<64x32xf32> -> vector<64x32xf32>
    %158 = arith.addf %152, %157 : vector<64x32xf32>
    %159 = vector.extract_strided_slice %141 {offsets = [1, 0, 0], sizes = [8, 8, 32], strides = [1, 1, 1]} : vector<10x10x32xf32> to vector<8x8x32xf32>
    %160 = vector.shape_cast %159 : vector<8x8x32xf32> to vector<64x32xf32>
    %c1_146 = arith.constant 1 : index
    %c0_147 = arith.constant 0 : index
    %c0_148 = arith.constant 0 : index
    %c0_149 = arith.constant 0 : index
    %161 = vector.load %arg9[%c1_146, %c0_147, %c0_148, %c0_149] : memref<3x3x32x32xf32, #tpu.memory_space<vmem>>, vector<1x1x32x32xf32>
    %162 = vector.shape_cast %161 : vector<1x1x32x32xf32> to vector<32x32xf32>
    %cst_150 = arith.constant dense<0.000000e+00> : vector<64x32xf32>
    %163 = tpu.matmul %160, %162, %cst_150 {dimension_numbers = #tpu.dot_dimension_numbers<[1], [0], [0], [1], [0, 0, 1, 1], [], []>} : vector<64x32xf32>, vector<32x32xf32>, vector<64x32xf32> -> vector<64x32xf32>
    %164 = arith.addf %158, %163 : vector<64x32xf32>
    %165 = vector.extract_strided_slice %141 {offsets = [1, 1, 0], sizes = [8, 8, 32], strides = [1, 1, 1]} : vector<10x10x32xf32> to vector<8x8x32xf32>
    %166 = vector.shape_cast %165 : vector<8x8x32xf32> to vector<64x32xf32>
    %c1_151 = arith.constant 1 : index
    %c1_152 = arith.constant 1 : index
    %c0_153 = arith.constant 0 : index
    %c0_154 = arith.constant 0 : index
    %167 = vector.load %arg9[%c1_151, %c1_152, %c0_153, %c0_154] : memref<3x3x32x32xf32, #tpu.memory_space<vmem>>, vector<1x1x32x32xf32>
    %168 = vector.shape_cast %167 : vector<1x1x32x32xf32> to vector<32x32xf32>
    %cst_155 = arith.constant dense<0.000000e+00> : vector<64x32xf32>
    %169 = tpu.matmul %166, %168, %cst_155 {dimension_numbers = #tpu.dot_dimension_numbers<[1], [0], [0], [1], [0, 0, 1, 1], [], []>} : vector<64x32xf32>, vector<32x32xf32>, vector<64x32xf32> -> vector<64x32xf32>
    %170 = arith.addf %164, %169 : vector<64x32xf32>
    %171 = vector.extract_strided_slice %141 {offsets = [1, 2, 0], sizes = [8, 8, 32], strides = [1, 1, 1]} : vector<10x10x32xf32> to vector<8x8x32xf32>
    %172 = vector.shape_cast %171 : vector<8x8x32xf32> to vector<64x32xf32>
    %c1_156 = arith.constant 1 : index
    %c2_157 = arith.constant 2 : index
    %c0_158 = arith.constant 0 : index
    %c0_159 = arith.constant 0 : index
    %173 = vector.load %arg9[%c1_156, %c2_157, %c0_158, %c0_159] : memref<3x3x32x32xf32, #tpu.memory_space<vmem>>, vector<1x1x32x32xf32>
    %174 = vector.shape_cast %173 : vector<1x1x32x32xf32> to vector<32x32xf32>
    %cst_160 = arith.constant dense<0.000000e+00> : vector<64x32xf32>
    %175 = tpu.matmul %172, %174, %cst_160 {dimension_numbers = #tpu.dot_dimension_numbers<[1], [0], [0], [1], [0, 0, 1, 1], [], []>} : vector<64x32xf32>, vector<32x32xf32>, vector<64x32xf32> -> vector<64x32xf32>
    %176 = arith.addf %170, %175 : vector<64x32xf32>
    %177 = vector.extract_strided_slice %141 {offsets = [2, 0, 0], sizes = [8, 8, 32], strides = [1, 1, 1]} : vector<10x10x32xf32> to vector<8x8x32xf32>
    %178 = vector.shape_cast %177 : vector<8x8x32xf32> to vector<64x32xf32>
    %c2_161 = arith.constant 2 : index
    %c0_162 = arith.constant 0 : index
    %c0_163 = arith.constant 0 : index
    %c0_164 = arith.constant 0 : index
    %179 = vector.load %arg9[%c2_161, %c0_162, %c0_163, %c0_164] : memref<3x3x32x32xf32, #tpu.memory_space<vmem>>, vector<1x1x32x32xf32>
    %180 = vector.shape_cast %179 : vector<1x1x32x32xf32> to vector<32x32xf32>
    %cst_165 = arith.constant dense<0.000000e+00> : vector<64x32xf32>
    %181 = tpu.matmul %178, %180, %cst_165 {dimension_numbers = #tpu.dot_dimension_numbers<[1], [0], [0], [1], [0, 0, 1, 1], [], []>} : vector<64x32xf32>, vector<32x32xf32>, vector<64x32xf32> -> vector<64x32xf32>
    %182 = arith.addf %176, %181 : vector<64x32xf32>
    %183 = vector.extract_strided_slice %141 {offsets = [2, 1, 0], sizes = [8, 8, 32], strides = [1, 1, 1]} : vector<10x10x32xf32> to vector<8x8x32xf32>
    %184 = vector.shape_cast %183 : vector<8x8x32xf32> to vector<64x32xf32>
    %c2_166 = arith.constant 2 : index
    %c1_167 = arith.constant 1 : index
    %c0_168 = arith.constant 0 : index
    %c0_169 = arith.constant 0 : index
    %185 = vector.load %arg9[%c2_166, %c1_167, %c0_168, %c0_169] : memref<3x3x32x32xf32, #tpu.memory_space<vmem>>, vector<1x1x32x32xf32>
    %186 = vector.shape_cast %185 : vector<1x1x32x32xf32> to vector<32x32xf32>
    %cst_170 = arith.constant dense<0.000000e+00> : vector<64x32xf32>
    %187 = tpu.matmul %184, %186, %cst_170 {dimension_numbers = #tpu.dot_dimension_numbers<[1], [0], [0], [1], [0, 0, 1, 1], [], []>} : vector<64x32xf32>, vector<32x32xf32>, vector<64x32xf32> -> vector<64x32xf32>
    %188 = arith.addf %182, %187 : vector<64x32xf32>
    %189 = vector.extract_strided_slice %141 {offsets = [2, 2, 0], sizes = [8, 8, 32], strides = [1, 1, 1]} : vector<10x10x32xf32> to vector<8x8x32xf32>
    %190 = vector.shape_cast %189 : vector<8x8x32xf32> to vector<64x32xf32>
    %c2_171 = arith.constant 2 : index
    %c2_172 = arith.constant 2 : index
    %c0_173 = arith.constant 0 : index
    %c0_174 = arith.constant 0 : index
    %191 = vector.load %arg9[%c2_171, %c2_172, %c0_173, %c0_174] : memref<3x3x32x32xf32, #tpu.memory_space<vmem>>, vector<1x1x32x32xf32>
    %192 = vector.shape_cast %191 : vector<1x1x32x32xf32> to vector<32x32xf32>
    %cst_175 = arith.constant dense<0.000000e+00> : vector<64x32xf32>
    %193 = tpu.matmul %190, %192, %cst_175 {dimension_numbers = #tpu.dot_dimension_numbers<[1], [0], [0], [1], [0, 0, 1, 1], [], []>} : vector<64x32xf32>, vector<32x32xf32>, vector<64x32xf32> -> vector<64x32xf32>
    %194 = arith.addf %188, %193 : vector<64x32xf32>
    %c0_176 = arith.constant 0 : index
    %c0_177 = arith.constant 0 : index
    %195 = vector.load %arg10[%c0_176, %c0_177] : memref<1x32xf32, #tpu.memory_space<vmem>>, vector<1x32xf32>
    %196 = vector.broadcast %195 : vector<1x32xf32> to vector<64x32xf32>
    %197 = arith.addf %194, %196 : vector<64x32xf32>
    %198 = arith.addf %197, %136 : vector<64x32xf32>
    %cst_178 = arith.constant 0.000000e+00 : f32
    %199 = vector.broadcast %cst_178 : f32 to vector<64x32xf32>
    %200 = arith.maximumf %198, %199 : vector<64x32xf32>
    %201 = vector.shape_cast %200 : vector<64x32xf32> to vector<1x64x32xf32>
    %c0_179 = arith.constant 0 : index
    %c0_180 = arith.constant 0 : index
    %c0_181 = arith.constant 0 : index
    %202 = vector.load %arg13[%c0_179, %c0_180, %c0_181] : memref<1x64x32xf32, #tpu.memory_space<vmem>>, vector<1x64x32xf32>
    tpu.vector_store %arg13[%c0_179, %c0_180, %c0_181], %201 {strides = array<i32>} : memref<1x64x32xf32, #tpu.memory_space<vmem>>, vector<1x64x32xf32>,
    return
  }
  func.func @transform_0(%arg0: i32) -> (i32, i32, i32, i32) {
    %c0_i32 = arith.constant 0 : i32
    %c0_i32_0 = arith.constant 0 : i32
    %c0_i32_1 = arith.constant 0 : i32
    %c0_i32_2 = arith.constant 0 : i32
    return %arg0, %c0_i32, %c0_i32_0, %c0_i32_1 : i32, i32, i32, i32
  }
  func.func @transform_1(%arg0: i32) -> (i32, i32, i32) {
    %c0_i32 = arith.constant 0 : i32
    %c0_i32_0 = arith.constant 0 : i32
    %c0_i32_1 = arith.constant 0 : i32
    return %arg0, %c0_i32, %c0_i32_0 : i32, i32, i32
  }
  func.func @transform_2(%arg0: i32) -> (i32, i32, i32, i32) {
    %c0_i32 = arith.constant 0 : i32
    %c0_i32_0 = arith.constant 0 : i32
    %c0_i32_1 = arith.constant 0 : i32
    %c0_i32_2 = arith.constant 0 : i32
    %c0_i32_3 = arith.constant 0 : i32
    return %c0_i32, %c0_i32_0, %c0_i32_1, %c0_i32_2 : i32, i32, i32, i32
  }
  func.func @transform_3(%arg0: i32) -> (i32, i32) {
    %c0_i32 = arith.constant 0 : i32
    %c0_i32_0 = arith.constant 0 : i32
    %c0_i32_1 = arith.constant 0 : i32
    return %c0_i32, %c0_i32_0 : i32, i32
  }
  func.func @transform_4(%arg0: i32) -> (i32, i32) {
    %c0_i32 = arith.constant 0 : i32
    %c0_i32_0 = arith.constant 0 : i32
    %c0_i32_1 = arith.constant 0 : i32
    return %c0_i32, %c0_i32_0 : i32, i32
  }
  func.func @transform_5(%arg0: i32) -> (i32, i32) {
    %c0_i32 = arith.constant 0 : i32
    %c0_i32_0 = arith.constant 0 : i32
    %c0_i32_1 = arith.constant 0 : i32
    return %c0_i32, %c0_i32_0 : i32, i32
  }
  func.func @transform_6(%arg0: i32) -> (i32, i32, i32, i32) {
    %c0_i32 = arith.constant 0 : i32
    %c0_i32_0 = arith.constant 0 : i32
    %c0_i32_1 = arith.constant 0 : i32
    %c0_i32_2 = arith.constant 0 : i32
    %c0_i32_3 = arith.constant 0 : i32
    return %c0_i32, %c0_i32_0, %c0_i32_1, %c0_i32_2 : i32, i32, i32, i32
  }
  func.func @transform_7(%arg0: i32) -> (i32, i32) {
    %c0_i32 = arith.constant 0 : i32
    %c0_i32_0 = arith.constant 0 : i32
    %c0_i32_1 = arith.constant 0 : i32
    return %c0_i32, %c0_i32_0 : i32, i32
  }
  func.func @transform_8(%arg0: i32) -> (i32, i32, i32, i32) {
    %c0_i32 = arith.constant 0 : i32
    %c0_i32_0 = arith.constant 0 : i32
    %c0_i32_1 = arith.constant 0 : i32
    %c0_i32_2 = arith.constant 0 : i32
    %c0_i32_3 = arith.constant 0 : i32
    return %c0_i32, %c0_i32_0, %c0_i32_1, %c0_i32_2 : i32, i32, i32, i32
  }
  func.func @transform_9(%arg0: i32) -> (i32, i32) {
    %c0_i32 = arith.constant 0 : i32
    %c0_i32_0 = arith.constant 0 : i32
    %c0_i32_1 = arith.constant 0 : i32
    return %c0_i32, %c0_i32_0 : i32, i32
  }
  func.func @transform_10(%arg0: i32) -> (i32, i32, i32) {
    %c0_i32 = arith.constant 0 : i32
    %c0_i32_0 = arith.constant 0 : i32
    %c0_i32_1 = arith.constant 0 : i32
    return %arg0, %c0_i32, %c0_i32_0 : i32, i32, i32
  }
  func.func @transform_11(%arg0: i32) -> (i32, i32, i32) {
    %c0_i32 = arith.constant 0 : i32
    %c0_i32_0 = arith.constant 0 : i32
    %c0_i32_1 = arith.constant 0 : i32
    return %arg0, %c0_i32, %c0_i32_0 : i32, i32, i32
  }
  func.func @transform_12(%arg0: i32) -> (i32, i32, i32) {
    %c0_i32 = arith.constant 0 : i32
    %c0_i32_0 = arith.constant 0 : i32
    %c0_i32_1 = arith.constant 0 : i32
    return %arg0, %c0_i32, %c0_i32_0 : i32, i32, i32
  }
}

</mosaic_0001>

<llo_original>
// kernel: tpu_custom_call.1
$region0: #{tpu_custom_call.1}
  #allocation0 [shape = 'u32[]', space=smem, size = 0x4, offset = 0x4, fixed_abs, tag = 'smem constant byte address 0x4 - core index']
  #allocation1 [shape = 'u32[144,128]{1,0:T(1,128)}', space=vmem, size = 0x12000, scoped, tag = 'internal scratch']
  #allocation2 [shape = 'f32[10,10,32]{2,1,0:T(8,128)}', space=vmem, size = 0x14000, scoped, tag = 'scratch operand']
  %s0 = inlined_call_operand.vmem [shape: f32[2,8,8,32], index: 0, kind: input, shape index: {}]
  %s1 = inlined_call_operand.vmem [shape: f32[2,64,32], index: 1, kind: input, shape index: {}]
  %s2 = inlined_call_operand.hbm [shape: f32[3,3,32,64], index: 2, kind: input, shape index: {}]
  %s3 = inlined_call_operand.vmem [shape: f32[1,64], index: 3, kind: input, shape index: {}]
  %s4 = inlined_call_operand.vmem [shape: f32[32,32], index: 4, kind: input, shape index: {}]
  %s5 = inlined_call_operand.vmem [shape: f32[1,32], index: 5, kind: input, shape index: {}]
  %s6 = inlined_call_operand.hbm [shape: f32[3,3,32,32], index: 6, kind: input, shape index: {}]
  %s7 = inlined_call_operand.vmem [shape: f32[1,32], index: 7, kind: input, shape index: {}]
  %s8 = inlined_call_operand.hbm [shape: f32[3,3,32,32], index: 8, kind: input, shape index: {}]
  %s9 = inlined_call_operand.vmem [shape: f32[1,32], index: 9, kind: input, shape index: {}]
  %s10 = inlined_call_operand.hbm [shape: f32[2,64,64], index: 10, kind: output, shape index: {0}]
  %s11 = inlined_call_operand.vmem [shape: f32[2,64,32], index: 11, kind: output, shape index: {1}]
  %s12 = inlined_call_operand.vmem [shape: f32[2,64,32], index: 12, kind: output, shape index: {2}]
  %13 = xla_tuple %s10, %s11, %s12
  %s14 = sld [smem:[#allocation0]]
  $region101: #{tpu_custom_call.1} parent=0
    _
  %s16 = ssub.s32 1, %s14
  %s17 = scalar_select 0, %s16, %s14
  $region1: #{tpu_custom_call.1} parent=0
    #allocation3 [shape = 'u8[147456]{0}', space=vmem, size = 0x24000, scoped, tag = 'input window, operand 2, single buffered']
    #allocation4 [shape = 's32[2]{0}', space=sflag, size = 0x8, scoped, tag = 'scoped memory for tpu_custom_call.1']
    #allocation5 [shape = 's32[2]{0}', space=sflag, size = 0x8, scoped, tag = 'scoped memory for tpu_custom_call.1']
    #allocation6 [shape = 'u8[147456]{0}', space=vmem, size = 0x24000, scoped, tag = 'input window, operand 6, single buffered']
    #allocation7 [shape = 's32[1]{0}', space=sflag, size = 0x4, scoped, tag = 'scoped memory for tpu_custom_call.1']
    #allocation8 [shape = 'u8[147456]{0}', space=vmem, size = 0x24000, scoped, tag = 'input window, operand 8, single buffered']
    #allocation9 [shape = 'u8[65536]{0}', space=vmem, size = 0x10000, scoped, tag = 'output window, operand 0']
    %18 = vsyncpa [#allocation4], 0
    %19 = vsyncpa [#allocation7], 0
    %20 = vsyncpa [#allocation5], 0
    %s21 = scalar_lea.sflag [#allocation5], 1
    %22 = vsyncpa %s21, 0
    loop: start=0, step=1, limit=4
    $region2: #{tpu_custom_call.1} parent=1 // loop_pre_header
      _
    $region3: #{tpu_custom_call.1} parent=1 // loop_header
      %s24 = sphi 0, %s28
      %p25 = scmp.ge.s32.totalorder %s24, 4
      %s34 = sphi 0, %s36
      %s37 = sphi 0, %s34
      %s38 = sphi 0, %s37
      %s54 = sphi 0, %s38
      %s60 = sphi 0, %s62
      %s63 = sphi 0, %s60
      %s64 = sphi 0, %s63
      %s80 = sphi 0, %s64
      %s84 = sphi 0, %s84
      %s86 = sphi 0, %s84
      %s87 = sphi 0, %s86
      %s101 = sphi 0, %s87
      %s105 = sphi 0, %s105
      %s107 = sphi 0, %s105
      %s108 = sphi 0, %s107
      %s122 = sphi 0, %s108
      %s126 = sphi 0, %s126
      %s128 = sphi 0, %s126
      %s129 = sphi 0, %s128
      %s143 = sphi 0, %s129
      %s147 = sphi 0, %s147
      %s149 = sphi 0, %s147
      %s150 = sphi 0, %s149
      %s164 = sphi 0, %s150
      %s168 = sphi 0, %s168
      %s170 = sphi 0, %s168
      %s171 = sphi 0, %s170
      %s185 = sphi 0, %s171
      %s189 = sphi 0, %s189
      %s191 = sphi 0, %s189
      %s192 = sphi 0, %s191
      %s206 = sphi 0, %s192
      %s210 = sphi 0, %s210
      %s212 = sphi 0, %s210
      %s213 = sphi 0, %s212
      %s227 = sphi 0, %s213
      %s231 = sphi 0, %s231
      %s233 = sphi 0, %s231
      %s234 = sphi 0, %s233
      %s248 = sphi 0, %s234
      %s254 = sphi 0, %s256
      %s257 = sphi 0, %s254
      %s258 = sphi 0, %s257
      %s274 = sphi 0, %s258
      %s280 = sphi 0, %s282
      %s283 = sphi 0, %s280
      %s284 = sphi 0, %s283
      %s300 = sphi 0, %s284
      %s306 = sphi 0, %s308
      %s309 = sphi 0, %s306
      %s310 = sphi 0, %s309
      %s326 = sphi 0, %s310
    $region4: #{tpu_custom_call.1} parent=1 // loop_header_branch
      %27 = sbr.rel (%p25) target = $region8
    $region5: #{tpu_custom_call.1} parent=1 // loop_body
      %s29 = ssub.s32 %s24, 1
      %s30 = ssub.s32 %s24, 2
      %s31 = sadd.s32 %s24, 1
      %s32 = ssub.s32 %s24, %s31
      %p33 = scmp.eq.s32.totalorder %s32, 0
      %s35 = sadd.s32 %s34, 1
      %s36 = scalar_select %p33, %s34, %s35
      %p39 = pneg %p33
      %p40 = scmp.eq.s32.totalorder %s24, 1
      %p41 = por %p39, %p40
      %p42 = scmp.ne.s32.totalorder %s34, %s37
      %p43 = scmp.eq.s32.totalorder %s24, 0
      %p44 = por %p42, %p43
      %p45 = scmp.ne.s32.totalorder %s34, %s37
      %p46 = scmp.eq.s32.totalorder %s29, 1
      %p47 = por %p45, %p46
      %p48 = scmp.ne.s32.totalorder %s37, %s38
      %p49 = scmp.eq.s32.totalorder %s29, 0
      %p50 = por %p48, %p49
      %p51 = scmp.ne.s32.totalorder %s37, %s38
      %p52 = scmp.eq.s32.totalorder %s30, 1
      %p53 = por %p51, %p52
      %p55 = scmp.ne.s32.totalorder %s38, %s54
      %p56 = scmp.eq.s32.totalorder %s30, 0
      %p57 = por %p55, %p56
      %s58 = ssub.s32 %s24, %s31
      %p59 = scmp.eq.s32.totalorder %s58, 0
      %s61 = sadd.s32 %s60, 1
      %s62 = scalar_select %p59, %s60, %s61
      %p65 = pneg %p59
      %p66 = scmp.eq.s32.totalorder %s24, 1
      %p67 = por %p65, %p66
      %p68 = scmp.ne.s32.totalorder %s60, %s63
      %p69 = scmp.eq.s32.totalorder %s24, 0
      %p70 = por %p68, %p69
      %p71 = scmp.ne.s32.totalorder %s60, %s63
      %p72 = scmp.eq.s32.totalorder %s29, 1
      %p73 = por %p71, %p72
      %p74 = scmp.ne.s32.totalorder %s63, %s64
      %p75 = scmp.eq.s32.totalorder %s29, 0
      %p76 = por %p74, %p75
      %p77 = scmp.ne.s32.totalorder %s63, %s64
      %p78 = scmp.eq.s32.totalorder %s30, 1
      %p79 = por %p77, %p78
      %p81 = scmp.ne.s32.totalorder %s64, %s80
      %p82 = scmp.eq.s32.totalorder %s30, 0
      %p83 = por %p81, %p82
      %s85 = sadd.s32 %s84, 1
      %p88 = scmp.eq.s32.totalorder %s24, 1
      %p89 = scmp.ne.s32.totalorder %s84, %s86
      %p90 = scmp.eq.s32.totalorder %s24, 0
      %p91 = por %p89, %p90
      %p92 = scmp.ne.s32.totalorder %s84, %s86
      %p93 = scmp.eq.s32.totalorder %s29, 1
      %p94 = por %p92, %p93
      %p95 = scmp.ne.s32.totalorder %s86, %s87
      %p96 = scmp.eq.s32.totalorder %s29, 0
      %p97 = por %p95, %p96
      %p98 = scmp.ne.s32.totalorder %s86, %s87
      %p99 = scmp.eq.s32.totalorder %s30, 1
      %p100 = por %p98, %p99
      %p102 = scmp.ne.s32.totalorder %s87, %s101
      %p103 = scmp.eq.s32.totalorder %s30, 0
      %p104 = por %p102, %p103
      %s106 = sadd.s32 %s105, 1
      %p109 = scmp.eq.s32.totalorder %s24, 1
      %p110 = scmp.ne.s32.totalorder %s105, %s107
      %p111 = scmp.eq.s32.totalorder %s24, 0
      %p112 = por %p110, %p111
      %p113 = scmp.ne.s32.totalorder %s105, %s107
      %p114 = scmp.eq.s32.totalorder %s29, 1
      %p115 = por %p113, %p114
      %p116 = scmp.ne.s32.totalorder %s107, %s108
      %p117 = scmp.eq.s32.totalorder %s29, 0
      %p118 = por %p116, %p117
      %p119 = scmp.ne.s32.totalorder %s107, %s108
      %p120 = scmp.eq.s32.totalorder %s30, 1
      %p121 = por %p119, %p120
      %p123 = scmp.ne.s32.totalorder %s108, %s122
      %p124 = scmp.eq.s32.totalorder %s30, 0
      %p125 = por %p123, %p124
      %s127 = sadd.s32 %s126, 1
      %p130 = scmp.eq.s32.totalorder %s24, 1
      %p131 = scmp.ne.s32.totalorder %s126, %s128
      %p132 = scmp.eq.s32.totalorder %s24, 0
      %p133 = por %p131, %p132
      %p134 = scmp.ne.s32.totalorder %s126, %s128
      %p135 = scmp.eq.s32.totalorder %s29, 1
      %p136 = por %p134, %p135
      %p137 = scmp.ne.s32.totalorder %s128, %s129
      %p138 = scmp.eq.s32.totalorder %s29, 0
      %p139 = por %p137, %p138
      %p140 = scmp.ne.s32.totalorder %s128, %s129
      %p141 = scmp.eq.s32.totalorder %s30, 1
      %p142 = por %p140, %p141
      %p144 = scmp.ne.s32.totalorder %s129, %s143
      %p145 = scmp.eq.s32.totalorder %s30, 0
      %p146 = por %p144, %p145
      %s148 = sadd.s32 %s147, 1
      %p151 = scmp.eq.s32.totalorder %s24, 1
      %p152 = scmp.ne.s32.totalorder %s147, %s149
      %p153 = scmp.eq.s32.totalorder %s24, 0
      %p154 = por %p152, %p153
      %p155 = scmp.ne.s32.totalorder %s147, %s149
      %p156 = scmp.eq.s32.totalorder %s29, 1
      %p157 = por %p155, %p156
      %p158 = scmp.ne.s32.totalorder %s149, %s150
      %p159 = scmp.eq.s32.totalorder %s29, 0
      %p160 = por %p158, %p159
      %p161 = scmp.ne.s32.totalorder %s149, %s150
      %p162 = scmp.eq.s32.totalorder %s30, 1
      %p163 = por %p161, %p162
      %p165 = scmp.ne.s32.totalorder %s150, %s164
      %p166 = scmp.eq.s32.totalorder %s30, 0
      %p167 = por %p165, %p166
      %s169 = sadd.s32 %s168, 1
      %p172 = scmp.eq.s32.totalorder %s24, 1
      %p173 = scmp.ne.s32.totalorder %s168, %s170
      %p174 = scmp.eq.s32.totalorder %s24, 0
      %p175 = por %p173, %p174
      %p176 = scmp.ne.s32.totalorder %s168, %s170
      %p177 = scmp.eq.s32.totalorder %s29, 1
      %p178 = por %p176, %p177
      %p179 = scmp.ne.s32.totalorder %s170, %s171
      %p180 = scmp.eq.s32.totalorder %s29, 0
      %p181 = por %p179, %p180
      %p182 = scmp.ne.s32.totalorder %s170, %s171
      %p183 = scmp.eq.s32.totalorder %s30, 1
      %p184 = por %p182, %p183
      %p186 = scmp.ne.s32.totalorder %s171, %s185
      %p187 = scmp.eq.s32.totalorder %s30, 0
      %p188 = por %p186, %p187
      %s190 = sadd.s32 %s189, 1
      %p193 = scmp.eq.s32.totalorder %s24, 1
      %p194 = scmp.ne.s32.totalorder %s189, %s191
      %p195 = scmp.eq.s32.totalorder %s24, 0
      %p196 = por %p194, %p195
      %p197 = scmp.ne.s32.totalorder %s189, %s191
      %p198 = scmp.eq.s32.totalorder %s29, 1
      %p199 = por %p197, %p198
      %p200 = scmp.ne.s32.totalorder %s191, %s192
      %p201 = scmp.eq.s32.totalorder %s29, 0
      %p202 = por %p200, %p201
      %p203 = scmp.ne.s32.totalorder %s191, %s192
      %p204 = scmp.eq.s32.totalorder %s30, 1
      %p205 = por %p203, %p204
      %p207 = scmp.ne.s32.totalorder %s192, %s206
      %p208 = scmp.eq.s32.totalorder %s30, 0
      %p209 = por %p207, %p208
      %s211 = sadd.s32 %s210, 1
      %p214 = scmp.eq.s32.totalorder %s24, 1
      %p215 = scmp.ne.s32.totalorder %s210, %s212
      %p216 = scmp.eq.s32.totalorder %s24, 0
      %p217 = por %p215, %p216
      %p218 = scmp.ne.s32.totalorder %s210, %s212
      %p219 = scmp.eq.s32.totalorder %s29, 1
      %p220 = por %p218, %p219
      %p221 = scmp.ne.s32.totalorder %s212, %s213
      %p222 = scmp.eq.s32.totalorder %s29, 0
      %p223 = por %p221, %p222
      %p224 = scmp.ne.s32.totalorder %s212, %s213
      %p225 = scmp.eq.s32.totalorder %s30, 1
      %p226 = por %p224, %p225
      %p228 = scmp.ne.s32.totalorder %s213, %s227
      %p229 = scmp.eq.s32.totalorder %s30, 0
      %p230 = por %p228, %p229
      %s232 = sadd.s32 %s231, 1
      %p235 = scmp.eq.s32.totalorder %s24, 1
      %p236 = scmp.ne.s32.totalorder %s231, %s233
      %p237 = scmp.eq.s32.totalorder %s24, 0
      %p238 = por %p236, %p237
      %p239 = scmp.ne.s32.totalorder %s231, %s233
      %p240 = scmp.eq.s32.totalorder %s29, 1
      %p241 = por %p239, %p240
      %p242 = scmp.ne.s32.totalorder %s233, %s234
      %p243 = scmp.eq.s32.totalorder %s29, 0
      %p244 = por %p242, %p243
      %p245 = scmp.ne.s32.totalorder %s233, %s234
      %p246 = scmp.eq.s32.totalorder %s30, 1
      %p247 = por %p245, %p246
      %p249 = scmp.ne.s32.totalorder %s234, %s248
      %p250 = scmp.eq.s32.totalorder %s30, 0
      %p251 = por %p249, %p250
      %s252 = ssub.s32 %s24, %s31
      %p253 = scmp.eq.s32.totalorder %s252, 0
      %s255 = sadd.s32 %s254, 1
      %s256 = scalar_select %p253, %s254, %s255
      %p259 = pneg %p253
      %p260 = scmp.eq.s32.totalorder %s24, 1
      %p261 = por %p259, %p260
      %p262 = scmp.ne.s32.totalorder %s254, %s257
      %p263 = scmp.eq.s32.totalorder %s24, 0
      %p264 = por %p262, %p263
      %p265 = scmp.ne.s32.totalorder %s254, %s257
      %p266 = scmp.eq.s32.totalorder %s29, 1
      %p267 = por %p265, %p266
      %p268 = scmp.ne.s32.totalorder %s257, %s258
      %p269 = scmp.eq.s32.totalorder %s29, 0
      %p270 = por %p268, %p269
      %p271 = scmp.ne.s32.totalorder %s257, %s258
      %p272 = scmp.eq.s32.totalorder %s30, 1
      %p273 = por %p271, %p272
      %p275 = scmp.ne.s32.totalorder %s258, %s274
      %p276 = scmp.eq.s32.totalorder %s30, 0
      %p277 = por %p275, %p276
      %s278 = ssub.s32 %s24, %s31
      %p279 = scmp.eq.s32.totalorder %s278, 0
      %s281 = sadd.s32 %s280, 1
      %s282 = scalar_select %p279, %s280, %s281
      %p285 = pneg %p279
      %p286 = scmp.eq.s32.totalorder %s24, 1
      %p287 = por %p285, %p286
      %p288 = scmp.ne.s32.totalorder %s280, %s283
      %p289 = scmp.eq.s32.totalorder %s24, 0
      %p290 = por %p288, %p289
      %p291 = scmp.ne.s32.totalorder %s280, %s283
      %p292 = scmp.eq.s32.totalorder %s29, 1
      %p293 = por %p291, %p292
      %p294 = scmp.ne.s32.totalorder %s283, %s284
      %p295 = scmp.eq.s32.totalorder %s29, 0
      %p296 = por %p294, %p295
      %p297 = scmp.ne.s32.totalorder %s283, %s284
      %p298 = scmp.eq.s32.totalorder %s30, 1
      %p299 = por %p297, %p298
      %p301 = scmp.ne.s32.totalorder %s284, %s300
      %p302 = scmp.eq.s32.totalorder %s30, 0
      %p303 = por %p301, %p302
      %s304 = ssub.s32 %s24, %s31
      %p305 = scmp.eq.s32.totalorder %s304, 0
      %s307 = sadd.s32 %s306, 1
      %s308 = scalar_select %p305, %s306, %s307
      %p311 = pneg %p305
      %p312 = scmp.eq.s32.totalorder %s24, 1
      %p313 = por %p311, %p312
      %p314 = scmp.ne.s32.totalorder %s306, %s309
      %p315 = scmp.eq.s32.totalorder %s24, 0
      %p316 = por %p314, %p315
      %p317 = scmp.ne.s32.totalorder %s306, %s309
      %p318 = scmp.eq.s32.totalorder %s29, 1
      %p319 = por %p317, %p318
      %p320 = scmp.ne.s32.totalorder %s309, %s310
      %p321 = scmp.eq.s32.totalorder %s29, 0
      %p322 = por %p320, %p321
      %p323 = scmp.ne.s32.totalorder %s309, %s310
      %p324 = scmp.eq.s32.totalorder %s30, 1
      %p325 = por %p323, %p324
      %p327 = scmp.ne.s32.totalorder %s310, %s326
      %p328 = scmp.eq.s32.totalorder %s30, 0
      %p329 = por %p327, %p328
      %p330 = scmp.le.s32.totalorder 1, %s24
      %p331 = scmp.lt.s32.totalorder %s24, 3
      %p332 = pnand %p330, %p331
      %p333 = pneg %p332
      // Predicated region
      $region9: #{tpu_custom_call.1} parent=5 // pred_check
        _
      $region10: #{tpu_custom_call.1} parent=5 // pred_check_branch
        %335 = sbr.rel (%p332) target = $region12
      $region11: #{tpu_custom_call.1} parent=5 // pred_region
        %s336 = ssub.s32 %s24, 1
        // Predicated region
        $region13: #{tpu_custom_call.1} parent=11 // pred_check
          %p337 = pneg %p97
        $region14: #{tpu_custom_call.1} parent=11 // pred_check_branch
          %339 = sbr.rel (%p337) target = $region16
        $region15: #{tpu_custom_call.1} parent=11 // pred_region
          %s341 = ssub.s32 4608, 4608
          %342 = vsyncadd [#allocation4], %s341
          %s343 = sshll.u32 [#allocation3], 4
          %s344 = int_to_ptr.vmem [resolvable:$true] %s343
          %349 = dma.hbm_to_vmem [thread:$0]  %s2, 4608, %s344, [#allocation4], 128, 128, 8
        $region16: #{tpu_custom_call.1} parent=11 // pred_fallthru
          _
        // Predicated region
        $region17: #{tpu_custom_call.1} parent=11 // pred_check
          %p350 = pneg %p118
        $region18: #{tpu_custom_call.1} parent=11 // pred_check_branch
          %352 = sbr.rel (%p350) target = $region20
        $region19: #{tpu_custom_call.1} parent=11 // pred_region
          _
        $region20: #{tpu_custom_call.1} parent=11 // pred_fallthru
          _
        // Predicated region
        $region21: #{tpu_custom_call.1} parent=11 // pred_check
          %p353 = pneg %p139
        $region22: #{tpu_custom_call.1} parent=11 // pred_check_branch
          %355 = sbr.rel (%p353) target = $region24
        $region23: #{tpu_custom_call.1} parent=11 // pred_region
          _
        $region24: #{tpu_custom_call.1} parent=11 // pred_fallthru
          _
        // Predicated region
        $region25: #{tpu_custom_call.1} parent=11 // pred_check
          %p356 = pneg %p160
        $region26: #{tpu_custom_call.1} parent=11 // pred_check_branch
          %358 = sbr.rel (%p356) target = $region28
        $region27: #{tpu_custom_call.1} parent=11 // pred_region
          _
        $region28: #{tpu_custom_call.1} parent=11 // pred_fallthru
          _
        // Predicated region
        $region29: #{tpu_custom_call.1} parent=11 // pred_check
          %p359 = pneg %p181
        $region30: #{tpu_custom_call.1} parent=11 // pred_check_branch
          %361 = sbr.rel (%p359) target = $region32
        $region31: #{tpu_custom_call.1} parent=11 // pred_region
          %s363 = ssub.s32 4608, 4608
          %364 = vsyncadd [#allocation7], %s363
          %s365 = sshll.u32 [#allocation6], 4
          %s366 = int_to_ptr.vmem [resolvable:$true] %s365
          %371 = dma.hbm_to_vmem [thread:$0]  %s6, 4608, %s366, [#allocation7], 128, 128, 8
        $region32: #{tpu_custom_call.1} parent=11 // pred_fallthru
          _
        // Predicated region
        $region33: #{tpu_custom_call.1} parent=11 // pred_check
          %p372 = pneg %p202
        $region34: #{tpu_custom_call.1} parent=11 // pred_check_branch
          %374 = sbr.rel (%p372) target = $region36
        $region35: #{tpu_custom_call.1} parent=11 // pred_region
          _
        $region36: #{tpu_custom_call.1} parent=11 // pred_fallthru
          _
        // Predicated region
        $region37: #{tpu_custom_call.1} parent=11 // pred_check
          %p375 = pneg %p223
        $region38: #{tpu_custom_call.1} parent=11 // pred_check_branch
          %377 = sbr.rel (%p375) target = $region40
        $region39: #{tpu_custom_call.1} parent=11 // pred_region
          %s379 = ssub.s32 4608, 4608
          %380 = vsyncadd [#allocation7], %s379
          %s381 = sshll.u32 [#allocation8], 4
          %s382 = int_to_ptr.vmem [resolvable:$true] %s381
          %387 = dma.hbm_to_vmem [thread:$0]  %s8, 4608, %s382, [#allocation7], 128, 128, 8
        $region40: #{tpu_custom_call.1} parent=11 // pred_fallthru
          _
        // Predicated region
        $region41: #{tpu_custom_call.1} parent=11 // pred_check
          %p388 = pneg %p244
        $region42: #{tpu_custom_call.1} parent=11 // pred_check_branch
          %390 = sbr.rel (%p388) target = $region44
        $region43: #{tpu_custom_call.1} parent=11 // pred_region
          _
        $region44: #{tpu_custom_call.1} parent=11 // pred_fallthru
          _
      $region12: #{tpu_custom_call.1} parent=5 // pred_fallthru
        _
      %p391 = scmp.lt.s32.totalorder %s24, 2
      // Predicated region
      $region45: #{tpu_custom_call.1} parent=5 // pred_check
        %p392 = pneg %p391
      $region46: #{tpu_custom_call.1} parent=5 // pred_check_branch
        %394 = sbr.rel (%p392) target = $region48
      $region47: #{tpu_custom_call.1} parent=5 // pred_region
        // Predicated region
        $region49: #{tpu_custom_call.1} parent=47 // pred_check
          %p395 = pneg %p44
        $region50: #{tpu_custom_call.1} parent=47 // pred_check_branch
          %397 = sbr.rel (%p395) target = $region52
        $region51: #{tpu_custom_call.1} parent=47 // pred_region
          %p398 = scmp.lt.s32.totalorder %s24, 1
          %s399 = scalar_select %p398, %s24, 1
          %s400 = smul.addr %s399, 8
          %s401 = smul.addr %s400, 8
          %s402 = scalar_lea.vmem %s0, %s401
        $region52: #{tpu_custom_call.1} parent=47 // pred_fallthru
          _
        // Predicated region
        $region53: #{tpu_custom_call.1} parent=47 // pred_check
          %p403 = pneg %p70
        $region54: #{tpu_custom_call.1} parent=47 // pred_check_branch
          %405 = sbr.rel (%p403) target = $region56
        $region55: #{tpu_custom_call.1} parent=47 // pred_region
          %p406 = scmp.lt.s32.totalorder %s24, 1
          %s407 = scalar_select %p406, %s24, 1
          %s408 = smul.addr %s407, 8
          %s409 = smul.addr %s408, 8
          %s410 = scalar_lea.vmem %s1, %s409
        $region56: #{tpu_custom_call.1} parent=47 // pred_fallthru
          _
      $region48: #{tpu_custom_call.1} parent=5 // pred_fallthru
        _
      %p411 = scmp.le.s32.totalorder 1, %s24
      %p412 = scmp.lt.s32.totalorder %s24, 3
      %p413 = pnand %p411, %p412
      %p414 = pneg %p413
      // Predicated region
      $region57: #{tpu_custom_call.1} parent=5 // pred_check
        _
      $region58: #{tpu_custom_call.1} parent=5 // pred_check_branch
        %416 = sbr.rel (%p413) target = $region60
      $region59: #{tpu_custom_call.1} parent=5 // pred_region
        %s417 = ssub.s32 %s24, 1
        // Predicated region
        $region61: #{tpu_custom_call.1} parent=59 // pred_check
          %p418 = pneg %p97
        $region62: #{tpu_custom_call.1} parent=59 // pred_check_branch
          %420 = sbr.rel (%p418) target = $region64
        $region63: #{tpu_custom_call.1} parent=59 // pred_region
          %421 = dma.done [#allocation4], 4608
        $region64: #{tpu_custom_call.1} parent=59 // pred_fallthru
          _
        // Predicated region
        $region65: #{tpu_custom_call.1} parent=59 // pred_check
          %p422 = pneg %p181
        $region66: #{tpu_custom_call.1} parent=59 // pred_check_branch
          %424 = sbr.rel (%p422) target = $region68
        $region67: #{tpu_custom_call.1} parent=59 // pred_region
          %425 = dma.done [#allocation7], 4608
        $region68: #{tpu_custom_call.1} parent=59 // pred_fallthru
          _
        // Predicated region
        $region69: #{tpu_custom_call.1} parent=59 // pred_check
          %p426 = pneg %p223
        $region70: #{tpu_custom_call.1} parent=59 // pred_check_branch
          %428 = sbr.rel (%p426) target = $region72
        $region71: #{tpu_custom_call.1} parent=59 // pred_region
          %429 = dma.done [#allocation7], 4608
        $region72: #{tpu_custom_call.1} parent=59 // pred_fallthru
          _
        %p430 = scmp.lt.s32.totalorder %s29, 1
        %s431 = scalar_select %p430, %s29, 1
        %s432 = smul.addr %s431, 8
        %s433 = smul.addr %s432, 8
        %s434 = scalar_lea.vmem %s0, %s433
        %p435 = pneg %p50
        %p436 = pneg %p47
        %p437 = scmp.lt.s32.totalorder %s29, 1
        %s438 = scalar_select %p437, %s29, 1
        %s439 = smul.addr %s438, 8
        %s440 = smul.addr %s439, 8
        %s441 = scalar_lea.vmem %s1, %s440
        %p442 = pneg %p76
        %p443 = pneg %p73
        %p444 = pneg %p97
        %p445 = pneg %p94
        %p446 = pneg %p118
        %p447 = pneg %p115
        %p448 = pneg %p139
        %p449 = pneg %p136
        %p450 = pneg %p160
        %p451 = pneg %p157
        %p452 = pneg %p181
        %p453 = pneg %p178
        %p454 = pneg %p202
        %p455 = pneg %p199
        %p456 = pneg %p223
        %p457 = pneg %p220
        %p458 = pneg %p244
        %p459 = pneg %p241
        %p460 = pneg %p270
        %p461 = pneg %p267
        %s462 = sand.u32 %s257, 1
        %s463 = scalar_lea.sflag [#allocation5], %s462
        %s464 = sand.u32 %s257, 1
        %s465 = smul.addr %s464, 64
        %s466 = scalar_lea.vmem [#allocation9], %s465
        %p467 = pneg %p296
        %p468 = pneg %p293
        %p469 = scmp.lt.s32.totalorder %s29, 1
        %s470 = scalar_select %p469, %s29, 1
        %s471 = smul.addr %s470, 8
        %s472 = smul.addr %s471, 8
        %s473 = scalar_lea.vmem %s11, %s472
        %p474 = pneg %p322
        %p475 = pneg %p319
        %p476 = scmp.lt.s32.totalorder %s29, 1
        %s477 = scalar_select %p476, %s29, 1
        %s478 = smul.addr %s477, 8
        %s479 = smul.addr %s478, 8
        %s480 = scalar_lea.vmem %s12, %s479
        %p481 = scmp.lt.s32.totalorder %s29, 1
        %s482 = scalar_select %p481, %s29, 1
        %s483 = smul.addr %s482, 8
        %s484 = smul.addr %s483, 8
        %s485 = scalar_lea.vmem %s0, %s484
        %p486 = scmp.lt.s32.totalorder %s29, 1
        %s487 = scalar_select %p486, %s29, 1
        %s488 = smul.addr %s487, 8
        %s489 = smul.addr %s488, 8
        %s490 = scalar_lea.vmem %s1, %s489
        %p491 = scmp.lt.s32.totalorder %s29, 1
        %s492 = scalar_select %p491, %s29, 1
        %s493 = smul.addr %s492, 8
        %s494 = smul.addr %s493, 8
        %s495 = scalar_lea.vmem %s11, %s494
        %p496 = scmp.lt.s32.totalorder %s29, 1
        %s497 = scalar_select %p496, %s29, 1
        %s498 = smul.addr %s497, 8
        %s499 = smul.addr %s498, 8
        %s500 = scalar_lea.vmem %s12, %s499
        %vm501 = vcmask 261120
        %502 = vst.msk [vmem:[#allocation2] sm:$0xff] %vm501, 0.0
        %vm503 = vcmask 254976
        %504 = vst.msk [vmem:[#allocation2 + $0x8] sm:$0x3] %vm503, 0.0
        %505 = vst.msk [vmem:[#allocation2 + $0x10] sm:$0xff] %vm501, 0.0
        %506 = vst.msk [vmem:[#allocation2 + $0x18] sm:$0x3] %vm503, 0.0
        %507 = vst.msk [vmem:[#allocation2 + $0x20] sm:$0xff] %vm501, 0.0
        %508 = vst.msk [vmem:[#allocation2 + $0x28] sm:$0x3] %vm503, 0.0
        %509 = vst.msk [vmem:[#allocation2 + $0x30] sm:$0xff] %vm501, 0.0
        %510 = vst.msk [vmem:[#allocation2 + $0x38] sm:$0x3] %vm503, 0.0
        %511 = vst.msk [vmem:[#allocation2 + $0x40] sm:$0xff] %vm501, 0.0
        %512 = vst.msk [vmem:[#allocation2 + $0x48] sm:$0x3] %vm503, 0.0
        %513 = vst.msk [vmem:[#allocation2 + $0x50] sm:$0xff] %vm501, 0.0
        %514 = vst.msk [vmem:[#allocation2 + $0x58] sm:$0x3] %vm503, 0.0
        %515 = vst.msk [vmem:[#allocation2 + $0x60] sm:$0xff] %vm501, 0.0
        %516 = vst.msk [vmem:[#allocation2 + $0x68] sm:$0x3] %vm503, 0.0
        %517 = vst.msk [vmem:[#allocation2 + $0x70] sm:$0xff] %vm501, 0.0
        %518 = vst.msk [vmem:[#allocation2 + $0x78] sm:$0x3] %vm503, 0.0
        %519 = vst.msk [vmem:[#allocation2 + $0x80] sm:$0xff] %vm501, 0.0
        %520 = vst.msk [vmem:[#allocation2 + $0x88] sm:$0x3] %vm503, 0.0
        %521 = vst.msk [vmem:[#allocation2 + $0x90] sm:$0xff] %vm501, 0.0
        %522 = vst.msk [vmem:[#allocation2 + $0x98] sm:$0x3] %vm503, 0.0
        %v523 = vld [vmem:[%s485] sm:$0xff]
        %v524 = vld [vmem:[%s485 + $0x8] sm:$0xff]
        %v525 = vld [vmem:[%s485 + $0x10] sm:$0xff]
        %v526 = vld [vmem:[%s485 + $0x18] sm:$0xff]
        %v527 = vld [vmem:[%s485 + $0x20] sm:$0xff]
        %v528 = vld [vmem:[%s485 + $0x28] sm:$0xff]
        %v529 = vld [vmem:[%s485 + $0x30] sm:$0xff]
        %v530 = vld [vmem:[%s485 + $0x38] sm:$0xff]
        %s531 = scalar_lea.vmem [#allocation2], 16
        %532 = vst.msk [vmem:[%s531 + $0x1] sm:$0xff] %vm501, %v523
        %533 = vst.msk [vmem:[%s531 + $0x11] sm:$0xff] %vm501, %v524
        %534 = vst.msk [vmem:[%s531 + $0x21] sm:$0xff] %vm501, %v525
        %535 = vst.msk [vmem:[%s531 + $0x31] sm:$0xff] %vm501, %v526
        %536 = vst.msk [vmem:[%s531 + $0x41] sm:$0xff] %vm501, %v527
        %537 = vst.msk [vmem:[%s531 + $0x51] sm:$0xff] %vm501, %v528
        %538 = vst.msk [vmem:[%s531 + $0x61] sm:$0xff] %vm501, %v529
        %539 = vst.msk [vmem:[%s531 + $0x71] sm:$0xff] %vm501, %v530
        %v540 = vld [vmem:[#allocation2] sm:$0xff]
        %v541 = vld [vmem:[#allocation2 + $0x8] sm:$0x3]
        %v542 = vld [vmem:[#allocation2 + $0x10] sm:$0xff]
        %v543 = vld [vmem:[#allocation2 + $0x18] sm:$0x3]
        %v544 = vld [vmem:[#allocation2 + $0x20] sm:$0xff]
        %v545 = vld [vmem:[#allocation2 + $0x28] sm:$0x3]
        %v546 = vld [vmem:[#allocation2 + $0x30] sm:$0xff]
        %v547 = vld [vmem:[#allocation2 + $0x38] sm:$0x3]
        %v548 = vld [vmem:[#allocation2 + $0x40] sm:$0xff]
        %v549 = vld [vmem:[#allocation2 + $0x48] sm:$0x3]
        %v550 = vld [vmem:[#allocation2 + $0x50] sm:$0xff]
        %v551 = vld [vmem:[#allocation2 + $0x58] sm:$0x3]
        %v552 = vld [vmem:[#allocation2 + $0x60] sm:$0xff]
        %v553 = vld [vmem:[#allocation2 + $0x68] sm:$0x3]
        %v554 = vld [vmem:[#allocation2 + $0x70] sm:$0xff]
        %v555 = vld [vmem:[#allocation2 + $0x78] sm:$0x3]
        %v556 = vld [vmem:[#allocation2 + $0x80] sm:$0xff]
        %v557 = vld [vmem:[#allocation2 + $0x88] sm:$0x3]
        %v558 = vld [vmem:[#allocation2 + $0x90] sm:$0xff]
        %v559 = vld [vmem:[#allocation2 + $0x98] sm:$0x3]
        %v560 = vld [vmem:[#allocation3] sm:$0xff]
        %v561 = vld [vmem:[#allocation3 + $0x8] sm:$0xff]
        %v562 = vld [vmem:[#allocation3 + $0x10] sm:$0xff]
        %v563 = vld [vmem:[#allocation3 + $0x18] sm:$0xff]
        %vm580 = vcmask 1046528
        %v581 = vrot.slane %v540, 1
        %v582 = vrot.slane %v541, 1
        %v583 = vsel %vm580, %v581, %v582
        %v584 = vrot.slane %v542, 1
        %v585 = vrot.slane %v543, 1
        %v586 = vsel %vm580, %v584, %v585
        %v587 = vrot.slane %v544, 1
        %v588 = vrot.slane %v545, 1
        %v589 = vsel %vm580, %v587, %v588
        %v590 = vrot.slane %v546, 1
        %v591 = vrot.slane %v547, 1
        %v592 = vsel %vm580, %v590, %v591
        %v593 = vrot.slane %v548, 1
        %v594 = vrot.slane %v549, 1
        %v595 = vsel %vm580, %v593, %v594
        %v596 = vrot.slane %v550, 1
        %v597 = vrot.slane %v551, 1
        %v598 = vsel %vm580, %v596, %v597
        %v599 = vrot.slane %v552, 1
        %v600 = vrot.slane %v553, 1
        %v601 = vsel %vm580, %v599, %v600
        %v602 = vrot.slane %v554, 1
        %v603 = vrot.slane %v555, 1
        %v604 = vsel %vm580, %v602, %v603
        %s605 = scalar_lea.vmem [#allocation3], 32
        %v606 = vld [vmem:[%s605] sm:$0xff]
        %v607 = vld [vmem:[%s605 + $0x8] sm:$0xff]
        %v608 = vld [vmem:[%s605 + $0x10] sm:$0xff]
        %v609 = vld [vmem:[%s605 + $0x18] sm:$0xff]
        %v610 = vsel %vm501, %v583, 0
        %v612 = vsel %vm501, %v586, 0
        %v614 = vsel %vm501, %v589, 0
        %v616 = vsel %vm501, %v592, 0
        %v618 = vsel %vm501, %v595, 0
        %v620 = vsel %vm501, %v598, 0
        %v622 = vsel %vm501, %v601, 0
        %v624 = vsel %vm501, %v604, 0
        %626 = vmatprep.subr.mxu0 0.0
        %627 = vmatpush1.msra.mxu0 0.0
        %628 = vmatprep.subr.mxu0 0.0
        %629 = vmatpush1.msra.mxu0 0.0
        %630 = vmatprep.subr.mxu0 0.0
        %631 = vmatpush1.msra.mxu0 0.0
        %632 = vmatprep.subr.mxu0 0.0
        %633 = vmatpush1.msra.mxu0 0.0
        %634 = vmatprep.subr.mxu0 0.0
        %635 = vmatpush1.msra.mxu0 0.0
        %636 = vmatprep.subr.mxu0 0.0
        %637 = vmatpush1.msra.mxu0 0.0
        %638 = vmatprep.subr.mxu0 0.0
        %639 = vmatpush1.msra.mxu0 0.0
        %640 = vmatprep.subr.mxu0 0.0
        %641 = vmatpush1.msra.mxu0 0.0
        %642 = vmatprep.subr.mxu0 0.0
        %643 = vmatpush1.msra.mxu0 0.0
        %644 = vmatprep.subr.mxu0 0.0
        %645 = vmatpush1.msra.mxu0 0.0
        %646 = vmatprep.subr.mxu0 0.0
        %647 = vmatpush1.msra.mxu0 0.0
        %648 = vmatprep.subr.mxu0 0.0
        %649 = vmatpush1.msra.mxu0 0.0
        %650 = vmatprep.subr.mxu0 0.0
        %651 = vmatpush1.msra.mxu0 %v609
        %652 = vmatprep.subr.mxu0 0.0
        %653 = vmatpush1.msra.mxu0 %v608
        %654 = vmatprep.subr.mxu0 0.0
        %655 = vmatpush1.msra.mxu0 %v607
        %656 = vmatprep.subr.mxu0 0.0
        %657 = vmatpush1.msra.mxu0 %v606
        %658 = vmatprep.subr.mxu0 0.0
        %659 = vmatpush2.msra.mxu0 0.0
        %660 = vmatprep.subr.mxu0 0.0
        %661 = vmatpush2.msra.mxu0 0.0
        %662 = vmatprep.subr.mxu0 0.0
        %663 = vmatpush2.msra.mxu0 0.0
        %664 = vmatprep.subr.mxu0 0.0
        %665 = vmatpush2.msra.mxu0 0.0
        %666 = vmatprep.subr.mxu0 0.0
        %667 = vmatpush2.msra.mxu0 0.0
        %668 = vmatprep.subr.mxu0 0.0
        %669 = vmatpush2.msra.mxu0 0.0
        %670 = vmatprep.subr.mxu0 0.0
        %671 = vmatpush2.msra.mxu0 0.0
        %672 = vmatprep.subr.mxu0 0.0
        %673 = vmatpush2.msra.mxu0 0.0
        %674 = vmatprep.subr.mxu0 0.0
        %675 = vmatpush2.msra.mxu0 0.0
        %676 = vmatprep.subr.mxu0 0.0
        %677 = vmatpush2.msra.mxu0 0.0
        %678 = vmatprep.subr.mxu0 0.0
        %679 = vmatpush2.msra.mxu0 0.0
        %680 = vmatprep.subr.mxu0 0.0
        %681 = vmatpush2.msra.mxu0 0.0
        %682 = vmatprep.subr.mxu0 0.0
        %683 = vmatpush2.msra.mxu0 0.0
        %684 = vmatprep.subr.mxu0 0.0
        %685 = vmatpush2.msra.mxu0 0.0
        %686 = vmatprep.subr.mxu0 0.0
        %687 = vmatpush2.msra.mxu0 0.0
        %688 = vmatprep.subr.mxu0 0.0
        %689 = vmatpush2.msra.mxu0 0.0
        %690 = vmatprep.mubr.f32.mxu0 0.0
        %691 = vmatmul.mubr.f32.gmra.mxu0 %v610
        %v692 = vpop.f32.mrf.mxu0
        %v693 = vadd.f32 0.0, %v692
        %v694 = vpop.f32.mrf.mxu0
        %695 = vmatprep.mubr.f32.mxu0 0.0
        %696 = vmatmul.mubr.f32.gmra.mxu0 %v612
        %v697 = vpop.f32.mrf.mxu0
        %v698 = vadd.f32 0.0, %v697
        %v699 = vpop.f32.mrf.mxu0
        %700 = vmatprep.mubr.f32.mxu0 0.0
        %701 = vmatmul.mubr.f32.gmra.mxu0 %v614
        %v702 = vpop.f32.mrf.mxu0
        %v703 = vadd.f32 0.0, %v702
        %v704 = vpop.f32.mrf.mxu0
        %705 = vmatprep.mubr.f32.mxu0 0.0
        %706 = vmatmul.mubr.f32.gmra.mxu0 %v616
        %v707 = vpop.f32.mrf.mxu0
        %v708 = vadd.f32 0.0, %v707
        %v709 = vpop.f32.mrf.mxu0
        %710 = vmatprep.mubr.f32.mxu0 0.0
        %711 = vmatmul.mubr.f32.gmra.mxu0 %v618
        %v712 = vpop.f32.mrf.mxu0
        %v713 = vadd.f32 0.0, %v712
        %v714 = vpop.f32.mrf.mxu0
        %715 = vmatprep.mubr.f32.mxu0 0.0
        %716 = vmatmul.mubr.f32.gmra.mxu0 %v620
        %v717 = vpop.f32.mrf.mxu0
        %v718 = vadd.f32 0.0, %v717
        %v719 = vpop.f32.mrf.mxu0
        %720 = vmatprep.mubr.f32.mxu0 0.0
        %721 = vmatmul.mubr.f32.gmra.mxu0 %v622
        %v722 = vpop.f32.mrf.mxu0
        %v723 = vadd.f32 0.0, %v722
        %v724 = vpop.f32.mrf.mxu0
        %725 = vmatprep.mubr.f32.mxu0 0.0
        %726 = vmatmul.mubr.f32.gmra.mxu0 %v624
        %v727 = vpop.f32.mrf.mxu0
        %v728 = vadd.f32 0.0, %v727
        %v729 = vpop.f32.mrf.mxu0
        %730 = vdwg.mxu0
        %v731 = vsel %vm501, %v540, 0
        %v733 = vsel %vm501, %v542, 0
        %v735 = vsel %vm501, %v544, 0
        %v737 = vsel %vm501, %v546, 0
        %v739 = vsel %vm501, %v548, 0
        %v741 = vsel %vm501, %v550, 0
        %v743 = vsel %vm501, %v552, 0
        %v745 = vsel %vm501, %v554, 0
        %747 = vmatprep.subr.mxu0 0.0
        %748 = vmatpush1.msra.mxu0 0.0
        %749 = vmatprep.subr.mxu0 0.0
        %750 = vmatpush1.msra.mxu0 0.0
        %751 = vmatprep.subr.mxu0 0.0
        %752 = vmatpush1.msra.mxu0 0.0
        %753 = vmatprep.subr.mxu0 0.0
        %754 = vmatpush1.msra.mxu0 0.0
        %755 = vmatprep.subr.mxu0 0.0
        %756 = vmatpush1.msra.mxu0 0.0
        %757 = vmatprep.subr.mxu0 0.0
        %758 = vmatpush1.msra.mxu0 0.0
        %759 = vmatprep.subr.mxu0 0.0
        %760 = vmatpush1.msra.mxu0 0.0
        %761 = vmatprep.subr.mxu0 0.0
        %762 = vmatpush1.msra.mxu0 0.0
        %763 = vmatprep.subr.mxu0 0.0
        %764 = vmatpush1.msra.mxu0 0.0
        %765 = vmatprep.subr.mxu0 0.0
        %766 = vmatpush1.msra.mxu0 0.0
        %767 = vmatprep.subr.mxu0 0.0
        %768 = vmatpush1.msra.mxu0 0.0
        %769 = vmatprep.subr.mxu0 0.0
        %770 = vmatpush1.msra.mxu0 0.0
        %771 = vmatprep.subr.mxu0 0.0
        %772 = vmatpush1.msra.mxu0 %v563
        %773 = vmatprep.subr.mxu0 0.0
        %774 = vmatpush1.msra.mxu0 %v562
        %775 = vmatprep.subr.mxu0 0.0
        %776 = vmatpush1.msra.mxu0 %v561
        %777 = vmatprep.subr.mxu0 0.0
        %778 = vmatpush1.msra.mxu0 %v560
        %779 = vmatprep.subr.mxu0 0.0
        %780 = vmatpush2.msra.mxu0 0.0
        %781 = vmatprep.subr.mxu0 0.0
        %782 = vmatpush2.msra.mxu0 0.0
        %783 = vmatprep.subr.mxu0 0.0
        %784 = vmatpush2.msra.mxu0 0.0
        %785 = vmatprep.subr.mxu0 0.0
        %786 = vmatpush2.msra.mxu0 0.0
        %787 = vmatprep.subr.mxu0 0.0
        %788 = vmatpush2.msra.mxu0 0.0
        %789 = vmatprep.subr.mxu0 0.0
        %790 = vmatpush2.msra.mxu0 0.0
        %791 = vmatprep.subr.mxu0 0.0
        %792 = vmatpush2.msra.mxu0 0.0
        %793 = vmatprep.subr.mxu0 0.0
        %794 = vmatpush2.msra.mxu0 0.0
        %795 = vmatprep.subr.mxu0 0.0
        %796 = vmatpush2.msra.mxu0 0.0
        %797 = vmatprep.subr.mxu0 0.0
        %798 = vmatpush2.msra.mxu0 0.0
        %799 = vmatprep.subr.mxu0 0.0
        %800 = vmatpush2.msra.mxu0 0.0
        %801 = vmatprep.subr.mxu0 0.0
        %802 = vmatpush2.msra.mxu0 0.0
        %803 = vmatprep.subr.mxu0 0.0
        %804 = vmatpush2.msra.mxu0 0.0
        %805 = vmatprep.subr.mxu0 0.0
        %806 = vmatpush2.msra.mxu0 0.0
        %807 = vmatprep.subr.mxu0 0.0
        %808 = vmatpush2.msra.mxu0 0.0
        %809 = vmatprep.subr.mxu0 0.0
        %810 = vmatpush2.msra.mxu0 0.0
        %811 = vmatprep.mubr.f32.mxu0 0.0
        %812 = vmatmul.mubr.f32.gmra.mxu0 %v731
        %v813 = vpop.f32.mrf.mxu0
        %v814 = vadd.f32 %v693, %v813
        %v815 = vpop.f32.mrf.mxu0
        %816 = vmatprep.mubr.f32.mxu0 0.0
        %817 = vmatmul.mubr.f32.gmra.mxu0 %v733
        %v818 = vpop.f32.mrf.mxu0
        %v819 = vadd.f32 %v698, %v818
        %v820 = vpop.f32.mrf.mxu0
        %821 = vmatprep.mubr.f32.mxu0 0.0
        %822 = vmatmul.mubr.f32.gmra.mxu0 %v735
        %v823 = vpop.f32.mrf.mxu0
        %v824 = vadd.f32 %v703, %v823
        %v825 = vpop.f32.mrf.mxu0
        %826 = vmatprep.mubr.f32.mxu0 0.0
        %827 = vmatmul.mubr.f32.gmra.mxu0 %v737
        %v828 = vpop.f32.mrf.mxu0
        %v829 = vadd.f32 %v708, %v828
        %v830 = vpop.f32.mrf.mxu0
        %831 = vmatprep.mubr.f32.mxu0 0.0
        %832 = vmatmul.mubr.f32.gmra.mxu0 %v739
        %v833 = vpop.f32.mrf.mxu0
        %v834 = vadd.f32 %v713, %v833
        %v835 = vpop.f32.mrf.mxu0
        %836 = vmatprep.mubr.f32.mxu0 0.0
        %837 = vmatmul.mubr.f32.gmra.mxu0 %v741
        %v838 = vpop.f32.mrf.mxu0
        %v839 = vadd.f32 %v718, %v838
        %v840 = vpop.f32.mrf.mxu0
        %841 = vmatprep.mubr.f32.mxu0 0.0
        %842 = vmatmul.mubr.f32.gmra.mxu0 %v743
        %v843 = vpop.f32.mrf.mxu0
        %v844 = vadd.f32 %v723, %v843
        %v845 = vpop.f32.mrf.mxu0
        %846 = vmatprep.mubr.f32.mxu0 0.0
        %847 = vmatmul.mubr.f32.gmra.mxu0 %v745
        %v848 = vpop.f32.mrf.mxu0
        %v849 = vadd.f32 %v728, %v848
        %v850 = vpop.f32.mrf.mxu0
        %851 = vdwg.mxu0
        %vm852 = vcmask 1045504
        %v853 = vrot.slane %v540, 2
        %v854 = vrot.slane %v541, 2
        %v855 = vsel %vm852, %v853, %v854
        %v856 = vrot.slane %v542, 2
        %v857 = vrot.slane %v543, 2
        %v858 = vsel %vm852, %v856, %v857
        %v859 = vrot.slane %v544, 2
        %v860 = vrot.slane %v545, 2
        %v861 = vsel %vm852, %v859, %v860
        %v862 = vrot.slane %v546, 2
        %v863 = vrot.slane %v547, 2
        %v864 = vsel %vm852, %v862, %v863
        %v865 = vrot.slane %v548, 2
        %v866 = vrot.slane %v549, 2
        %v867 = vsel %vm852, %v865, %v866
        %v868 = vrot.slane %v550, 2
        %v869 = vrot.slane %v551, 2
        %v870 = vsel %vm852, %v868, %v869
        %v871 = vrot.slane %v552, 2
        %v872 = vrot.slane %v553, 2
        %v873 = vsel %vm852, %v871, %v872
        %v874 = vrot.slane %v554, 2
        %v875 = vrot.slane %v555, 2
        %v876 = vsel %vm852, %v874, %v875
        %s877 = scalar_lea.vmem [#allocation3], 64
        %v878 = vld [vmem:[%s877] sm:$0xff]
        %v879 = vld [vmem:[%s877 + $0x8] sm:$0xff]
        %v880 = vld [vmem:[%s877 + $0x10] sm:$0xff]
        %v881 = vld [vmem:[%s877 + $0x18] sm:$0xff]
        %v882 = vsel %vm501, %v855, 0
        %v884 = vsel %vm501, %v858, 0
        %v886 = vsel %vm501, %v861, 0
        %v888 = vsel %vm501, %v864, 0
        %v890 = vsel %vm501, %v867, 0
        %v892 = vsel %vm501, %v870, 0
        %v894 = vsel %vm501, %v873, 0
        %v896 = vsel %vm501, %v876, 0
        %898 = vmatprep.subr.mxu0 0.0
        %899 = vmatpush1.msra.mxu0 0.0
        %900 = vmatprep.subr.mxu0 0.0
        %901 = vmatpush1.msra.mxu0 0.0
        %902 = vmatprep.subr.mxu0 0.0
        %903 = vmatpush1.msra.mxu0 0.0
        %904 = vmatprep.subr.mxu0 0.0
        %905 = vmatpush1.msra.mxu0 0.0
        %906 = vmatprep.subr.mxu0 0.0
        %907 = vmatpush1.msra.mxu0 0.0
        %908 = vmatprep.subr.mxu0 0.0
        %909 = vmatpush1.msra.mxu0 0.0
        %910 = vmatprep.subr.mxu0 0.0
        %911 = vmatpush1.msra.mxu0 0.0
        %912 = vmatprep.subr.mxu0 0.0
        %913 = vmatpush1.msra.mxu0 0.0
        %914 = vmatprep.subr.mxu0 0.0
        %915 = vmatpush1.msra.mxu0 0.0
        %916 = vmatprep.subr.mxu0 0.0
        %917 = vmatpush1.msra.mxu0 0.0
        %918 = vmatprep.subr.mxu0 0.0
        %919 = vmatpush1.msra.mxu0 0.0
        %920 = vmatprep.subr.mxu0 0.0
        %921 = vmatpush1.msra.mxu0 0.0
        %922 = vmatprep.subr.mxu0 0.0
        %923 = vmatpush1.msra.mxu0 %v881
        %924 = vmatprep.subr.mxu0 0.0
        %925 = vmatpush1.msra.mxu0 %v880
        %926 = vmatprep.subr.mxu0 0.0
        %927 = vmatpush1.msra.mxu0 %v879
        %928 = vmatprep.subr.mxu0 0.0
        %929 = vmatpush1.msra.mxu0 %v878
        %930 = vmatprep.subr.mxu0 0.0
        %931 = vmatpush2.msra.mxu0 0.0
        %932 = vmatprep.subr.mxu0 0.0
        %933 = vmatpush2.msra.mxu0 0.0
        %934 = vmatprep.subr.mxu0 0.0
        %935 = vmatpush2.msra.mxu0 0.0
        %936 = vmatprep.subr.mxu0 0.0
        %937 = vmatpush2.msra.mxu0 0.0
        %938 = vmatprep.subr.mxu0 0.0
        %939 = vmatpush2.msra.mxu0 0.0
        %940 = vmatprep.subr.mxu0 0.0
        %941 = vmatpush2.msra.mxu0 0.0
        %942 = vmatprep.subr.mxu0 0.0
        %943 = vmatpush2.msra.mxu0 0.0
        %944 = vmatprep.subr.mxu0 0.0
        %945 = vmatpush2.msra.mxu0 0.0
        %946 = vmatprep.subr.mxu0 0.0
        %947 = vmatpush2.msra.mxu0 0.0
        %948 = vmatprep.subr.mxu0 0.0
        %949 = vmatpush2.msra.mxu0 0.0
        %950 = vmatprep.subr.mxu0 0.0
        %951 = vmatpush2.msra.mxu0 0.0
        %952 = vmatprep.subr.mxu0 0.0
        %953 = vmatpush2.msra.mxu0 0.0
        %954 = vmatprep.subr.mxu0 0.0
        %955 = vmatpush2.msra.mxu0 0.0
        %956 = vmatprep.subr.mxu0 0.0
        %957 = vmatpush2.msra.mxu0 0.0
        %958 = vmatprep.subr.mxu0 0.0
        %959 = vmatpush2.msra.mxu0 0.0
        %960 = vmatprep.subr.mxu0 0.0
        %961 = vmatpush2.msra.mxu0 0.0
        %962 = vmatprep.mubr.f32.mxu0 0.0
        %963 = vmatmul.mubr.f32.gmra.mxu0 %v882
        %v964 = vpop.f32.mrf.mxu0
        %v965 = vadd.f32 0.0, %v964
        %v966 = vpop.f32.mrf.mxu0
        %967 = vmatprep.mubr.f32.mxu0 0.0
        %968 = vmatmul.mubr.f32.gmra.mxu0 %v884
        %v969 = vpop.f32.mrf.mxu0
        %v970 = vadd.f32 0.0, %v969
        %v971 = vpop.f32.mrf.mxu0
        %972 = vmatprep.mubr.f32.mxu0 0.0
        %973 = vmatmul.mubr.f32.gmra.mxu0 %v886
        %v974 = vpop.f32.mrf.mxu0
        %v975 = vadd.f32 0.0, %v974
        %v976 = vpop.f32.mrf.mxu0
        %977 = vmatprep.mubr.f32.mxu0 0.0
        %978 = vmatmul.mubr.f32.gmra.mxu0 %v888
        %v979 = vpop.f32.mrf.mxu0
        %v980 = vadd.f32 0.0, %v979
        %v981 = vpop.f32.mrf.mxu0
        %982 = vmatprep.mubr.f32.mxu0 0.0
        %983 = vmatmul.mubr.f32.gmra.mxu0 %v890
        %v984 = vpop.f32.mrf.mxu0
        %v985 = vadd.f32 0.0, %v984
        %v986 = vpop.f32.mrf.mxu0
        %987 = vmatprep.mubr.f32.mxu0 0.0
        %988 = vmatmul.mubr.f32.gmra.mxu0 %v892
        %v989 = vpop.f32.mrf.mxu0
        %v990 = vadd.f32 0.0, %v989
        %v991 = vpop.f32.mrf.mxu0
        %992 = vmatprep.mubr.f32.mxu0 0.0
        %993 = vmatmul.mubr.f32.gmra.mxu0 %v894
        %v994 = vpop.f32.mrf.mxu0
        %v995 = vadd.f32 0.0, %v994
        %v996 = vpop.f32.mrf.mxu0
        %997 = vmatprep.mubr.f32.mxu0 0.0
        %998 = vmatmul.mubr.f32.gmra.mxu0 %v896
        %v999 = vpop.f32.mrf.mxu0
        %v1000 = vadd.f32 0.0, %v999
        %v1001 = vpop.f32.mrf.mxu0
        %1002 = vdwg.mxu0
        %v1003 = vadd.f32 %v814, %v965
        %v1004 = vadd.f32 %v819, %v970
        %v1005 = vadd.f32 %v824, %v975
        %v1006 = vadd.f32 %v829, %v980
        %v1007 = vadd.f32 %v834, %v985
        %v1008 = vadd.f32 %v839, %v990
        %v1009 = vadd.f32 %v844, %v995
        %v1010 = vadd.f32 %v849, %v1000
        %s1011 = scalar_lea.vmem [#allocation3], 96
        %v1012 = vld [vmem:[%s1011] sm:$0xff]
        %v1013 = vld [vmem:[%s1011 + $0x8] sm:$0xff]
        %v1014 = vld [vmem:[%s1011 + $0x10] sm:$0xff]
        %v1015 = vld [vmem:[%s1011 + $0x18] sm:$0xff]
        %v1017 = vsel %vm501, %v556, 0
        %1019 = vmatprep.subr.mxu0 0.0
        %1020 = vmatpush1.msra.mxu0 0.0
        %1021 = vmatprep.subr.mxu0 0.0
        %1022 = vmatpush1.msra.mxu0 0.0
        %1023 = vmatprep.subr.mxu0 0.0
        %1024 = vmatpush1.msra.mxu0 0.0
        %1025 = vmatprep.subr.mxu0 0.0
        %1026 = vmatpush1.msra.mxu0 0.0
        %1027 = vmatprep.subr.mxu0 0.0
        %1028 = vmatpush1.msra.mxu0 0.0
        %1029 = vmatprep.subr.mxu0 0.0
        %1030 = vmatpush1.msra.mxu0 0.0
        %1031 = vmatprep.subr.mxu0 0.0
        %1032 = vmatpush1.msra.mxu0 0.0
        %1033 = vmatprep.subr.mxu0 0.0
        %1034 = vmatpush1.msra.mxu0 0.0
        %1035 = vmatprep.subr.mxu0 0.0
        %1036 = vmatpush1.msra.mxu0 0.0
        %1037 = vmatprep.subr.mxu0 0.0
        %1038 = vmatpush1.msra.mxu0 0.0
        %1039 = vmatprep.subr.mxu0 0.0
        %1040 = vmatpush1.msra.mxu0 0.0
        %1041 = vmatprep.subr.mxu0 0.0
        %1042 = vmatpush1.msra.mxu0 0.0
        %1043 = vmatprep.subr.mxu0 0.0
        %1044 = vmatpush1.msra.mxu0 %v1015
        %1045 = vmatprep.subr.mxu0 0.0
        %1046 = vmatpush1.msra.mxu0 %v1014
        %1047 = vmatprep.subr.mxu0 0.0
        %1048 = vmatpush1.msra.mxu0 %v1013
        %1049 = vmatprep.subr.mxu0 0.0
        %1050 = vmatpush1.msra.mxu0 %v1012
        %1051 = vmatprep.subr.mxu0 0.0
        %1052 = vmatpush2.msra.mxu0 0.0
        %1053 = vmatprep.subr.mxu0 0.0
        %1054 = vmatpush2.msra.mxu0 0.0
        %1055 = vmatprep.subr.mxu0 0.0
        %1056 = vmatpush2.msra.mxu0 0.0
        %1057 = vmatprep.subr.mxu0 0.0
        %1058 = vmatpush2.msra.mxu0 0.0
        %1059 = vmatprep.subr.mxu0 0.0
        %1060 = vmatpush2.msra.mxu0 0.0
        %1061 = vmatprep.subr.mxu0 0.0
        %1062 = vmatpush2.msra.mxu0 0.0
        %1063 = vmatprep.subr.mxu0 0.0
        %1064 = vmatpush2.msra.mxu0 0.0
        %1065 = vmatprep.subr.mxu0 0.0
        %1066 = vmatpush2.msra.mxu0 0.0
        %1067 = vmatprep.subr.mxu0 0.0
        %1068 = vmatpush2.msra.mxu0 0.0
        %1069 = vmatprep.subr.mxu0 0.0
        %1070 = vmatpush2.msra.mxu0 0.0
        %1071 = vmatprep.subr.mxu0 0.0
        %1072 = vmatpush2.msra.mxu0 0.0
        %1073 = vmatprep.subr.mxu0 0.0
        %1074 = vmatpush2.msra.mxu0 0.0
        %1075 = vmatprep.subr.mxu0 0.0
        %1076 = vmatpush2.msra.mxu0 0.0
        %1077 = vmatprep.subr.mxu0 0.0
        %1078 = vmatpush2.msra.mxu0 0.0
        %1079 = vmatprep.subr.mxu0 0.0
        %1080 = vmatpush2.msra.mxu0 0.0
        %1081 = vmatprep.subr.mxu0 0.0
        %1082 = vmatpush2.msra.mxu0 0.0
        %1083 = vmatprep.mubr.f32.mxu0 0.0
        %1084 = vmatmul.mubr.f32.gmra.mxu0 %v733
        %v1085 = vpop.f32.mrf.mxu0
        %v1086 = vadd.f32 0.0, %v1085
        %v1087 = vpop.f32.mrf.mxu0
        %1088 = vmatprep.mubr.f32.mxu0 0.0
        %1089 = vmatmul.mubr.f32.gmra.mxu0 %v735
        %v1090 = vpop.f32.mrf.mxu0
        %v1091 = vadd.f32 0.0, %v1090
        %v1092 = vpop.f32.mrf.mxu0
        %1093 = vmatprep.mubr.f32.mxu0 0.0
        %1094 = vmatmul.mubr.f32.gmra.mxu0 %v737
        %v1095 = vpop.f32.mrf.mxu0
        %v1096 = vadd.f32 0.0, %v1095
        %v1097 = vpop.f32.mrf.mxu0
        %1098 = vmatprep.mubr.f32.mxu0 0.0
        %1099 = vmatmul.mubr.f32.gmra.mxu0 %v739
        %v1100 = vpop.f32.mrf.mxu0
        %v1101 = vadd.f32 0.0, %v1100
        %v1102 = vpop.f32.mrf.mxu0
        %1103 = vmatprep.mubr.f32.mxu0 0.0
        %1104 = vmatmul.mubr.f32.gmra.mxu0 %v741
        %v1105 = vpop.f32.mrf.mxu0
        %v1106 = vadd.f32 0.0, %v1105
        %v1107 = vpop.f32.mrf.mxu0
        %1108 = vmatprep.mubr.f32.mxu0 0.0
        %1109 = vmatmul.mubr.f32.gmra.mxu0 %v743
        %v1110 = vpop.f32.mrf.mxu0
        %v1111 = vadd.f32 0.0, %v1110
        %v1112 = vpop.f32.mrf.mxu0
        %1113 = vmatprep.mubr.f32.mxu0 0.0
        %1114 = vmatmul.mubr.f32.gmra.mxu0 %v745
        %v1115 = vpop.f32.mrf.mxu0
        %v1116 = vadd.f32 0.0, %v1115
        %v1117 = vpop.f32.mrf.mxu0
        %1118 = vmatprep.mubr.f32.mxu0 0.0
        %1119 = vmatmul.mubr.f32.gmra.mxu0 %v1017
        %v1120 = vpop.f32.mrf.mxu0
        %v1121 = vadd.f32 0.0, %v1120
        %v1122 = vpop.f32.mrf.mxu0
        %1123 = vdwg.mxu0
        %v1124 = vadd.f32 %v1003, %v1086
        %v1125 = vadd.f32 %v1004, %v1091
        %v1126 = vadd.f32 %v1005, %v1096
        %v1127 = vadd.f32 %v1006, %v1101
        %v1128 = vadd.f32 %v1007, %v1106
        %v1129 = vadd.f32 %v1008, %v1111
        %v1130 = vadd.f32 %v1009, %v1116
        %v1131 = vadd.f32 %v1010, %v1121
        %v1133 = vrot.slane %v556, 1
        %v1134 = vrot.slane %v557, 1
        %v1135 = vsel %vm580, %v1133, %v1134
        %s1136 = scalar_lea.vmem [#allocation3], 128
        %v1137 = vld [vmem:[%s1136] sm:$0xff]
        %v1138 = vld [vmem:[%s1136 + $0x8] sm:$0xff]
        %v1139 = vld [vmem:[%s1136 + $0x10] sm:$0xff]
        %v1140 = vld [vmem:[%s1136 + $0x18] sm:$0xff]
        %v1141 = vsel %vm501, %v1135, 0
        %1143 = vmatprep.subr.mxu0 0.0
        %1144 = vmatpush1.msra.mxu0 0.0
        %1145 = vmatprep.subr.mxu0 0.0
        %1146 = vmatpush1.msra.mxu0 0.0
        %1147 = vmatprep.subr.mxu0 0.0
        %1148 = vmatpush1.msra.mxu0 0.0
        %1149 = vmatprep.subr.mxu0 0.0
        %1150 = vmatpush1.msra.mxu0 0.0
        %1151 = vmatprep.subr.mxu0 0.0
        %1152 = vmatpush1.msra.mxu0 0.0
        %1153 = vmatprep.subr.mxu0 0.0
        %1154 = vmatpush1.msra.mxu0 0.0
        %1155 = vmatprep.subr.mxu0 0.0
        %1156 = vmatpush1.msra.mxu0 0.0
        %1157 = vmatprep.subr.mxu0 0.0
        %1158 = vmatpush1.msra.mxu0 0.0
        %1159 = vmatprep.subr.mxu0 0.0
        %1160 = vmatpush1.msra.mxu0 0.0
        %1161 = vmatprep.subr.mxu0 0.0
        %1162 = vmatpush1.msra.mxu0 0.0
        %1163 = vmatprep.subr.mxu0 0.0
        %1164 = vmatpush1.msra.mxu0 0.0
        %1165 = vmatprep.subr.mxu0 0.0
        %1166 = vmatpush1.msra.mxu0 0.0
        %1167 = vmatprep.subr.mxu0 0.0
        %1168 = vmatpush1.msra.mxu0 %v1140
        %1169 = vmatprep.subr.mxu0 0.0
        %1170 = vmatpush1.msra.mxu0 %v1139
        %1171 = vmatprep.subr.mxu0 0.0
        %1172 = vmatpush1.msra.mxu0 %v1138
        %1173 = vmatprep.subr.mxu0 0.0
        %1174 = vmatpush1.msra.mxu0 %v1137
        %1175 = vmatprep.subr.mxu0 0.0
        %1176 = vmatpush2.msra.mxu0 0.0
        %1177 = vmatprep.subr.mxu0 0.0
        %1178 = vmatpush2.msra.mxu0 0.0
        %1179 = vmatprep.subr.mxu0 0.0
        %1180 = vmatpush2.msra.mxu0 0.0
        %1181 = vmatprep.subr.mxu0 0.0
        %1182 = vmatpush2.msra.mxu0 0.0
        %1183 = vmatprep.subr.mxu0 0.0
        %1184 = vmatpush2.msra.mxu0 0.0
        %1185 = vmatprep.subr.mxu0 0.0
        %1186 = vmatpush2.msra.mxu0 0.0
        %1187 = vmatprep.subr.mxu0 0.0
        %1188 = vmatpush2.msra.mxu0 0.0
        %1189 = vmatprep.subr.mxu0 0.0
        %1190 = vmatpush2.msra.mxu0 0.0
        %1191 = vmatprep.subr.mxu0 0.0
        %1192 = vmatpush2.msra.mxu0 0.0
        %1193 = vmatprep.subr.mxu0 0.0
        %1194 = vmatpush2.msra.mxu0 0.0
        %1195 = vmatprep.subr.mxu0 0.0
        %1196 = vmatpush2.msra.mxu0 0.0
        %1197 = vmatprep.subr.mxu0 0.0
        %1198 = vmatpush2.msra.mxu0 0.0
        %1199 = vmatprep.subr.mxu0 0.0
        %1200 = vmatpush2.msra.mxu0 0.0
        %1201 = vmatprep.subr.mxu0 0.0
        %1202 = vmatpush2.msra.mxu0 0.0
        %1203 = vmatprep.subr.mxu0 0.0
        %1204 = vmatpush2.msra.mxu0 0.0
        %1205 = vmatprep.subr.mxu0 0.0
        %1206 = vmatpush2.msra.mxu0 0.0
        %1207 = vmatprep.mubr.f32.mxu0 0.0
        %1208 = vmatmul.mubr.f32.gmra.mxu0 %v612
        %v1209 = vpop.f32.mrf.mxu0
        %v1210 = vadd.f32 0.0, %v1209
        %v1211 = vpop.f32.mrf.mxu0
        %1212 = vmatprep.mubr.f32.mxu0 0.0
        %1213 = vmatmul.mubr.f32.gmra.mxu0 %v614
        %v1214 = vpop.f32.mrf.mxu0
        %v1215 = vadd.f32 0.0, %v1214
        %v1216 = vpop.f32.mrf.mxu0
        %1217 = vmatprep.mubr.f32.mxu0 0.0
        %1218 = vmatmul.mubr.f32.gmra.mxu0 %v616
        %v1219 = vpop.f32.mrf.mxu0
        %v1220 = vadd.f32 0.0, %v1219
        %v1221 = vpop.f32.mrf.mxu0
        %1222 = vmatprep.mubr.f32.mxu0 0.0
        %1223 = vmatmul.mubr.f32.gmra.mxu0 %v618
        %v1224 = vpop.f32.mrf.mxu0
        %v1225 = vadd.f32 0.0, %v1224
        %v1226 = vpop.f32.mrf.mxu0
        %1227 = vmatprep.mubr.f32.mxu0 0.0
        %1228 = vmatmul.mubr.f32.gmra.mxu0 %v620
        %v1229 = vpop.f32.mrf.mxu0
        %v1230 = vadd.f32 0.0, %v1229
        %v1231 = vpop.f32.mrf.mxu0
        %1232 = vmatprep.mubr.f32.mxu0 0.0
        %1233 = vmatmul.mubr.f32.gmra.mxu0 %v622
        %v1234 = vpop.f32.mrf.mxu0
        %v1235 = vadd.f32 0.0, %v1234
        %v1236 = vpop.f32.mrf.mxu0
        %1237 = vmatprep.mubr.f32.mxu0 0.0
        %1238 = vmatmul.mubr.f32.gmra.mxu0 %v624
        %v1239 = vpop.f32.mrf.mxu0
        %v1240 = vadd.f32 0.0, %v1239
        %v1241 = vpop.f32.mrf.mxu0
        %1242 = vmatprep.mubr.f32.mxu0 0.0
        %1243 = vmatmul.mubr.f32.gmra.mxu0 %v1141
        %v1244 = vpop.f32.mrf.mxu0
        %v1245 = vadd.f32 0.0, %v1244
        %v1246 = vpop.f32.mrf.mxu0
        %1247 = vdwg.mxu0
        %v1248 = vadd.f32 %v1124, %v1210
        %v1249 = vadd.f32 %v1125, %v1215
        %v1250 = vadd.f32 %v1126, %v1220
        %v1251 = vadd.f32 %v1127, %v1225
        %v1252 = vadd.f32 %v1128, %v1230
        %v1253 = vadd.f32 %v1129, %v1235
        %v1254 = vadd.f32 %v1130, %v1240
        %v1255 = vadd.f32 %v1131, %v1245
        %v1256 = vrot.slane %v556, 2
        %v1257 = vrot.slane %v557, 2
        %v1258 = vsel %vm852, %v1256, %v1257
        %s1259 = scalar_lea.vmem [#allocation3], 160
        %v1260 = vld [vmem:[%s1259] sm:$0xff]
        %v1261 = vld [vmem:[%s1259 + $0x8] sm:$0xff]
        %v1262 = vld [vmem:[%s1259 + $0x10] sm:$0xff]
        %v1263 = vld [vmem:[%s1259 + $0x18] sm:$0xff]
        %v1264 = vsel %vm501, %v1258, 0
        %1266 = vmatprep.subr.mxu0 0.0
        %1267 = vmatpush1.msra.mxu0 0.0
        %1268 = vmatprep.subr.mxu0 0.0
        %1269 = vmatpush1.msra.mxu0 0.0
        %1270 = vmatprep.subr.mxu0 0.0
        %1271 = vmatpush1.msra.mxu0 0.0
        %1272 = vmatprep.subr.mxu0 0.0
        %1273 = vmatpush1.msra.mxu0 0.0
        %1274 = vmatprep.subr.mxu0 0.0
        %1275 = vmatpush1.msra.mxu0 0.0
        %1276 = vmatprep.subr.mxu0 0.0
        %1277 = vmatpush1.msra.mxu0 0.0
        %1278 = vmatprep.subr.mxu0 0.0
        %1279 = vmatpush1.msra.mxu0 0.0
        %1280 = vmatprep.subr.mxu0 0.0
        %1281 = vmatpush1.msra.mxu0 0.0
        %1282 = vmatprep.subr.mxu0 0.0
        %1283 = vmatpush1.msra.mxu0 0.0
        %1284 = vmatprep.subr.mxu0 0.0
        %1285 = vmatpush1.msra.mxu0 0.0
        %1286 = vmatprep.subr.mxu0 0.0
        %1287 = vmatpush1.msra.mxu0 0.0
        %1288 = vmatprep.subr.mxu0 0.0
        %1289 = vmatpush1.msra.mxu0 0.0
        %1290 = vmatprep.subr.mxu0 0.0
        %1291 = vmatpush1.msra.mxu0 %v1263
        %1292 = vmatprep.subr.mxu0 0.0
        %1293 = vmatpush1.msra.mxu0 %v1262
        %1294 = vmatprep.subr.mxu0 0.0
        %1295 = vmatpush1.msra.mxu0 %v1261
        %1296 = vmatprep.subr.mxu0 0.0
        %1297 = vmatpush1.msra.mxu0 %v1260
        %1298 = vmatprep.subr.mxu0 0.0
        %1299 = vmatpush2.msra.mxu0 0.0
        %1300 = vmatprep.subr.mxu0 0.0
        %1301 = vmatpush2.msra.mxu0 0.0
        %1302 = vmatprep.subr.mxu0 0.0
        %1303 = vmatpush2.msra.mxu0 0.0
        %1304 = vmatprep.subr.mxu0 0.0
        %1305 = vmatpush2.msra.mxu0 0.0
        %1306 = vmatprep.subr.mxu0 0.0
        %1307 = vmatpush2.msra.mxu0 0.0
        %1308 = vmatprep.subr.mxu0 0.0
        %1309 = vmatpush2.msra.mxu0 0.0
        %1310 = vmatprep.subr.mxu0 0.0
        %1311 = vmatpush2.msra.mxu0 0.0
        %1312 = vmatprep.subr.mxu0 0.0
        %1313 = vmatpush2.msra.mxu0 0.0
        %1314 = vmatprep.subr.mxu0 0.0
        %1315 = vmatpush2.msra.mxu0 0.0
        %1316 = vmatprep.subr.mxu0 0.0
        %1317 = vmatpush2.msra.mxu0 0.0
        %1318 = vmatprep.subr.mxu0 0.0
        %1319 = vmatpush2.msra.mxu0 0.0
        %1320 = vmatprep.subr.mxu0 0.0
        %1321 = vmatpush2.msra.mxu0 0.0
        %1322 = vmatprep.subr.mxu0 0.0
        %1323 = vmatpush2.msra.mxu0 0.0
        %1324 = vmatprep.subr.mxu0 0.0
        %1325 = vmatpush2.msra.mxu0 0.0
        %1326 = vmatprep.subr.mxu0 0.0
        %1327 = vmatpush2.msra.mxu0 0.0
        %1328 = vmatprep.subr.mxu0 0.0
        %1329 = vmatpush2.msra.mxu0 0.0
        %1330 = vmatprep.mubr.f32.mxu0 0.0
        %1331 = vmatmul.mubr.f32.gmra.mxu0 %v884
        %v1332 = vpop.f32.mrf.mxu0
        %v1333 = vadd.f32 0.0, %v1332
        %v1334 = vpop.f32.mrf.mxu0
        %1335 = vmatprep.mubr.f32.mxu0 0.0
        %1336 = vmatmul.mubr.f32.gmra.mxu0 %v886
        %v1337 = vpop.f32.mrf.mxu0
        %v1338 = vadd.f32 0.0, %v1337
        %v1339 = vpop.f32.mrf.mxu0
        %1340 = vmatprep.mubr.f32.mxu0 0.0
        %1341 = vmatmul.mubr.f32.gmra.mxu0 %v888
        %v1342 = vpop.f32.mrf.mxu0
        %v1343 = vadd.f32 0.0, %v1342
        %v1344 = vpop.f32.mrf.mxu0
        %1345 = vmatprep.mubr.f32.mxu0 0.0
        %1346 = vmatmul.mubr.f32.gmra.mxu0 %v890
        %v1347 = vpop.f32.mrf.mxu0
        %v1348 = vadd.f32 0.0, %v1347
        %v1349 = vpop.f32.mrf.mxu0
        %1350 = vmatprep.mubr.f32.mxu0 0.0
        %1351 = vmatmul.mubr.f32.gmra.mxu0 %v892
        %v1352 = vpop.f32.mrf.mxu0
        %v1353 = vadd.f32 0.0, %v1352
        %v1354 = vpop.f32.mrf.mxu0
        %1355 = vmatprep.mubr.f32.mxu0 0.0
        %1356 = vmatmul.mubr.f32.gmra.mxu0 %v894
        %v1357 = vpop.f32.mrf.mxu0
        %v1358 = vadd.f32 0.0, %v1357
        %v1359 = vpop.f32.mrf.mxu0
        %1360 = vmatprep.mubr.f32.mxu0 0.0
        %1361 = vmatmul.mubr.f32.gmra.mxu0 %v896
        %v1362 = vpop.f32.mrf.mxu0
        %v1363 = vadd.f32 0.0, %v1362
        %v1364 = vpop.f32.mrf.mxu0
        %1365 = vmatprep.mubr.f32.mxu0 0.0
        %1366 = vmatmul.mubr.f32.gmra.mxu0 %v1264
        %v1367 = vpop.f32.mrf.mxu0
        %v1368 = vadd.f32 0.0, %v1367
        %v1369 = vpop.f32.mrf.mxu0
        %1370 = vdwg.mxu0
        %v1371 = vadd.f32 %v1248, %v1333
        %v1372 = vadd.f32 %v1249, %v1338
        %v1373 = vadd.f32 %v1250, %v1343
        %v1374 = vadd.f32 %v1251, %v1348
        %v1375 = vadd.f32 %v1252, %v1353
        %v1376 = vadd.f32 %v1253, %v1358
        %v1377 = vadd.f32 %v1254, %v1363
        %v1378 = vadd.f32 %v1255, %v1368
        %s1379 = scalar_lea.vmem [#allocation3], 192
        %v1380 = vld [vmem:[%s1379] sm:$0xff]
        %v1381 = vld [vmem:[%s1379 + $0x8] sm:$0xff]
        %v1382 = vld [vmem:[%s1379 + $0x10] sm:$0xff]
        %v1383 = vld [vmem:[%s1379 + $0x18] sm:$0xff]
        %v1385 = vsel %vm501, %v558, 0
        %1387 = vmatprep.subr.mxu0 0.0
        %1388 = vmatpush1.msra.mxu0 0.0
        %1389 = vmatprep.subr.mxu0 0.0
        %1390 = vmatpush1.msra.mxu0 0.0
        %1391 = vmatprep.subr.mxu0 0.0
        %1392 = vmatpush1.msra.mxu0 0.0
        %1393 = vmatprep.subr.mxu0 0.0
        %1394 = vmatpush1.msra.mxu0 0.0
        %1395 = vmatprep.subr.mxu0 0.0
        %1396 = vmatpush1.msra.mxu0 0.0
        %1397 = vmatprep.subr.mxu0 0.0
        %1398 = vmatpush1.msra.mxu0 0.0
        %1399 = vmatprep.subr.mxu0 0.0
        %1400 = vmatpush1.msra.mxu0 0.0
        %1401 = vmatprep.subr.mxu0 0.0
        %1402 = vmatpush1.msra.mxu0 0.0
        %1403 = vmatprep.subr.mxu0 0.0
        %1404 = vmatpush1.msra.mxu0 0.0
        %1405 = vmatprep.subr.mxu0 0.0
        %1406 = vmatpush1.msra.mxu0 0.0
        %1407 = vmatprep.subr.mxu0 0.0
        %1408 = vmatpush1.msra.mxu0 0.0
        %1409 = vmatprep.subr.mxu0 0.0
        %1410 = vmatpush1.msra.mxu0 0.0
        %1411 = vmatprep.subr.mxu0 0.0
        %1412 = vmatpush1.msra.mxu0 %v1383
        %1413 = vmatprep.subr.mxu0 0.0
        %1414 = vmatpush1.msra.mxu0 %v1382
        %1415 = vmatprep.subr.mxu0 0.0
        %1416 = vmatpush1.msra.mxu0 %v1381
        %1417 = vmatprep.subr.mxu0 0.0
        %1418 = vmatpush1.msra.mxu0 %v1380
        %1419 = vmatprep.subr.mxu0 0.0
        %1420 = vmatpush2.msra.mxu0 0.0
        %1421 = vmatprep.subr.mxu0 0.0
        %1422 = vmatpush2.msra.mxu0 0.0
        %1423 = vmatprep.subr.mxu0 0.0
        %1424 = vmatpush2.msra.mxu0 0.0
        %1425 = vmatprep.subr.mxu0 0.0
        %1426 = vmatpush2.msra.mxu0 0.0
        %1427 = vmatprep.subr.mxu0 0.0
        %1428 = vmatpush2.msra.mxu0 0.0
        %1429 = vmatprep.subr.mxu0 0.0
        %1430 = vmatpush2.msra.mxu0 0.0
        %1431 = vmatprep.subr.mxu0 0.0
        %1432 = vmatpush2.msra.mxu0 0.0
        %1433 = vmatprep.subr.mxu0 0.0
        %1434 = vmatpush2.msra.mxu0 0.0
        %1435 = vmatprep.subr.mxu0 0.0
        %1436 = vmatpush2.msra.mxu0 0.0
        %1437 = vmatprep.subr.mxu0 0.0
        %1438 = vmatpush2.msra.mxu0 0.0
        %1439 = vmatprep.subr.mxu0 0.0
        %1440 = vmatpush2.msra.mxu0 0.0
        %1441 = vmatprep.subr.mxu0 0.0
        %1442 = vmatpush2.msra.mxu0 0.0
        %1443 = vmatprep.subr.mxu0 0.0
        %1444 = vmatpush2.msra.mxu0 0.0
        %1445 = vmatprep.subr.mxu0 0.0
        %1446 = vmatpush2.msra.mxu0 0.0
        %1447 = vmatprep.subr.mxu0 0.0
        %1448 = vmatpush2.msra.mxu0 0.0
        %1449 = vmatprep.subr.mxu0 0.0
        %1450 = vmatpush2.msra.mxu0 0.0
        %1451 = vmatprep.mubr.f32.mxu0 0.0
        %1452 = vmatmul.mubr.f32.gmra.mxu0 %v735
        %v1453 = vpop.f32.mrf.mxu0
        %v1454 = vadd.f32 0.0, %v1453
        %v1455 = vpop.f32.mrf.mxu0
        %1456 = vmatprep.mubr.f32.mxu0 0.0
        %1457 = vmatmul.mubr.f32.gmra.mxu0 %v737
        %v1458 = vpop.f32.mrf.mxu0
        %v1459 = vadd.f32 0.0, %v1458
        %v1460 = vpop.f32.mrf.mxu0
        %1461 = vmatprep.mubr.f32.mxu0 0.0
        %1462 = vmatmul.mubr.f32.gmra.mxu0 %v739
        %v1463 = vpop.f32.mrf.mxu0
        %v1464 = vadd.f32 0.0, %v1463
        %v1465 = vpop.f32.mrf.mxu0
        %1466 = vmatprep.mubr.f32.mxu0 0.0
        %1467 = vmatmul.mubr.f32.gmra.mxu0 %v741
        %v1468 = vpop.f32.mrf.mxu0
        %v1469 = vadd.f32 0.0, %v1468
        %v1470 = vpop.f32.mrf.mxu0
        %1471 = vmatprep.mubr.f32.mxu0 0.0
        %1472 = vmatmul.mubr.f32.gmra.mxu0 %v743
        %v1473 = vpop.f32.mrf.mxu0
        %v1474 = vadd.f32 0.0, %v1473
        %v1475 = vpop.f32.mrf.mxu0
        %1476 = vmatprep.mubr.f32.mxu0 0.0
        %1477 = vmatmul.mubr.f32.gmra.mxu0 %v745
        %v1478 = vpop.f32.mrf.mxu0
        %v1479 = vadd.f32 0.0, %v1478
        %v1480 = vpop.f32.mrf.mxu0
        %1481 = vmatprep.mubr.f32.mxu0 0.0
        %1482 = vmatmul.mubr.f32.gmra.mxu0 %v1017
        %v1483 = vpop.f32.mrf.mxu0
        %v1484 = vadd.f32 0.0, %v1483
        %v1485 = vpop.f32.mrf.mxu0
        %1486 = vmatprep.mubr.f32.mxu0 0.0
        %1487 = vmatmul.mubr.f32.gmra.mxu0 %v1385
        %v1488 = vpop.f32.mrf.mxu0
        %v1489 = vadd.f32 0.0, %v1488
        %v1490 = vpop.f32.mrf.mxu0
        %1491 = vdwg.mxu0
        %v1492 = vadd.f32 %v1371, %v1454
        %v1493 = vadd.f32 %v1372, %v1459
        %v1494 = vadd.f32 %v1373, %v1464
        %v1495 = vadd.f32 %v1374, %v1469
        %v1496 = vadd.f32 %v1375, %v1474
        %v1497 = vadd.f32 %v1376, %v1479
        %v1498 = vadd.f32 %v1377, %v1484
        %v1499 = vadd.f32 %v1378, %v1489
        %v1501 = vrot.slane %v558, 1
        %v1502 = vrot.slane %v559, 1
        %v1503 = vsel %vm580, %v1501, %v1502
        %s1504 = scalar_lea.vmem [#allocation3], 224
        %v1505 = vld [vmem:[%s1504] sm:$0xff]
        %v1506 = vld [vmem:[%s1504 + $0x8] sm:$0xff]
        %v1507 = vld [vmem:[%s1504 + $0x10] sm:$0xff]
        %v1508 = vld [vmem:[%s1504 + $0x18] sm:$0xff]
        %v1509 = vsel %vm501, %v1503, 0
        %1511 = vmatprep.subr.mxu0 0.0
        %1512 = vmatpush1.msra.mxu0 0.0
        %1513 = vmatprep.subr.mxu0 0.0
        %1514 = vmatpush1.msra.mxu0 0.0
        %1515 = vmatprep.subr.mxu0 0.0
        %1516 = vmatpush1.msra.mxu0 0.0
        %1517 = vmatprep.subr.mxu0 0.0
        %1518 = vmatpush1.msra.mxu0 0.0
        %1519 = vmatprep.subr.mxu0 0.0
        %1520 = vmatpush1.msra.mxu0 0.0
        %1521 = vmatprep.subr.mxu0 0.0
        %1522 = vmatpush1.msra.mxu0 0.0
        %1523 = vmatprep.subr.mxu0 0.0
        %1524 = vmatpush1.msra.mxu0 0.0
        %1525 = vmatprep.subr.mxu0 0.0
        %1526 = vmatpush1.msra.mxu0 0.0
        %1527 = vmatprep.subr.mxu0 0.0
        %1528 = vmatpush1.msra.mxu0 0.0
        %1529 = vmatprep.subr.mxu0 0.0
        %1530 = vmatpush1.msra.mxu0 0.0
        %1531 = vmatprep.subr.mxu0 0.0
        %1532 = vmatpush1.msra.mxu0 0.0
        %1533 = vmatprep.subr.mxu0 0.0
        %1534 = vmatpush1.msra.mxu0 0.0
        %1535 = vmatprep.subr.mxu0 0.0
        %1536 = vmatpush1.msra.mxu0 %v1508
        %1537 = vmatprep.subr.mxu0 0.0
        %1538 = vmatpush1.msra.mxu0 %v1507
        %1539 = vmatprep.subr.mxu0 0.0
        %1540 = vmatpush1.msra.mxu0 %v1506
        %1541 = vmatprep.subr.mxu0 0.0
        %1542 = vmatpush1.msra.mxu0 %v1505
        %1543 = vmatprep.subr.mxu0 0.0
        %1544 = vmatpush2.msra.mxu0 0.0
        %1545 = vmatprep.subr.mxu0 0.0
        %1546 = vmatpush2.msra.mxu0 0.0
        %1547 = vmatprep.subr.mxu0 0.0
        %1548 = vmatpush2.msra.mxu0 0.0
        %1549 = vmatprep.subr.mxu0 0.0
        %1550 = vmatpush2.msra.mxu0 0.0
        %1551 = vmatprep.subr.mxu0 0.0
        %1552 = vmatpush2.msra.mxu0 0.0
        %1553 = vmatprep.subr.mxu0 0.0
        %1554 = vmatpush2.msra.mxu0 0.0
        %1555 = vmatprep.subr.mxu0 0.0
        %1556 = vmatpush2.msra.mxu0 0.0
        %1557 = vmatprep.subr.mxu0 0.0
        %1558 = vmatpush2.msra.mxu0 0.0
        %1559 = vmatprep.subr.mxu0 0.0
        %1560 = vmatpush2.msra.mxu0 0.0
        %1561 = vmatprep.subr.mxu0 0.0
        %1562 = vmatpush2.msra.mxu0 0.0
        %1563 = vmatprep.subr.mxu0 0.0
        %1564 = vmatpush2.msra.mxu0 0.0
        %1565 = vmatprep.subr.mxu0 0.0
        %1566 = vmatpush2.msra.mxu0 0.0
        %1567 = vmatprep.subr.mxu0 0.0
        %1568 = vmatpush2.msra.mxu0 0.0
        %1569 = vmatprep.subr.mxu0 0.0
        %1570 = vmatpush2.msra.mxu0 0.0
        %1571 = vmatprep.subr.mxu0 0.0
        %1572 = vmatpush2.msra.mxu0 0.0
        %1573 = vmatprep.subr.mxu0 0.0
        %1574 = vmatpush2.msra.mxu0 0.0
        %1575 = vmatprep.mubr.f32.mxu0 0.0
        %1576 = vmatmul.mubr.f32.gmra.mxu0 %v614
        %v1577 = vpop.f32.mrf.mxu0
        %v1578 = vadd.f32 0.0, %v1577
        %v1579 = vpop.f32.mrf.mxu0
        %1580 = vmatprep.mubr.f32.mxu0 0.0
        %1581 = vmatmul.mubr.f32.gmra.mxu0 %v616
        %v1582 = vpop.f32.mrf.mxu0
        %v1583 = vadd.f32 0.0, %v1582
        %v1584 = vpop.f32.mrf.mxu0
        %1585 = vmatprep.mubr.f32.mxu0 0.0
        %1586 = vmatmul.mubr.f32.gmra.mxu0 %v618
        %v1587 = vpop.f32.mrf.mxu0
        %v1588 = vadd.f32 0.0, %v1587
        %v1589 = vpop.f32.mrf.mxu0
        %1590 = vmatprep.mubr.f32.mxu0 0.0
        %1591 = vmatmul.mubr.f32.gmra.mxu0 %v620
        %v1592 = vpop.f32.mrf.mxu0
        %v1593 = vadd.f32 0.0, %v1592
        %v1594 = vpop.f32.mrf.mxu0
        %1595 = vmatprep.mubr.f32.mxu0 0.0
        %1596 = vmatmul.mubr.f32.gmra.mxu0 %v622
        %v1597 = vpop.f32.mrf.mxu0
        %v1598 = vadd.f32 0.0, %v1597
        %v1599 = vpop.f32.mrf.mxu0
        %1600 = vmatprep.mubr.f32.mxu0 0.0
        %1601 = vmatmul.mubr.f32.gmra.mxu0 %v624
        %v1602 = vpop.f32.mrf.mxu0
        %v1603 = vadd.f32 0.0, %v1602
        %v1604 = vpop.f32.mrf.mxu0
        %1605 = vmatprep.mubr.f32.mxu0 0.0
        %1606 = vmatmul.mubr.f32.gmra.mxu0 %v1141
        %v1607 = vpop.f32.mrf.mxu0
        %v1608 = vadd.f32 0.0, %v1607
        %v1609 = vpop.f32.mrf.mxu0
        %1610 = vmatprep.mubr.f32.mxu0 0.0
        %1611 = vmatmul.mubr.f32.gmra.mxu0 %v1509
        %v1612 = vpop.f32.mrf.mxu0
        %v1613 = vadd.f32 0.0, %v1612
        %v1614 = vpop.f32.mrf.mxu0
        %1615 = vdwg.mxu0
        %v1616 = vadd.f32 %v1492, %v1578
        %v1617 = vadd.f32 %v1493, %v1583
        %v1618 = vadd.f32 %v1494, %v1588
        %v1619 = vadd.f32 %v1495, %v1593
        %v1620 = vadd.f32 %v1496, %v1598
        %v1621 = vadd.f32 %v1497, %v1603
        %v1622 = vadd.f32 %v1498, %v1608
        %v1623 = vadd.f32 %v1499, %v1613
        %v1624 = vrot.slane %v558, 2
        %v1625 = vrot.slane %v559, 2
        %v1626 = vsel %vm852, %v1624, %v1625
        %s1627 = scalar_lea.vmem [#allocation3], 256
        %v1628 = vld [vmem:[%s1627] sm:$0xff]
        %v1629 = vld [vmem:[%s1627 + $0x8] sm:$0xff]
        %v1630 = vld [vmem:[%s1627 + $0x10] sm:$0xff]
        %v1631 = vld [vmem:[%s1627 + $0x18] sm:$0xff]
        %v1632 = vsel %vm501, %v1626, 0
        %1634 = vmatprep.subr.mxu0 0.0
        %1635 = vmatpush1.msra.mxu0 0.0
        %1636 = vmatprep.subr.mxu0 0.0
        %1637 = vmatpush1.msra.mxu0 0.0
        %1638 = vmatprep.subr.mxu0 0.0
        %1639 = vmatpush1.msra.mxu0 0.0
        %1640 = vmatprep.subr.mxu0 0.0
        %1641 = vmatpush1.msra.mxu0 0.0
        %1642 = vmatprep.subr.mxu0 0.0
        %1643 = vmatpush1.msra.mxu0 0.0
        %1644 = vmatprep.subr.mxu0 0.0
        %1645 = vmatpush1.msra.mxu0 0.0
        %1646 = vmatprep.subr.mxu0 0.0
        %1647 = vmatpush1.msra.mxu0 0.0
        %1648 = vmatprep.subr.mxu0 0.0
        %1649 = vmatpush1.msra.mxu0 0.0
        %1650 = vmatprep.subr.mxu0 0.0
        %1651 = vmatpush1.msra.mxu0 0.0
        %1652 = vmatprep.subr.mxu0 0.0
        %1653 = vmatpush1.msra.mxu0 0.0
        %1654 = vmatprep.subr.mxu0 0.0
        %1655 = vmatpush1.msra.mxu0 0.0
        %1656 = vmatprep.subr.mxu0 0.0
        %1657 = vmatpush1.msra.mxu0 0.0
        %1658 = vmatprep.subr.mxu0 0.0
        %1659 = vmatpush1.msra.mxu0 %v1631
        %1660 = vmatprep.subr.mxu0 0.0
        %1661 = vmatpush1.msra.mxu0 %v1630
        %1662 = vmatprep.subr.mxu0 0.0
        %1663 = vmatpush1.msra.mxu0 %v1629
        %1664 = vmatprep.subr.mxu0 0.0
        %1665 = vmatpush1.msra.mxu0 %v1628
        %1666 = vmatprep.subr.mxu0 0.0
        %1667 = vmatpush2.msra.mxu0 0.0
        %1668 = vmatprep.subr.mxu0 0.0
        %1669 = vmatpush2.msra.mxu0 0.0
        %1670 = vmatprep.subr.mxu0 0.0
        %1671 = vmatpush2.msra.mxu0 0.0
        %1672 = vmatprep.subr.mxu0 0.0
        %1673 = vmatpush2.msra.mxu0 0.0
        %1674 = vmatprep.subr.mxu0 0.0
        %1675 = vmatpush2.msra.mxu0 0.0
        %1676 = vmatprep.subr.mxu0 0.0
        %1677 = vmatpush2.msra.mxu0 0.0
        %1678 = vmatprep.subr.mxu0 0.0
        %1679 = vmatpush2.msra.mxu0 0.0
        %1680 = vmatprep.subr.mxu0 0.0
        %1681 = vmatpush2.msra.mxu0 0.0
        %1682 = vmatprep.subr.mxu0 0.0
        %1683 = vmatpush2.msra.mxu0 0.0
        %1684 = vmatprep.subr.mxu0 0.0
        %1685 = vmatpush2.msra.mxu0 0.0
        %1686 = vmatprep.subr.mxu0 0.0
        %1687 = vmatpush2.msra.mxu0 0.0
        %1688 = vmatprep.subr.mxu0 0.0
        %1689 = vmatpush2.msra.mxu0 0.0
        %1690 = vmatprep.subr.mxu0 0.0
        %1691 = vmatpush2.msra.mxu0 0.0
        %1692 = vmatprep.subr.mxu0 0.0
        %1693 = vmatpush2.msra.mxu0 0.0
        %1694 = vmatprep.subr.mxu0 0.0
        %1695 = vmatpush2.msra.mxu0 0.0
        %1696 = vmatprep.subr.mxu0 0.0
        %1697 = vmatpush2.msra.mxu0 0.0
        %1698 = vmatprep.mubr.f32.mxu0 0.0
        %1699 = vmatmul.mubr.f32.gmra.mxu0 %v886
        %v1700 = vpop.f32.mrf.mxu0
        %v1701 = vadd.f32 0.0, %v1700
        %v1702 = vpop.f32.mrf.mxu0
        %1703 = vmatprep.mubr.f32.mxu0 0.0
        %1704 = vmatmul.mubr.f32.gmra.mxu0 %v888
        %v1705 = vpop.f32.mrf.mxu0
        %v1706 = vadd.f32 0.0, %v1705
        %v1707 = vpop.f32.mrf.mxu0
        %1708 = vmatprep.mubr.f32.mxu0 0.0
        %1709 = vmatmul.mubr.f32.gmra.mxu0 %v890
        %v1710 = vpop.f32.mrf.mxu0
        %v1711 = vadd.f32 0.0, %v1710
        %v1712 = vpop.f32.mrf.mxu0
        %1713 = vmatprep.mubr.f32.mxu0 0.0
        %1714 = vmatmul.mubr.f32.gmra.mxu0 %v892
        %v1715 = vpop.f32.mrf.mxu0
        %v1716 = vadd.f32 0.0, %v1715
        %v1717 = vpop.f32.mrf.mxu0
        %1718 = vmatprep.mubr.f32.mxu0 0.0
        %1719 = vmatmul.mubr.f32.gmra.mxu0 %v894
        %v1720 = vpop.f32.mrf.mxu0
        %v1721 = vadd.f32 0.0, %v1720
        %v1722 = vpop.f32.mrf.mxu0
        %1723 = vmatprep.mubr.f32.mxu0 0.0
        %1724 = vmatmul.mubr.f32.gmra.mxu0 %v896
        %v1725 = vpop.f32.mrf.mxu0
        %v1726 = vadd.f32 0.0, %v1725
        %v1727 = vpop.f32.mrf.mxu0
        %1728 = vmatprep.mubr.f32.mxu0 0.0
        %1729 = vmatmul.mubr.f32.gmra.mxu0 %v1264
        %v1730 = vpop.f32.mrf.mxu0
        %v1731 = vadd.f32 0.0, %v1730
        %v1732 = vpop.f32.mrf.mxu0
        %1733 = vmatprep.mubr.f32.mxu0 0.0
        %1734 = vmatmul.mubr.f32.gmra.mxu0 %v1632
        %v1735 = vpop.f32.mrf.mxu0
        %v1736 = vadd.f32 0.0, %v1735
        %v1737 = vpop.f32.mrf.mxu0
        %1738 = vdwg.mxu0
        %v1739 = vadd.f32 %v1616, %v1701
        %v1740 = vadd.f32 %v1617, %v1706
        %v1741 = vadd.f32 %v1618, %v1711
        %v1742 = vadd.f32 %v1619, %v1716
        %v1743 = vadd.f32 %v1620, %v1721
        %v1744 = vadd.f32 %v1621, %v1726
        %v1745 = vadd.f32 %v1622, %v1731
        %v1746 = vadd.f32 %v1623, %v1736
        %v1747 = vld [vmem:[%s3] sm:$0x1]
        %v1749 = vlaneseq
        %v1750 = vshrl.u32 %v1749, 7
        %v1751 = vsub.s32 0, %v1750
        %v1752 = vrot.slane %v1747, %v1751
        %v1754 = vadd.f32 %v1739, %v1752
        %v1755 = vadd.f32 %v1740, %v1752
        %v1756 = vadd.f32 %v1741, %v1752
        %v1757 = vadd.f32 %v1742, %v1752
        %v1758 = vadd.f32 %v1743, %v1752
        %v1759 = vadd.f32 %v1744, %v1752
        %v1760 = vadd.f32 %v1745, %v1752
        %v1761 = vadd.f32 %v1746, %v1752
        %vm1762 = vcmask 523264
        %1763 = vst.msk [vmem:[%s466] sm:$0xff] %vm1762, %v1754
        %1764 = vst.msk [vmem:[%s466 + $0x8] sm:$0xff] %vm1762, %v1755
        %1765 = vst.msk [vmem:[%s466 + $0x10] sm:$0xff] %vm1762, %v1756
        %1766 = vst.msk [vmem:[%s466 + $0x18] sm:$0xff] %vm1762, %v1757
        %1767 = vst.msk [vmem:[%s466 + $0x20] sm:$0xff] %vm1762, %v1758
        %1768 = vst.msk [vmem:[%s466 + $0x28] sm:$0xff] %vm1762, %v1759
        %1769 = vst.msk [vmem:[%s466 + $0x30] sm:$0xff] %vm1762, %v1760
        %1770 = vst.msk [vmem:[%s466 + $0x38] sm:$0xff] %vm1762, %v1761
        %v1771 = vmul.f32 %v1754, 1.442695
        %v1772 = vpow.pop %v1771
        %v1773 = vmul.f32 %v1755, 1.442695
        %v1774 = vpow.pop %v1773
        %v1775 = vmul.f32 %v1756, 1.442695
        %v1776 = vpow.pop %v1775
        %v1777 = vmul.f32 %v1757, 1.442695
        %v1778 = vpow.pop %v1777
        %v1779 = vmul.f32 %v1758, 1.442695
        %v1780 = vpow.pop %v1779
        %v1781 = vmul.f32 %v1759, 1.442695
        %v1782 = vpow.pop %v1781
        %v1783 = vmul.f32 %v1760, 1.442695
        %v1784 = vpow.pop %v1783
        %v1785 = vmul.f32 %v1761, 1.442695
        %v1786 = vpow.pop %v1785
        %v1787 = vld [vmem:[%s490] sm:$0xff]
        %v1788 = vld [vmem:[%s490 + $0x8] sm:$0xff]
        %v1789 = vld [vmem:[%s490 + $0x10] sm:$0xff]
        %v1790 = vld [vmem:[%s490 + $0x18] sm:$0xff]
        %v1791 = vld [vmem:[%s490 + $0x20] sm:$0xff]
        %v1792 = vld [vmem:[%s490 + $0x28] sm:$0xff]
        %v1793 = vld [vmem:[%s490 + $0x30] sm:$0xff]
        %v1794 = vld [vmem:[%s490 + $0x38] sm:$0xff]
        %1803 = vrot.lane.b32.xlu0 %v1787, 32
        %v1804 = vpop.permute.xlu0 %1803
        %1805 = vrot.lane.b32.xlu0 %v1788, 32
        %v1806 = vpop.permute.xlu0 %1805
        %1807 = vrot.lane.b32.xlu0 %v1789, 32
        %v1808 = vpop.permute.xlu0 %1807
        %1809 = vrot.lane.b32.xlu0 %v1790, 32
        %v1810 = vpop.permute.xlu0 %1809
        %1811 = vrot.lane.b32.xlu0 %v1791, 32
        %v1812 = vpop.permute.xlu0 %1811
        %1813 = vrot.lane.b32.xlu0 %v1792, 32
        %v1814 = vpop.permute.xlu0 %1813
        %1815 = vrot.lane.b32.xlu0 %v1793, 32
        %v1816 = vpop.permute.xlu0 %1815
        %1817 = vrot.lane.b32.xlu0 %v1794, 32
        %v1818 = vpop.permute.xlu0 %1817
        %v1827 = vmul.f32 %v1772, %v1804
        %v1828 = vmul.f32 %v1774, %v1806
        %v1829 = vmul.f32 %v1776, %v1808
        %v1830 = vmul.f32 %v1778, %v1810
        %v1831 = vmul.f32 %v1780, %v1812
        %v1832 = vmul.f32 %v1782, %v1814
        %v1833 = vmul.f32 %v1784, %v1816
        %v1834 = vmul.f32 %v1786, %v1818
        %1843 = vrot.lane.b32.xlu0 %v1827, 96
        %v1844 = vpop.permute.xlu0 %1843
        %1845 = vrot.lane.b32.xlu0 %v1828, 96
        %v1846 = vpop.permute.xlu0 %1845
        %1847 = vrot.lane.b32.xlu0 %v1829, 96
        %v1848 = vpop.permute.xlu0 %1847
        %1849 = vrot.lane.b32.xlu0 %v1830, 96
        %v1850 = vpop.permute.xlu0 %1849
        %1851 = vrot.lane.b32.xlu0 %v1831, 96
        %v1852 = vpop.permute.xlu0 %1851
        %1853 = vrot.lane.b32.xlu0 %v1832, 96
        %v1854 = vpop.permute.xlu0 %1853
        %1855 = vrot.lane.b32.xlu0 %v1833, 96
        %v1856 = vpop.permute.xlu0 %1855
        %1857 = vrot.lane.b32.xlu0 %v1834, 96
        %v1858 = vpop.permute.xlu0 %1857
        %v1867 = vadd.f32 %v1754, %v1844
        %v1868 = vadd.f32 %v1755, %v1846
        %v1869 = vadd.f32 %v1756, %v1848
        %v1870 = vadd.f32 %v1757, %v1850
        %v1871 = vadd.f32 %v1758, %v1852
        %v1872 = vadd.f32 %v1759, %v1854
        %v1873 = vadd.f32 %v1760, %v1856
        %v1874 = vadd.f32 %v1761, %v1858
        %v1875 = vld [vmem:[%s4] sm:$0xff]
        %v1876 = vld [vmem:[%s4 + $0x8] sm:$0xff]
        %v1877 = vld [vmem:[%s4 + $0x10] sm:$0xff]
        %v1878 = vld [vmem:[%s4 + $0x18] sm:$0xff]
        %v1879 = vld [vmem:[%s5] sm:$0x1]
        %v1881 = vlaneseq
        %v1882 = vshrl.u32 %v1881, 7
        %v1883 = vsub.s32 0, %v1882
        %v1884 = vrot.slane %v1879, %v1883
        %v1887 = vsel %vm501, %v1867, 0
        %v1890 = vsel %vm501, %v1868, 0
        %v1893 = vsel %vm501, %v1869, 0
        %v1896 = vsel %vm501, %v1870, 0
        %v1899 = vsel %vm501, %v1871, 0
        %v1902 = vsel %vm501, %v1872, 0
        %v1905 = vsel %vm501, %v1873, 0
        %v1908 = vsel %vm501, %v1874, 0
        %1910 = vmatprep.subr.mxu0 0.0
        %1911 = vmatpush1.msra.mxu0 0.0
        %1912 = vmatprep.subr.mxu0 0.0
        %1913 = vmatpush1.msra.mxu0 0.0
        %1914 = vmatprep.subr.mxu0 0.0
        %1915 = vmatpush1.msra.mxu0 0.0
        %1916 = vmatprep.subr.mxu0 0.0
        %1917 = vmatpush1.msra.mxu0 0.0
        %1918 = vmatprep.subr.mxu0 0.0
        %1919 = vmatpush1.msra.mxu0 0.0
        %1920 = vmatprep.subr.mxu0 0.0
        %1921 = vmatpush1.msra.mxu0 0.0
        %1922 = vmatprep.subr.mxu0 0.0
        %1923 = vmatpush1.msra.mxu0 0.0
        %1924 = vmatprep.subr.mxu0 0.0
        %1925 = vmatpush1.msra.mxu0 0.0
        %1926 = vmatprep.subr.mxu0 0.0
        %1927 = vmatpush1.msra.mxu0 0.0
        %1928 = vmatprep.subr.mxu0 0.0
        %1929 = vmatpush1.msra.mxu0 0.0
        %1930 = vmatprep.subr.mxu0 0.0
        %1931 = vmatpush1.msra.mxu0 0.0
        %1932 = vmatprep.subr.mxu0 0.0
        %1933 = vmatpush1.msra.mxu0 0.0
        %1934 = vmatprep.subr.mxu0 0.0
        %1935 = vmatpush1.msra.mxu0 %v1878
        %1936 = vmatprep.subr.mxu0 0.0
        %1937 = vmatpush1.msra.mxu0 %v1877
        %1938 = vmatprep.subr.mxu0 0.0
        %1939 = vmatpush1.msra.mxu0 %v1876
        %1940 = vmatprep.subr.mxu0 0.0
        %1941 = vmatpush1.msra.mxu0 %v1875
        %1942 = vmatprep.subr.mxu0 0.0
        %1943 = vmatpush2.msra.mxu0 0.0
        %1944 = vmatprep.subr.mxu0 0.0
        %1945 = vmatpush2.msra.mxu0 0.0
        %1946 = vmatprep.subr.mxu0 0.0
        %1947 = vmatpush2.msra.mxu0 0.0
        %1948 = vmatprep.subr.mxu0 0.0
        %1949 = vmatpush2.msra.mxu0 0.0
        %1950 = vmatprep.subr.mxu0 0.0
        %1951 = vmatpush2.msra.mxu0 0.0
        %1952 = vmatprep.subr.mxu0 0.0
        %1953 = vmatpush2.msra.mxu0 0.0
        %1954 = vmatprep.subr.mxu0 0.0
        %1955 = vmatpush2.msra.mxu0 0.0
        %1956 = vmatprep.subr.mxu0 0.0
        %1957 = vmatpush2.msra.mxu0 0.0
        %1958 = vmatprep.subr.mxu0 0.0
        %1959 = vmatpush2.msra.mxu0 0.0
        %1960 = vmatprep.subr.mxu0 0.0
        %1961 = vmatpush2.msra.mxu0 0.0
        %1962 = vmatprep.subr.mxu0 0.0
        %1963 = vmatpush2.msra.mxu0 0.0
        %1964 = vmatprep.subr.mxu0 0.0
        %1965 = vmatpush2.msra.mxu0 0.0
        %1966 = vmatprep.subr.mxu0 0.0
        %1967 = vmatpush2.msra.mxu0 0.0
        %1968 = vmatprep.subr.mxu0 0.0
        %1969 = vmatpush2.msra.mxu0 0.0
        %1970 = vmatprep.subr.mxu0 0.0
        %1971 = vmatpush2.msra.mxu0 0.0
        %1972 = vmatprep.subr.mxu0 0.0
        %1973 = vmatpush2.msra.mxu0 0.0
        %1974 = vmatprep.mubr.f32.mxu0 0.0
        %1975 = vmatmul.mubr.f32.gmra.mxu0 %v1887
        %v1976 = vpop.f32.mrf.mxu0
        %v1977 = vadd.f32 %v1884, %v1976
        %v1978 = vpop.f32.mrf.mxu0
        %1979 = vmatprep.mubr.f32.mxu0 0.0
        %1980 = vmatmul.mubr.f32.gmra.mxu0 %v1890
        %v1981 = vpop.f32.mrf.mxu0
        %v1982 = vadd.f32 %v1884, %v1981
        %v1983 = vpop.f32.mrf.mxu0
        %1984 = vmatprep.mubr.f32.mxu0 0.0
        %1985 = vmatmul.mubr.f32.gmra.mxu0 %v1893
        %v1986 = vpop.f32.mrf.mxu0
        %v1987 = vadd.f32 %v1884, %v1986
        %v1988 = vpop.f32.mrf.mxu0
        %1989 = vmatprep.mubr.f32.mxu0 0.0
        %1990 = vmatmul.mubr.f32.gmra.mxu0 %v1896
        %v1991 = vpop.f32.mrf.mxu0
        %v1992 = vadd.f32 %v1884, %v1991
        %v1993 = vpop.f32.mrf.mxu0
        %1994 = vmatprep.mubr.f32.mxu0 0.0
        %1995 = vmatmul.mubr.f32.gmra.mxu0 %v1899
        %v1996 = vpop.f32.mrf.mxu0
        %v1997 = vadd.f32 %v1884, %v1996
        %v1998 = vpop.f32.mrf.mxu0
        %1999 = vmatprep.mubr.f32.mxu0 0.0
        %2000 = vmatmul.mubr.f32.gmra.mxu0 %v1902
        %v2001 = vpop.f32.mrf.mxu0
        %v2002 = vadd.f32 %v1884, %v2001
        %v2003 = vpop.f32.mrf.mxu0
        %2004 = vmatprep.mubr.f32.mxu0 0.0
        %2005 = vmatmul.mubr.f32.gmra.mxu0 %v1905
        %v2006 = vpop.f32.mrf.mxu0
        %v2007 = vadd.f32 %v1884, %v2006
        %v2008 = vpop.f32.mrf.mxu0
        %2009 = vmatprep.mubr.f32.mxu0 0.0
        %2010 = vmatmul.mubr.f32.gmra.mxu0 %v1908
        %v2011 = vpop.f32.mrf.mxu0
        %v2012 = vadd.f32 %v1884, %v2011
        %v2013 = vpop.f32.mrf.mxu0
        %2014 = vdwg.mxu0
        %2015 = vst.msk [vmem:[%s531 + $0x1] sm:$0xff] %vm501, %v1977
        %2016 = vst.msk [vmem:[%s531 + $0x11] sm:$0xff] %vm501, %v1982
        %2017 = vst.msk [vmem:[%s531 + $0x21] sm:$0xff] %vm501, %v1987
        %2018 = vst.msk [vmem:[%s531 + $0x31] sm:$0xff] %vm501, %v1992
        %2019 = vst.msk [vmem:[%s531 + $0x41] sm:$0xff] %vm501, %v1997
        %2020 = vst.msk [vmem:[%s531 + $0x51] sm:$0xff] %vm501, %v2002
        %2021 = vst.msk [vmem:[%s531 + $0x61] sm:$0xff] %vm501, %v2007
        %2022 = vst.msk [vmem:[%s531 + $0x71] sm:$0xff] %vm501, %v2012
        %v2023 = vld [vmem:[#allocation2] sm:$0xff]
        %v2024 = vld [vmem:[#allocation2 + $0x8] sm:$0x3]
        %v2025 = vld [vmem:[#allocation2 + $0x10] sm:$0xff]
        %v2026 = vld [vmem:[#allocation2 + $0x18] sm:$0x3]
        %v2027 = vld [vmem:[#allocation2 + $0x20] sm:$0xff]
        %v2028 = vld [vmem:[#allocation2 + $0x28] sm:$0x3]
        %v2029 = vld [vmem:[#allocation2 + $0x30] sm:$0xff]
        %v2030 = vld [vmem:[#allocation2 + $0x38] sm:$0x3]
        %v2031 = vld [vmem:[#allocation2 + $0x40] sm:$0xff]
        %v2032 = vld [vmem:[#allocation2 + $0x48] sm:$0x3]
        %v2033 = vld [vmem:[#allocation2 + $0x50] sm:$0xff]
        %v2034 = vld [vmem:[#allocation2 + $0x58] sm:$0x3]
        %v2035 = vld [vmem:[#allocation2 + $0x60] sm:$0xff]
        %v2036 = vld [vmem:[#allocation2 + $0x68] sm:$0x3]
        %v2037 = vld [vmem:[#allocation2 + $0x70] sm:$0xff]
        %v2038 = vld [vmem:[#allocation2 + $0x78] sm:$0x3]
        %v2039 = vld [vmem:[#allocation2 + $0x80] sm:$0xff]
        %v2040 = vld [vmem:[#allocation2 + $0x88] sm:$0x3]
        %v2041 = vld [vmem:[#allocation2 + $0x90] sm:$0xff]
        %v2042 = vld [vmem:[#allocation2 + $0x98] sm:$0x3]
        %v2043 = vld [vmem:[#allocation6] sm:$0xff]
        %v2044 = vld [vmem:[#allocation6 + $0x8] sm:$0xff]
        %v2045 = vld [vmem:[#allocation6 + $0x10] sm:$0xff]
        %v2046 = vld [vmem:[#allocation6 + $0x18] sm:$0xff]
        %v2063 = vrot.slane %v2023, 1
        %v2064 = vrot.slane %v2024, 1
        %v2065 = vsel %vm580, %v2063, %v2064
        %v2066 = vrot.slane %v2025, 1
        %v2067 = vrot.slane %v2026, 1
        %v2068 = vsel %vm580, %v2066, %v2067
        %v2069 = vrot.slane %v2027, 1
        %v2070 = vrot.slane %v2028, 1
        %v2071 = vsel %vm580, %v2069, %v2070
        %v2072 = vrot.slane %v2029, 1
        %v2073 = vrot.slane %v2030, 1
        %v2074 = vsel %vm580, %v2072, %v2073
        %v2075 = vrot.slane %v2031, 1
        %v2076 = vrot.slane %v2032, 1
        %v2077 = vsel %vm580, %v2075, %v2076
        %v2078 = vrot.slane %v2033, 1
        %v2079 = vrot.slane %v2034, 1
        %v2080 = vsel %vm580, %v2078, %v2079
        %v2081 = vrot.slane %v2035, 1
        %v2082 = vrot.slane %v2036, 1
        %v2083 = vsel %vm580, %v2081, %v2082
        %v2084 = vrot.slane %v2037, 1
        %v2085 = vrot.slane %v2038, 1
        %v2086 = vsel %vm580, %v2084, %v2085
        %s2087 = scalar_lea.vmem [#allocation6], 32
        %v2088 = vld [vmem:[%s2087] sm:$0xff]
        %v2089 = vld [vmem:[%s2087 + $0x8] sm:$0xff]
        %v2090 = vld [vmem:[%s2087 + $0x10] sm:$0xff]
        %v2091 = vld [vmem:[%s2087 + $0x18] sm:$0xff]
        %v2092 = vsel %vm501, %v2065, 0
        %v2094 = vsel %vm501, %v2068, 0
        %v2096 = vsel %vm501, %v2071, 0
        %v2098 = vsel %vm501, %v2074, 0
        %v2100 = vsel %vm501, %v2077, 0
        %v2102 = vsel %vm501, %v2080, 0
        %v2104 = vsel %vm501, %v2083, 0
        %v2106 = vsel %vm501, %v2086, 0
        %2108 = vmatprep.subr.mxu0 0.0
        %2109 = vmatpush1.msra.mxu0 0.0
        %2110 = vmatprep.subr.mxu0 0.0
        %2111 = vmatpush1.msra.mxu0 0.0
        %2112 = vmatprep.subr.mxu0 0.0
        %2113 = vmatpush1.msra.mxu0 0.0
        %2114 = vmatprep.subr.mxu0 0.0
        %2115 = vmatpush1.msra.mxu0 0.0
        %2116 = vmatprep.subr.mxu0 0.0
        %2117 = vmatpush1.msra.mxu0 0.0
        %2118 = vmatprep.subr.mxu0 0.0
        %2119 = vmatpush1.msra.mxu0 0.0
        %2120 = vmatprep.subr.mxu0 0.0
        %2121 = vmatpush1.msra.mxu0 0.0
        %2122 = vmatprep.subr.mxu0 0.0
        %2123 = vmatpush1.msra.mxu0 0.0
        %2124 = vmatprep.subr.mxu0 0.0
        %2125 = vmatpush1.msra.mxu0 0.0
        %2126 = vmatprep.subr.mxu0 0.0
        %2127 = vmatpush1.msra.mxu0 0.0
        %2128 = vmatprep.subr.mxu0 0.0
        %2129 = vmatpush1.msra.mxu0 0.0
        %2130 = vmatprep.subr.mxu0 0.0
        %2131 = vmatpush1.msra.mxu0 0.0
        %2132 = vmatprep.subr.mxu0 0.0
        %2133 = vmatpush1.msra.mxu0 %v2091
        %2134 = vmatprep.subr.mxu0 0.0
        %2135 = vmatpush1.msra.mxu0 %v2090
        %2136 = vmatprep.subr.mxu0 0.0
        %2137 = vmatpush1.msra.mxu0 %v2089
        %2138 = vmatprep.subr.mxu0 0.0
        %2139 = vmatpush1.msra.mxu0 %v2088
        %2140 = vmatprep.subr.mxu0 0.0
        %2141 = vmatpush2.msra.mxu0 0.0
        %2142 = vmatprep.subr.mxu0 0.0
        %2143 = vmatpush2.msra.mxu0 0.0
        %2144 = vmatprep.subr.mxu0 0.0
        %2145 = vmatpush2.msra.mxu0 0.0
        %2146 = vmatprep.subr.mxu0 0.0
        %2147 = vmatpush2.msra.mxu0 0.0
        %2148 = vmatprep.subr.mxu0 0.0
        %2149 = vmatpush2.msra.mxu0 0.0
        %2150 = vmatprep.subr.mxu0 0.0
        %2151 = vmatpush2.msra.mxu0 0.0
        %2152 = vmatprep.subr.mxu0 0.0
        %2153 = vmatpush2.msra.mxu0 0.0
        %2154 = vmatprep.subr.mxu0 0.0
        %2155 = vmatpush2.msra.mxu0 0.0
        %2156 = vmatprep.subr.mxu0 0.0
        %2157 = vmatpush2.msra.mxu0 0.0
        %2158 = vmatprep.subr.mxu0 0.0
        %2159 = vmatpush2.msra.mxu0 0.0
        %2160 = vmatprep.subr.mxu0 0.0
        %2161 = vmatpush2.msra.mxu0 0.0
        %2162 = vmatprep.subr.mxu0 0.0
        %2163 = vmatpush2.msra.mxu0 0.0
        %2164 = vmatprep.subr.mxu0 0.0
        %2165 = vmatpush2.msra.mxu0 0.0
        %2166 = vmatprep.subr.mxu0 0.0
        %2167 = vmatpush2.msra.mxu0 0.0
        %2168 = vmatprep.subr.mxu0 0.0
        %2169 = vmatpush2.msra.mxu0 0.0
        %2170 = vmatprep.subr.mxu0 0.0
        %2171 = vmatpush2.msra.mxu0 0.0
        %2172 = vmatprep.mubr.f32.mxu0 0.0
        %2173 = vmatmul.mubr.f32.gmra.mxu0 %v2092
        %v2174 = vpop.f32.mrf.mxu0
        %v2175 = vadd.f32 0.0, %v2174
        %v2176 = vpop.f32.mrf.mxu0
        %2177 = vmatprep.mubr.f32.mxu0 0.0
        %2178 = vmatmul.mubr.f32.gmra.mxu0 %v2094
        %v2179 = vpop.f32.mrf.mxu0
        %v2180 = vadd.f32 0.0, %v2179
        %v2181 = vpop.f32.mrf.mxu0
        %2182 = vmatprep.mubr.f32.mxu0 0.0
        %2183 = vmatmul.mubr.f32.gmra.mxu0 %v2096
        %v2184 = vpop.f32.mrf.mxu0
        %v2185 = vadd.f32 0.0, %v2184
        %v2186 = vpop.f32.mrf.mxu0
        %2187 = vmatprep.mubr.f32.mxu0 0.0
        %2188 = vmatmul.mubr.f32.gmra.mxu0 %v2098
        %v2189 = vpop.f32.mrf.mxu0
        %v2190 = vadd.f32 0.0, %v2189
        %v2191 = vpop.f32.mrf.mxu0
        %2192 = vmatprep.mubr.f32.mxu0 0.0
        %2193 = vmatmul.mubr.f32.gmra.mxu0 %v2100
        %v2194 = vpop.f32.mrf.mxu0
        %v2195 = vadd.f32 0.0, %v2194
        %v2196 = vpop.f32.mrf.mxu0
        %2197 = vmatprep.mubr.f32.mxu0 0.0
        %2198 = vmatmul.mubr.f32.gmra.mxu0 %v2102
        %v2199 = vpop.f32.mrf.mxu0
        %v2200 = vadd.f32 0.0, %v2199
        %v2201 = vpop.f32.mrf.mxu0
        %2202 = vmatprep.mubr.f32.mxu0 0.0
        %2203 = vmatmul.mubr.f32.gmra.mxu0 %v2104
        %v2204 = vpop.f32.mrf.mxu0
        %v2205 = vadd.f32 0.0, %v2204
        %v2206 = vpop.f32.mrf.mxu0
        %2207 = vmatprep.mubr.f32.mxu0 0.0
        %2208 = vmatmul.mubr.f32.gmra.mxu0 %v2106
        %v2209 = vpop.f32.mrf.mxu0
        %v2210 = vadd.f32 0.0, %v2209
        %v2211 = vpop.f32.mrf.mxu0
        %2212 = vdwg.mxu0
        %v2213 = vsel %vm501, %v2023, 0
        %v2215 = vsel %vm501, %v2025, 0
        %v2217 = vsel %vm501, %v2027, 0
        %v2219 = vsel %vm501, %v2029, 0
        %v2221 = vsel %vm501, %v2031, 0
        %v2223 = vsel %vm501, %v2033, 0
        %v2225 = vsel %vm501, %v2035, 0
        %v2227 = vsel %vm501, %v2037, 0
        %2229 = vmatprep.subr.mxu0 0.0
        %2230 = vmatpush1.msra.mxu0 0.0
        %2231 = vmatprep.subr.mxu0 0.0
        %2232 = vmatpush1.msra.mxu0 0.0
        %2233 = vmatprep.subr.mxu0 0.0
        %2234 = vmatpush1.msra.mxu0 0.0
        %2235 = vmatprep.subr.mxu0 0.0
        %2236 = vmatpush1.msra.mxu0 0.0
        %2237 = vmatprep.subr.mxu0 0.0
        %2238 = vmatpush1.msra.mxu0 0.0
        %2239 = vmatprep.subr.mxu0 0.0
        %2240 = vmatpush1.msra.mxu0 0.0
        %2241 = vmatprep.subr.mxu0 0.0
        %2242 = vmatpush1.msra.mxu0 0.0
        %2243 = vmatprep.subr.mxu0 0.0
        %2244 = vmatpush1.msra.mxu0 0.0
        %2245 = vmatprep.subr.mxu0 0.0
        %2246 = vmatpush1.msra.mxu0 0.0
        %2247 = vmatprep.subr.mxu0 0.0
        %2248 = vmatpush1.msra.mxu0 0.0
        %2249 = vmatprep.subr.mxu0 0.0
        %2250 = vmatpush1.msra.mxu0 0.0
        %2251 = vmatprep.subr.mxu0 0.0
        %2252 = vmatpush1.msra.mxu0 0.0
        %2253 = vmatprep.subr.mxu0 0.0
        %2254 = vmatpush1.msra.mxu0 %v2046
        %2255 = vmatprep.subr.mxu0 0.0
        %2256 = vmatpush1.msra.mxu0 %v2045
        %2257 = vmatprep.subr.mxu0 0.0
        %2258 = vmatpush1.msra.mxu0 %v2044
        %2259 = vmatprep.subr.mxu0 0.0
        %2260 = vmatpush1.msra.mxu0 %v2043
        %2261 = vmatprep.subr.mxu0 0.0
        %2262 = vmatpush2.msra.mxu0 0.0
        %2263 = vmatprep.subr.mxu0 0.0
        %2264 = vmatpush2.msra.mxu0 0.0
        %2265 = vmatprep.subr.mxu0 0.0
        %2266 = vmatpush2.msra.mxu0 0.0
        %2267 = vmatprep.subr.mxu0 0.0
        %2268 = vmatpush2.msra.mxu0 0.0
        %2269 = vmatprep.subr.mxu0 0.0
        %2270 = vmatpush2.msra.mxu0 0.0
        %2271 = vmatprep.subr.mxu0 0.0
        %2272 = vmatpush2.msra.mxu0 0.0
        %2273 = vmatprep.subr.mxu0 0.0
        %2274 = vmatpush2.msra.mxu0 0.0
        %2275 = vmatprep.subr.mxu0 0.0
        %2276 = vmatpush2.msra.mxu0 0.0
        %2277 = vmatprep.subr.mxu0 0.0
        %2278 = vmatpush2.msra.mxu0 0.0
        %2279 = vmatprep.subr.mxu0 0.0
        %2280 = vmatpush2.msra.mxu0 0.0
        %2281 = vmatprep.subr.mxu0 0.0
        %2282 = vmatpush2.msra.mxu0 0.0
        %2283 = vmatprep.subr.mxu0 0.0
        %2284 = vmatpush2.msra.mxu0 0.0
        %2285 = vmatprep.subr.mxu0 0.0
        %2286 = vmatpush2.msra.mxu0 0.0
        %2287 = vmatprep.subr.mxu0 0.0
        %2288 = vmatpush2.msra.mxu0 0.0
        %2289 = vmatprep.subr.mxu0 0.0
        %2290 = vmatpush2.msra.mxu0 0.0
        %2291 = vmatprep.subr.mxu0 0.0
        %2292 = vmatpush2.msra.mxu0 0.0
        %2293 = vmatprep.mubr.f32.mxu0 0.0
        %2294 = vmatmul.mubr.f32.gmra.mxu0 %v2213
        %v2295 = vpop.f32.mrf.mxu0
        %v2296 = vadd.f32 %v2175, %v2295
        %v2297 = vpop.f32.mrf.mxu0
        %2298 = vmatprep.mubr.f32.mxu0 0.0
        %2299 = vmatmul.mubr.f32.gmra.mxu0 %v2215
        %v2300 = vpop.f32.mrf.mxu0
        %v2301 = vadd.f32 %v2180, %v2300
        %v2302 = vpop.f32.mrf.mxu0
        %2303 = vmatprep.mubr.f32.mxu0 0.0
        %2304 = vmatmul.mubr.f32.gmra.mxu0 %v2217
        %v2305 = vpop.f32.mrf.mxu0
        %v2306 = vadd.f32 %v2185, %v2305
        %v2307 = vpop.f32.mrf.mxu0
        %2308 = vmatprep.mubr.f32.mxu0 0.0
        %2309 = vmatmul.mubr.f32.gmra.mxu0 %v2219
        %v2310 = vpop.f32.mrf.mxu0
        %v2311 = vadd.f32 %v2190, %v2310
        %v2312 = vpop.f32.mrf.mxu0
        %2313 = vmatprep.mubr.f32.mxu0 0.0
        %2314 = vmatmul.mubr.f32.gmra.mxu0 %v2221
        %v2315 = vpop.f32.mrf.mxu0
        %v2316 = vadd.f32 %v2195, %v2315
        %v2317 = vpop.f32.mrf.mxu0
        %2318 = vmatprep.mubr.f32.mxu0 0.0
        %2319 = vmatmul.mubr.f32.gmra.mxu0 %v2223
        %v2320 = vpop.f32.mrf.mxu0
        %v2321 = vadd.f32 %v2200, %v2320
        %v2322 = vpop.f32.mrf.mxu0
        %2323 = vmatprep.mubr.f32.mxu0 0.0
        %2324 = vmatmul.mubr.f32.gmra.mxu0 %v2225
        %v2325 = vpop.f32.mrf.mxu0
        %v2326 = vadd.f32 %v2205, %v2325
        %v2327 = vpop.f32.mrf.mxu0
        %2328 = vmatprep.mubr.f32.mxu0 0.0
        %2329 = vmatmul.mubr.f32.gmra.mxu0 %v2227
        %v2330 = vpop.f32.mrf.mxu0
        %v2331 = vadd.f32 %v2210, %v2330
        %v2332 = vpop.f32.mrf.mxu0
        %2333 = vdwg.mxu0
        %v2334 = vrot.slane %v2023, 2
        %v2335 = vrot.slane %v2024, 2
        %v2336 = vsel %vm852, %v2334, %v2335
        %v2337 = vrot.slane %v2025, 2
        %v2338 = vrot.slane %v2026, 2
        %v2339 = vsel %vm852, %v2337, %v2338
        %v2340 = vrot.slane %v2027, 2
        %v2341 = vrot.slane %v2028, 2
        %v2342 = vsel %vm852, %v2340, %v2341
        %v2343 = vrot.slane %v2029, 2
        %v2344 = vrot.slane %v2030, 2
        %v2345 = vsel %vm852, %v2343, %v2344
        %v2346 = vrot.slane %v2031, 2
        %v2347 = vrot.slane %v2032, 2
        %v2348 = vsel %vm852, %v2346, %v2347
        %v2349 = vrot.slane %v2033, 2
        %v2350 = vrot.slane %v2034, 2
        %v2351 = vsel %vm852, %v2349, %v2350
        %v2352 = vrot.slane %v2035, 2
        %v2353 = vrot.slane %v2036, 2
        %v2354 = vsel %vm852, %v2352, %v2353
        %v2355 = vrot.slane %v2037, 2
        %v2356 = vrot.slane %v2038, 2
        %v2357 = vsel %vm852, %v2355, %v2356
        %s2358 = scalar_lea.vmem [#allocation6], 64
        %v2359 = vld [vmem:[%s2358] sm:$0xff]
        %v2360 = vld [vmem:[%s2358 + $0x8] sm:$0xff]
        %v2361 = vld [vmem:[%s2358 + $0x10] sm:$0xff]
        %v2362 = vld [vmem:[%s2358 + $0x18] sm:$0xff]
        %v2363 = vsel %vm501, %v2336, 0
        %v2365 = vsel %vm501, %v2339, 0
        %v2367 = vsel %vm501, %v2342, 0
        %v2369 = vsel %vm501, %v2345, 0
        %v2371 = vsel %vm501, %v2348, 0
        %v2373 = vsel %vm501, %v2351, 0
        %v2375 = vsel %vm501, %v2354, 0
        %v2377 = vsel %vm501, %v2357, 0
        %2379 = vmatprep.subr.mxu0 0.0
        %2380 = vmatpush1.msra.mxu0 0.0
        %2381 = vmatprep.subr.mxu0 0.0
        %2382 = vmatpush1.msra.mxu0 0.0
        %2383 = vmatprep.subr.mxu0 0.0
        %2384 = vmatpush1.msra.mxu0 0.0
        %2385 = vmatprep.subr.mxu0 0.0
        %2386 = vmatpush1.msra.mxu0 0.0
        %2387 = vmatprep.subr.mxu0 0.0
        %2388 = vmatpush1.msra.mxu0 0.0
        %2389 = vmatprep.subr.mxu0 0.0
        %2390 = vmatpush1.msra.mxu0 0.0
        %2391 = vmatprep.subr.mxu0 0.0
        %2392 = vmatpush1.msra.mxu0 0.0
        %2393 = vmatprep.subr.mxu0 0.0
        %2394 = vmatpush1.msra.mxu0 0.0
        %2395 = vmatprep.subr.mxu0 0.0
        %2396 = vmatpush1.msra.mxu0 0.0
        %2397 = vmatprep.subr.mxu0 0.0
        %2398 = vmatpush1.msra.mxu0 0.0
        %2399 = vmatprep.subr.mxu0 0.0
        %2400 = vmatpush1.msra.mxu0 0.0
        %2401 = vmatprep.subr.mxu0 0.0
        %2402 = vmatpush1.msra.mxu0 0.0
        %2403 = vmatprep.subr.mxu0 0.0
        %2404 = vmatpush1.msra.mxu0 %v2362
        %2405 = vmatprep.subr.mxu0 0.0
        %2406 = vmatpush1.msra.mxu0 %v2361
        %2407 = vmatprep.subr.mxu0 0.0
        %2408 = vmatpush1.msra.mxu0 %v2360
        %2409 = vmatprep.subr.mxu0 0.0
        %2410 = vmatpush1.msra.mxu0 %v2359
        %2411 = vmatprep.subr.mxu0 0.0
        %2412 = vmatpush2.msra.mxu0 0.0
        %2413 = vmatprep.subr.mxu0 0.0
        %2414 = vmatpush2.msra.mxu0 0.0
        %2415 = vmatprep.subr.mxu0 0.0
        %2416 = vmatpush2.msra.mxu0 0.0
        %2417 = vmatprep.subr.mxu0 0.0
        %2418 = vmatpush2.msra.mxu0 0.0
        %2419 = vmatprep.subr.mxu0 0.0
        %2420 = vmatpush2.msra.mxu0 0.0
        %2421 = vmatprep.subr.mxu0 0.0
        %2422 = vmatpush2.msra.mxu0 0.0
        %2423 = vmatprep.subr.mxu0 0.0
        %2424 = vmatpush2.msra.mxu0 0.0
        %2425 = vmatprep.subr.mxu0 0.0
        %2426 = vmatpush2.msra.mxu0 0.0
        %2427 = vmatprep.subr.mxu0 0.0
        %2428 = vmatpush2.msra.mxu0 0.0
        %2429 = vmatprep.subr.mxu0 0.0
        %2430 = vmatpush2.msra.mxu0 0.0
        %2431 = vmatprep.subr.mxu0 0.0
        %2432 = vmatpush2.msra.mxu0 0.0
        %2433 = vmatprep.subr.mxu0 0.0
        %2434 = vmatpush2.msra.mxu0 0.0
        %2435 = vmatprep.subr.mxu0 0.0
        %2436 = vmatpush2.msra.mxu0 0.0
        %2437 = vmatprep.subr.mxu0 0.0
        %2438 = vmatpush2.msra.mxu0 0.0
        %2439 = vmatprep.subr.mxu0 0.0
        %2440 = vmatpush2.msra.mxu0 0.0
        %2441 = vmatprep.subr.mxu0 0.0
        %2442 = vmatpush2.msra.mxu0 0.0
        %2443 = vmatprep.mubr.f32.mxu0 0.0
        %2444 = vmatmul.mubr.f32.gmra.mxu0 %v2363
        %v2445 = vpop.f32.mrf.mxu0
        %v2446 = vadd.f32 0.0, %v2445
        %v2447 = vpop.f32.mrf.mxu0
        %2448 = vmatprep.mubr.f32.mxu0 0.0
        %2449 = vmatmul.mubr.f32.gmra.mxu0 %v2365
        %v2450 = vpop.f32.mrf.mxu0
        %v2451 = vadd.f32 0.0, %v2450
        %v2452 = vpop.f32.mrf.mxu0
        %2453 = vmatprep.mubr.f32.mxu0 0.0
        %2454 = vmatmul.mubr.f32.gmra.mxu0 %v2367
        %v2455 = vpop.f32.mrf.mxu0
        %v2456 = vadd.f32 0.0, %v2455
        %v2457 = vpop.f32.mrf.mxu0
        %2458 = vmatprep.mubr.f32.mxu0 0.0
        %2459 = vmatmul.mubr.f32.gmra.mxu0 %v2369
        %v2460 = vpop.f32.mrf.mxu0
        %v2461 = vadd.f32 0.0, %v2460
        %v2462 = vpop.f32.mrf.mxu0
        %2463 = vmatprep.mubr.f32.mxu0 0.0
        %2464 = vmatmul.mubr.f32.gmra.mxu0 %v2371
        %v2465 = vpop.f32.mrf.mxu0
        %v2466 = vadd.f32 0.0, %v2465
        %v2467 = vpop.f32.mrf.mxu0
        %2468 = vmatprep.mubr.f32.mxu0 0.0
        %2469 = vmatmul.mubr.f32.gmra.mxu0 %v2373
        %v2470 = vpop.f32.mrf.mxu0
        %v2471 = vadd.f32 0.0, %v2470
        %v2472 = vpop.f32.mrf.mxu0
        %2473 = vmatprep.mubr.f32.mxu0 0.0
        %2474 = vmatmul.mubr.f32.gmra.mxu0 %v2375
        %v2475 = vpop.f32.mrf.mxu0
        %v2476 = vadd.f32 0.0, %v2475
        %v2477 = vpop.f32.mrf.mxu0
        %2478 = vmatprep.mubr.f32.mxu0 0.0
        %2479 = vmatmul.mubr.f32.gmra.mxu0 %v2377
        %v2480 = vpop.f32.mrf.mxu0
        %v2481 = vadd.f32 0.0, %v2480
        %v2482 = vpop.f32.mrf.mxu0
        %2483 = vdwg.mxu0
        %v2484 = vadd.f32 %v2296, %v2446
        %v2485 = vadd.f32 %v2301, %v2451
        %v2486 = vadd.f32 %v2306, %v2456
        %v2487 = vadd.f32 %v2311, %v2461
        %v2488 = vadd.f32 %v2316, %v2466
        %v2489 = vadd.f32 %v2321, %v2471
        %v2490 = vadd.f32 %v2326, %v2476
        %v2491 = vadd.f32 %v2331, %v2481
        %s2492 = scalar_lea.vmem [#allocation6], 96
        %v2493 = vld [vmem:[%s2492] sm:$0xff]
        %v2494 = vld [vmem:[%s2492 + $0x8] sm:$0xff]
        %v2495 = vld [vmem:[%s2492 + $0x10] sm:$0xff]
        %v2496 = vld [vmem:[%s2492 + $0x18] sm:$0xff]
        %v2498 = vsel %vm501, %v2039, 0
        %2500 = vmatprep.subr.mxu0 0.0
        %2501 = vmatpush1.msra.mxu0 0.0
        %2502 = vmatprep.subr.mxu0 0.0
        %2503 = vmatpush1.msra.mxu0 0.0
        %2504 = vmatprep.subr.mxu0 0.0
        %2505 = vmatpush1.msra.mxu0 0.0
        %2506 = vmatprep.subr.mxu0 0.0
        %2507 = vmatpush1.msra.mxu0 0.0
        %2508 = vmatprep.subr.mxu0 0.0
        %2509 = vmatpush1.msra.mxu0 0.0
        %2510 = vmatprep.subr.mxu0 0.0
        %2511 = vmatpush1.msra.mxu0 0.0
        %2512 = vmatprep.subr.mxu0 0.0
        %2513 = vmatpush1.msra.mxu0 0.0
        %2514 = vmatprep.subr.mxu0 0.0
        %2515 = vmatpush1.msra.mxu0 0.0
        %2516 = vmatprep.subr.mxu0 0.0
        %2517 = vmatpush1.msra.mxu0 0.0
        %2518 = vmatprep.subr.mxu0 0.0
        %2519 = vmatpush1.msra.mxu0 0.0
        %2520 = vmatprep.subr.mxu0 0.0
        %2521 = vmatpush1.msra.mxu0 0.0
        %2522 = vmatprep.subr.mxu0 0.0
        %2523 = vmatpush1.msra.mxu0 0.0
        %2524 = vmatprep.subr.mxu0 0.0
        %2525 = vmatpush1.msra.mxu0 %v2496
        %2526 = vmatprep.subr.mxu0 0.0
        %2527 = vmatpush1.msra.mxu0 %v2495
        %2528 = vmatprep.subr.mxu0 0.0
        %2529 = vmatpush1.msra.mxu0 %v2494
        %2530 = vmatprep.subr.mxu0 0.0
        %2531 = vmatpush1.msra.mxu0 %v2493
        %2532 = vmatprep.subr.mxu0 0.0
        %2533 = vmatpush2.msra.mxu0 0.0
        %2534 = vmatprep.subr.mxu0 0.0
        %2535 = vmatpush2.msra.mxu0 0.0
        %2536 = vmatprep.subr.mxu0 0.0
        %2537 = vmatpush2.msra.mxu0 0.0
        %2538 = vmatprep.subr.mxu0 0.0
        %2539 = vmatpush2.msra.mxu0 0.0
        %2540 = vmatprep.subr.mxu0 0.0
        %2541 = vmatpush2.msra.mxu0 0.0
        %2542 = vmatprep.subr.mxu0 0.0
        %2543 = vmatpush2.msra.mxu0 0.0
        %2544 = vmatprep.subr.mxu0 0.0
        %2545 = vmatpush2.msra.mxu0 0.0
        %2546 = vmatprep.subr.mxu0 0.0
        %2547 = vmatpush2.msra.mxu0 0.0
        %2548 = vmatprep.subr.mxu0 0.0
        %2549 = vmatpush2.msra.mxu0 0.0
        %2550 = vmatprep.subr.mxu0 0.0
        %2551 = vmatpush2.msra.mxu0 0.0
        %2552 = vmatprep.subr.mxu0 0.0
        %2553 = vmatpush2.msra.mxu0 0.0
        %2554 = vmatprep.subr.mxu0 0.0
        %2555 = vmatpush2.msra.mxu0 0.0
        %2556 = vmatprep.subr.mxu0 0.0
        %2557 = vmatpush2.msra.mxu0 0.0
        %2558 = vmatprep.subr.mxu0 0.0
        %2559 = vmatpush2.msra.mxu0 0.0
        %2560 = vmatprep.subr.mxu0 0.0
        %2561 = vmatpush2.msra.mxu0 0.0
        %2562 = vmatprep.subr.mxu0 0.0
        %2563 = vmatpush2.msra.mxu0 0.0
        %2564 = vmatprep.mubr.f32.mxu0 0.0
        %2565 = vmatmul.mubr.f32.gmra.mxu0 %v2215
        %v2566 = vpop.f32.mrf.mxu0
        %v2567 = vadd.f32 0.0, %v2566
        %v2568 = vpop.f32.mrf.mxu0
        %2569 = vmatprep.mubr.f32.mxu0 0.0
        %2570 = vmatmul.mubr.f32.gmra.mxu0 %v2217
        %v2571 = vpop.f32.mrf.mxu0
        %v2572 = vadd.f32 0.0, %v2571
        %v2573 = vpop.f32.mrf.mxu0
        %2574 = vmatprep.mubr.f32.mxu0 0.0
        %2575 = vmatmul.mubr.f32.gmra.mxu0 %v2219
        %v2576 = vpop.f32.mrf.mxu0
        %v2577 = vadd.f32 0.0, %v2576
        %v2578 = vpop.f32.mrf.mxu0
        %2579 = vmatprep.mubr.f32.mxu0 0.0
        %2580 = vmatmul.mubr.f32.gmra.mxu0 %v2221
        %v2581 = vpop.f32.mrf.mxu0
        %v2582 = vadd.f32 0.0, %v2581
        %v2583 = vpop.f32.mrf.mxu0
        %2584 = vmatprep.mubr.f32.mxu0 0.0
        %2585 = vmatmul.mubr.f32.gmra.mxu0 %v2223
        %v2586 = vpop.f32.mrf.mxu0
        %v2587 = vadd.f32 0.0, %v2586
        %v2588 = vpop.f32.mrf.mxu0
        %2589 = vmatprep.mubr.f32.mxu0 0.0
        %2590 = vmatmul.mubr.f32.gmra.mxu0 %v2225
        %v2591 = vpop.f32.mrf.mxu0
        %v2592 = vadd.f32 0.0, %v2591
        %v2593 = vpop.f32.mrf.mxu0
        %2594 = vmatprep.mubr.f32.mxu0 0.0
        %2595 = vmatmul.mubr.f32.gmra.mxu0 %v2227
        %v2596 = vpop.f32.mrf.mxu0
        %v2597 = vadd.f32 0.0, %v2596
        %v2598 = vpop.f32.mrf.mxu0
        %2599 = vmatprep.mubr.f32.mxu0 0.0
        %2600 = vmatmul.mubr.f32.gmra.mxu0 %v2498
        %v2601 = vpop.f32.mrf.mxu0
        %v2602 = vadd.f32 0.0, %v2601
        %v2603 = vpop.f32.mrf.mxu0
        %2604 = vdwg.mxu0
        %v2605 = vadd.f32 %v2484, %v2567
        %v2606 = vadd.f32 %v2485, %v2572
        %v2607 = vadd.f32 %v2486, %v2577
        %v2608 = vadd.f32 %v2487, %v2582
        %v2609 = vadd.f32 %v2488, %v2587
        %v2610 = vadd.f32 %v2489, %v2592
        %v2611 = vadd.f32 %v2490, %v2597
        %v2612 = vadd.f32 %v2491, %v2602
        %v2614 = vrot.slane %v2039, 1
        %v2615 = vrot.slane %v2040, 1
        %v2616 = vsel %vm580, %v2614, %v2615
        %s2617 = scalar_lea.vmem [#allocation6], 128
        %v2618 = vld [vmem:[%s2617] sm:$0xff]
        %v2619 = vld [vmem:[%s2617 + $0x8] sm:$0xff]
        %v2620 = vld [vmem:[%s2617 + $0x10] sm:$0xff]
        %v2621 = vld [vmem:[%s2617 + $0x18] sm:$0xff]
        %v2622 = vsel %vm501, %v2616, 0
        %2624 = vmatprep.subr.mxu0 0.0
        %2625 = vmatpush1.msra.mxu0 0.0
        %2626 = vmatprep.subr.mxu0 0.0
        %2627 = vmatpush1.msra.mxu0 0.0
        %2628 = vmatprep.subr.mxu0 0.0
        %2629 = vmatpush1.msra.mxu0 0.0
        %2630 = vmatprep.subr.mxu0 0.0
        %2631 = vmatpush1.msra.mxu0 0.0
        %2632 = vmatprep.subr.mxu0 0.0
        %2633 = vmatpush1.msra.mxu0 0.0
        %2634 = vmatprep.subr.mxu0 0.0
        %2635 = vmatpush1.msra.mxu0 0.0
        %2636 = vmatprep.subr.mxu0 0.0
        %2637 = vmatpush1.msra.mxu0 0.0
        %2638 = vmatprep.subr.mxu0 0.0
        %2639 = vmatpush1.msra.mxu0 0.0
        %2640 = vmatprep.subr.mxu0 0.0
        %2641 = vmatpush1.msra.mxu0 0.0
        %2642 = vmatprep.subr.mxu0 0.0
        %2643 = vmatpush1.msra.mxu0 0.0
        %2644 = vmatprep.subr.mxu0 0.0
        %2645 = vmatpush1.msra.mxu0 0.0
        %2646 = vmatprep.subr.mxu0 0.0
        %2647 = vmatpush1.msra.mxu0 0.0
        %2648 = vmatprep.subr.mxu0 0.0
        %2649 = vmatpush1.msra.mxu0 %v2621
        %2650 = vmatprep.subr.mxu0 0.0
        %2651 = vmatpush1.msra.mxu0 %v2620
        %2652 = vmatprep.subr.mxu0 0.0
        %2653 = vmatpush1.msra.mxu0 %v2619
        %2654 = vmatprep.subr.mxu0 0.0
        %2655 = vmatpush1.msra.mxu0 %v2618
        %2656 = vmatprep.subr.mxu0 0.0
        %2657 = vmatpush2.msra.mxu0 0.0
        %2658 = vmatprep.subr.mxu0 0.0
        %2659 = vmatpush2.msra.mxu0 0.0
        %2660 = vmatprep.subr.mxu0 0.0
        %2661 = vmatpush2.msra.mxu0 0.0
        %2662 = vmatprep.subr.mxu0 0.0
        %2663 = vmatpush2.msra.mxu0 0.0
        %2664 = vmatprep.subr.mxu0 0.0
        %2665 = vmatpush2.msra.mxu0 0.0
        %2666 = vmatprep.subr.mxu0 0.0
        %2667 = vmatpush2.msra.mxu0 0.0
        %2668 = vmatprep.subr.mxu0 0.0
        %2669 = vmatpush2.msra.mxu0 0.0
        %2670 = vmatprep.subr.mxu0 0.0
        %2671 = vmatpush2.msra.mxu0 0.0
        %2672 = vmatprep.subr.mxu0 0.0
        %2673 = vmatpush2.msra.mxu0 0.0
        %2674 = vmatprep.subr.mxu0 0.0
        %2675 = vmatpush2.msra.mxu0 0.0
        %2676 = vmatprep.subr.mxu0 0.0
        %2677 = vmatpush2.msra.mxu0 0.0
        %2678 = vmatprep.subr.mxu0 0.0
        %2679 = vmatpush2.msra.mxu0 0.0
        %2680 = vmatprep.subr.mxu0 0.0
        %2681 = vmatpush2.msra.mxu0 0.0
        %2682 = vmatprep.subr.mxu0 0.0
        %2683 = vmatpush2.msra.mxu0 0.0
        %2684 = vmatprep.subr.mxu0 0.0
        %2685 = vmatpush2.msra.mxu0 0.0
        %2686 = vmatprep.subr.mxu0 0.0
        %2687 = vmatpush2.msra.mxu0 0.0
        %2688 = vmatprep.mubr.f32.mxu0 0.0
        %2689 = vmatmul.mubr.f32.gmra.mxu0 %v2094
        %v2690 = vpop.f32.mrf.mxu0
        %v2691 = vadd.f32 0.0, %v2690
        %v2692 = vpop.f32.mrf.mxu0
        %2693 = vmatprep.mubr.f32.mxu0 0.0
        %2694 = vmatmul.mubr.f32.gmra.mxu0 %v2096
        %v2695 = vpop.f32.mrf.mxu0
        %v2696 = vadd.f32 0.0, %v2695
        %v2697 = vpop.f32.mrf.mxu0
        %2698 = vmatprep.mubr.f32.mxu0 0.0
        %2699 = vmatmul.mubr.f32.gmra.mxu0 %v2098
        %v2700 = vpop.f32.mrf.mxu0
        %v2701 = vadd.f32 0.0, %v2700
        %v2702 = vpop.f32.mrf.mxu0
        %2703 = vmatprep.mubr.f32.mxu0 0.0
        %2704 = vmatmul.mubr.f32.gmra.mxu0 %v2100
        %v2705 = vpop.f32.mrf.mxu0
        %v2706 = vadd.f32 0.0, %v2705
        %v2707 = vpop.f32.mrf.mxu0
        %2708 = vmatprep.mubr.f32.mxu0 0.0
        %2709 = vmatmul.mubr.f32.gmra.mxu0 %v2102
        %v2710 = vpop.f32.mrf.mxu0
        %v2711 = vadd.f32 0.0, %v2710
        %v2712 = vpop.f32.mrf.mxu0
        %2713 = vmatprep.mubr.f32.mxu0 0.0
        %2714 = vmatmul.mubr.f32.gmra.mxu0 %v2104
        %v2715 = vpop.f32.mrf.mxu0
        %v2716 = vadd.f32 0.0, %v2715
        %v2717 = vpop.f32.mrf.mxu0
        %2718 = vmatprep.mubr.f32.mxu0 0.0
        %2719 = vmatmul.mubr.f32.gmra.mxu0 %v2106
        %v2720 = vpop.f32.mrf.mxu0
        %v2721 = vadd.f32 0.0, %v2720
        %v2722 = vpop.f32.mrf.mxu0
        %2723 = vmatprep.mubr.f32.mxu0 0.0
        %2724 = vmatmul.mubr.f32.gmra.mxu0 %v2622
        %v2725 = vpop.f32.mrf.mxu0
        %v2726 = vadd.f32 0.0, %v2725
        %v2727 = vpop.f32.mrf.mxu0
        %2728 = vdwg.mxu0
        %v2729 = vadd.f32 %v2605, %v2691
        %v2730 = vadd.f32 %v2606, %v2696
        %v2731 = vadd.f32 %v2607, %v2701
        %v2732 = vadd.f32 %v2608, %v2706
        %v2733 = vadd.f32 %v2609, %v2711
        %v2734 = vadd.f32 %v2610, %v2716
        %v2735 = vadd.f32 %v2611, %v2721
        %v2736 = vadd.f32 %v2612, %v2726
        %v2737 = vrot.slane %v2039, 2
        %v2738 = vrot.slane %v2040, 2
        %v2739 = vsel %vm852, %v2737, %v2738
        %s2740 = scalar_lea.vmem [#allocation6], 160
        %v2741 = vld [vmem:[%s2740] sm:$0xff]
        %v2742 = vld [vmem:[%s2740 + $0x8] sm:$0xff]
        %v2743 = vld [vmem:[%s2740 + $0x10] sm:$0xff]
        %v2744 = vld [vmem:[%s2740 + $0x18] sm:$0xff]
        %v2745 = vsel %vm501, %v2739, 0
        %2747 = vmatprep.subr.mxu0 0.0
        %2748 = vmatpush1.msra.mxu0 0.0
        %2749 = vmatprep.subr.mxu0 0.0
        %2750 = vmatpush1.msra.mxu0 0.0
        %2751 = vmatprep.subr.mxu0 0.0
        %2752 = vmatpush1.msra.mxu0 0.0
        %2753 = vmatprep.subr.mxu0 0.0
        %2754 = vmatpush1.msra.mxu0 0.0
        %2755 = vmatprep.subr.mxu0 0.0
        %2756 = vmatpush1.msra.mxu0 0.0
        %2757 = vmatprep.subr.mxu0 0.0
        %2758 = vmatpush1.msra.mxu0 0.0
        %2759 = vmatprep.subr.mxu0 0.0
        %2760 = vmatpush1.msra.mxu0 0.0
        %2761 = vmatprep.subr.mxu0 0.0
        %2762 = vmatpush1.msra.mxu0 0.0
        %2763 = vmatprep.subr.mxu0 0.0
        %2764 = vmatpush1.msra.mxu0 0.0
        %2765 = vmatprep.subr.mxu0 0.0
        %2766 = vmatpush1.msra.mxu0 0.0
        %2767 = vmatprep.subr.mxu0 0.0
        %2768 = vmatpush1.msra.mxu0 0.0
        %2769 = vmatprep.subr.mxu0 0.0
        %2770 = vmatpush1.msra.mxu0 0.0
        %2771 = vmatprep.subr.mxu0 0.0
        %2772 = vmatpush1.msra.mxu0 %v2744
        %2773 = vmatprep.subr.mxu0 0.0
        %2774 = vmatpush1.msra.mxu0 %v2743
        %2775 = vmatprep.subr.mxu0 0.0
        %2776 = vmatpush1.msra.mxu0 %v2742
        %2777 = vmatprep.subr.mxu0 0.0
        %2778 = vmatpush1.msra.mxu0 %v2741
        %2779 = vmatprep.subr.mxu0 0.0
        %2780 = vmatpush2.msra.mxu0 0.0
        %2781 = vmatprep.subr.mxu0 0.0
        %2782 = vmatpush2.msra.mxu0 0.0
        %2783 = vmatprep.subr.mxu0 0.0
        %2784 = vmatpush2.msra.mxu0 0.0
        %2785 = vmatprep.subr.mxu0 0.0
        %2786 = vmatpush2.msra.mxu0 0.0
        %2787 = vmatprep.subr.mxu0 0.0
        %2788 = vmatpush2.msra.mxu0 0.0
        %2789 = vmatprep.subr.mxu0 0.0
        %2790 = vmatpush2.msra.mxu0 0.0
        %2791 = vmatprep.subr.mxu0 0.0
        %2792 = vmatpush2.msra.mxu0 0.0
        %2793 = vmatprep.subr.mxu0 0.0
        %2794 = vmatpush2.msra.mxu0 0.0
        %2795 = vmatprep.subr.mxu0 0.0
        %2796 = vmatpush2.msra.mxu0 0.0
        %2797 = vmatprep.subr.mxu0 0.0
        %2798 = vmatpush2.msra.mxu0 0.0
        %2799 = vmatprep.subr.mxu0 0.0
        %2800 = vmatpush2.msra.mxu0 0.0
        %2801 = vmatprep.subr.mxu0 0.0
        %2802 = vmatpush2.msra.mxu0 0.0
        %2803 = vmatprep.subr.mxu0 0.0
        %2804 = vmatpush2.msra.mxu0 0.0
        %2805 = vmatprep.subr.mxu0 0.0
        %2806 = vmatpush2.msra.mxu0 0.0
        %2807 = vmatprep.subr.mxu0 0.0
        %2808 = vmatpush2.msra.mxu0 0.0
        %2809 = vmatprep.subr.mxu0 0.0
        %2810 = vmatpush2.msra.mxu0 0.0
        %2811 = vmatprep.mubr.f32.mxu0 0.0
        %2812 = vmatmul.mubr.f32.gmra.mxu0 %v2365
        %v2813 = vpop.f32.mrf.mxu0
        %v2814 = vadd.f32 0.0, %v2813
        %v2815 = vpop.f32.mrf.mxu0
        %2816 = vmatprep.mubr.f32.mxu0 0.0
        %2817 = vmatmul.mubr.f32.gmra.mxu0 %v2367
        %v2818 = vpop.f32.mrf.mxu0
        %v2819 = vadd.f32 0.0, %v2818
        %v2820 = vpop.f32.mrf.mxu0
        %2821 = vmatprep.mubr.f32.mxu0 0.0
        %2822 = vmatmul.mubr.f32.gmra.mxu0 %v2369
        %v2823 = vpop.f32.mrf.mxu0
        %v2824 = vadd.f32 0.0, %v2823
        %v2825 = vpop.f32.mrf.mxu0
        %2826 = vmatprep.mubr.f32.mxu0 0.0
        %2827 = vmatmul.mubr.f32.gmra.mxu0 %v2371
        %v2828 = vpop.f32.mrf.mxu0
        %v2829 = vadd.f32 0.0, %v2828
        %v2830 = vpop.f32.mrf.mxu0
        %2831 = vmatprep.mubr.f32.mxu0 0.0
        %2832 = vmatmul.mubr.f32.gmra.mxu0 %v2373
        %v2833 = vpop.f32.mrf.mxu0
        %v2834 = vadd.f32 0.0, %v2833
        %v2835 = vpop.f32.mrf.mxu0
        %2836 = vmatprep.mubr.f32.mxu0 0.0
        %2837 = vmatmul.mubr.f32.gmra.mxu0 %v2375
        %v2838 = vpop.f32.mrf.mxu0
        %v2839 = vadd.f32 0.0, %v2838
        %v2840 = vpop.f32.mrf.mxu0
        %2841 = vmatprep.mubr.f32.mxu0 0.0
        %2842 = vmatmul.mubr.f32.gmra.mxu0 %v2377
        %v2843 = vpop.f32.mrf.mxu0
        %v2844 = vadd.f32 0.0, %v2843
        %v2845 = vpop.f32.mrf.mxu0
        %2846 = vmatprep.mubr.f32.mxu0 0.0
        %2847 = vmatmul.mubr.f32.gmra.mxu0 %v2745
        %v2848 = vpop.f32.mrf.mxu0
        %v2849 = vadd.f32 0.0, %v2848
        %v2850 = vpop.f32.mrf.mxu0
        %2851 = vdwg.mxu0
        %v2852 = vadd.f32 %v2729, %v2814
        %v2853 = vadd.f32 %v2730, %v2819
        %v2854 = vadd.f32 %v2731, %v2824
        %v2855 = vadd.f32 %v2732, %v2829
        %v2856 = vadd.f32 %v2733, %v2834
        %v2857 = vadd.f32 %v2734, %v2839
        %v2858 = vadd.f32 %v2735, %v2844
        %v2859 = vadd.f32 %v2736, %v2849
        %s2860 = scalar_lea.vmem [#allocation6], 192
        %v2861 = vld [vmem:[%s2860] sm:$0xff]
        %v2862 = vld [vmem:[%s2860 + $0x8] sm:$0xff]
        %v2863 = vld [vmem:[%s2860 + $0x10] sm:$0xff]
        %v2864 = vld [vmem:[%s2860 + $0x18] sm:$0xff]
        %v2866 = vsel %vm501, %v2041, 0
        %2868 = vmatprep.subr.mxu0 0.0
        %2869 = vmatpush1.msra.mxu0 0.0
        %2870 = vmatprep.subr.mxu0 0.0
        %2871 = vmatpush1.msra.mxu0 0.0
        %2872 = vmatprep.subr.mxu0 0.0
        %2873 = vmatpush1.msra.mxu0 0.0
        %2874 = vmatprep.subr.mxu0 0.0
        %2875 = vmatpush1.msra.mxu0 0.0
        %2876 = vmatprep.subr.mxu0 0.0
        %2877 = vmatpush1.msra.mxu0 0.0
        %2878 = vmatprep.subr.mxu0 0.0
        %2879 = vmatpush1.msra.mxu0 0.0
        %2880 = vmatprep.subr.mxu0 0.0
        %2881 = vmatpush1.msra.mxu0 0.0
        %2882 = vmatprep.subr.mxu0 0.0
        %2883 = vmatpush1.msra.mxu0 0.0
        %2884 = vmatprep.subr.mxu0 0.0
        %2885 = vmatpush1.msra.mxu0 0.0
        %2886 = vmatprep.subr.mxu0 0.0
        %2887 = vmatpush1.msra.mxu0 0.0
        %2888 = vmatprep.subr.mxu0 0.0
        %2889 = vmatpush1.msra.mxu0 0.0
        %2890 = vmatprep.subr.mxu0 0.0
        %2891 = vmatpush1.msra.mxu0 0.0
        %2892 = vmatprep.subr.mxu0 0.0
        %2893 = vmatpush1.msra.mxu0 %v2864
        %2894 = vmatprep.subr.mxu0 0.0
        %2895 = vmatpush1.msra.mxu0 %v2863
        %2896 = vmatprep.subr.mxu0 0.0
        %2897 = vmatpush1.msra.mxu0 %v2862
        %2898 = vmatprep.subr.mxu0 0.0
        %2899 = vmatpush1.msra.mxu0 %v2861
        %2900 = vmatprep.subr.mxu0 0.0
        %2901 = vmatpush2.msra.mxu0 0.0
        %2902 = vmatprep.subr.mxu0 0.0
        %2903 = vmatpush2.msra.mxu0 0.0
        %2904 = vmatprep.subr.mxu0 0.0
        %2905 = vmatpush2.msra.mxu0 0.0
        %2906 = vmatprep.subr.mxu0 0.0
        %2907 = vmatpush2.msra.mxu0 0.0
        %2908 = vmatprep.subr.mxu0 0.0
        %2909 = vmatpush2.msra.mxu0 0.0
        %2910 = vmatprep.subr.mxu0 0.0
        %2911 = vmatpush2.msra.mxu0 0.0
        %2912 = vmatprep.subr.mxu0 0.0
        %2913 = vmatpush2.msra.mxu0 0.0
        %2914 = vmatprep.subr.mxu0 0.0
        %2915 = vmatpush2.msra.mxu0 0.0
        %2916 = vmatprep.subr.mxu0 0.0
        %2917 = vmatpush2.msra.mxu0 0.0
        %2918 = vmatprep.subr.mxu0 0.0
        %2919 = vmatpush2.msra.mxu0 0.0
        %2920 = vmatprep.subr.mxu0 0.0
        %2921 = vmatpush2.msra.mxu0 0.0
        %2922 = vmatprep.subr.mxu0 0.0
        %2923 = vmatpush2.msra.mxu0 0.0
        %2924 = vmatprep.subr.mxu0 0.0
        %2925 = vmatpush2.msra.mxu0 0.0
        %2926 = vmatprep.subr.mxu0 0.0
        %2927 = vmatpush2.msra.mxu0 0.0
        %2928 = vmatprep.subr.mxu0 0.0
        %2929 = vmatpush2.msra.mxu0 0.0
        %2930 = vmatprep.subr.mxu0 0.0
        %2931 = vmatpush2.msra.mxu0 0.0
        %2932 = vmatprep.mubr.f32.mxu0 0.0
        %2933 = vmatmul.mubr.f32.gmra.mxu0 %v2217
        %v2934 = vpop.f32.mrf.mxu0
        %v2935 = vadd.f32 0.0, %v2934
        %v2936 = vpop.f32.mrf.mxu0
        %2937 = vmatprep.mubr.f32.mxu0 0.0
        %2938 = vmatmul.mubr.f32.gmra.mxu0 %v2219
        %v2939 = vpop.f32.mrf.mxu0
        %v2940 = vadd.f32 0.0, %v2939
        %v2941 = vpop.f32.mrf.mxu0
        %2942 = vmatprep.mubr.f32.mxu0 0.0
        %2943 = vmatmul.mubr.f32.gmra.mxu0 %v2221
        %v2944 = vpop.f32.mrf.mxu0
        %v2945 = vadd.f32 0.0, %v2944
        %v2946 = vpop.f32.mrf.mxu0
        %2947 = vmatprep.mubr.f32.mxu0 0.0
        %2948 = vmatmul.mubr.f32.gmra.mxu0 %v2223
        %v2949 = vpop.f32.mrf.mxu0
        %v2950 = vadd.f32 0.0, %v2949
        %v2951 = vpop.f32.mrf.mxu0
        %2952 = vmatprep.mubr.f32.mxu0 0.0
        %2953 = vmatmul.mubr.f32.gmra.mxu0 %v2225
        %v2954 = vpop.f32.mrf.mxu0
        %v2955 = vadd.f32 0.0, %v2954
        %v2956 = vpop.f32.mrf.mxu0
        %2957 = vmatprep.mubr.f32.mxu0 0.0
        %2958 = vmatmul.mubr.f32.gmra.mxu0 %v2227
        %v2959 = vpop.f32.mrf.mxu0
        %v2960 = vadd.f32 0.0, %v2959
        %v2961 = vpop.f32.mrf.mxu0
        %2962 = vmatprep.mubr.f32.mxu0 0.0
        %2963 = vmatmul.mubr.f32.gmra.mxu0 %v2498
        %v2964 = vpop.f32.mrf.mxu0
        %v2965 = vadd.f32 0.0, %v2964
        %v2966 = vpop.f32.mrf.mxu0
        %2967 = vmatprep.mubr.f32.mxu0 0.0
        %2968 = vmatmul.mubr.f32.gmra.mxu0 %v2866
        %v2969 = vpop.f32.mrf.mxu0
        %v2970 = vadd.f32 0.0, %v2969
        %v2971 = vpop.f32.mrf.mxu0
        %2972 = vdwg.mxu0
        %v2973 = vadd.f32 %v2852, %v2935
        %v2974 = vadd.f32 %v2853, %v2940
        %v2975 = vadd.f32 %v2854, %v2945
        %v2976 = vadd.f32 %v2855, %v2950
        %v2977 = vadd.f32 %v2856, %v2955
        %v2978 = vadd.f32 %v2857, %v2960
        %v2979 = vadd.f32 %v2858, %v2965
        %v2980 = vadd.f32 %v2859, %v2970
        %v2982 = vrot.slane %v2041, 1
        %v2983 = vrot.slane %v2042, 1
        %v2984 = vsel %vm580, %v2982, %v2983
        %s2985 = scalar_lea.vmem [#allocation6], 224
        %v2986 = vld [vmem:[%s2985] sm:$0xff]
        %v2987 = vld [vmem:[%s2985 + $0x8] sm:$0xff]
        %v2988 = vld [vmem:[%s2985 + $0x10] sm:$0xff]
        %v2989 = vld [vmem:[%s2985 + $0x18] sm:$0xff]
        %v2990 = vsel %vm501, %v2984, 0
        %2992 = vmatprep.subr.mxu0 0.0
        %2993 = vmatpush1.msra.mxu0 0.0
        %2994 = vmatprep.subr.mxu0 0.0
        %2995 = vmatpush1.msra.mxu0 0.0
        %2996 = vmatprep.subr.mxu0 0.0
        %2997 = vmatpush1.msra.mxu0 0.0
        %2998 = vmatprep.subr.mxu0 0.0
        %2999 = vmatpush1.msra.mxu0 0.0
        %3000 = vmatprep.subr.mxu0 0.0
        %3001 = vmatpush1.msra.mxu0 0.0
        %3002 = vmatprep.subr.mxu0 0.0
        %3003 = vmatpush1.msra.mxu0 0.0
        %3004 = vmatprep.subr.mxu0 0.0
        %3005 = vmatpush1.msra.mxu0 0.0
        %3006 = vmatprep.subr.mxu0 0.0
        %3007 = vmatpush1.msra.mxu0 0.0
        %3008 = vmatprep.subr.mxu0 0.0
        %3009 = vmatpush1.msra.mxu0 0.0
        %3010 = vmatprep.subr.mxu0 0.0
        %3011 = vmatpush1.msra.mxu0 0.0
        %3012 = vmatprep.subr.mxu0 0.0
        %3013 = vmatpush1.msra.mxu0 0.0
        %3014 = vmatprep.subr.mxu0 0.0
        %3015 = vmatpush1.msra.mxu0 0.0
        %3016 = vmatprep.subr.mxu0 0.0
        %3017 = vmatpush1.msra.mxu0 %v2989
        %3018 = vmatprep.subr.mxu0 0.0
        %3019 = vmatpush1.msra.mxu0 %v2988
        %3020 = vmatprep.subr.mxu0 0.0
        %3021 = vmatpush1.msra.mxu0 %v2987
        %3022 = vmatprep.subr.mxu0 0.0
        %3023 = vmatpush1.msra.mxu0 %v2986
        %3024 = vmatprep.subr.mxu0 0.0
        %3025 = vmatpush2.msra.mxu0 0.0
        %3026 = vmatprep.subr.mxu0 0.0
        %3027 = vmatpush2.msra.mxu0 0.0
        %3028 = vmatprep.subr.mxu0 0.0
        %3029 = vmatpush2.msra.mxu0 0.0
        %3030 = vmatprep.subr.mxu0 0.0
        %3031 = vmatpush2.msra.mxu0 0.0
        %3032 = vmatprep.subr.mxu0 0.0
        %3033 = vmatpush2.msra.mxu0 0.0
        %3034 = vmatprep.subr.mxu0 0.0
        %3035 = vmatpush2.msra.mxu0 0.0
        %3036 = vmatprep.subr.mxu0 0.0
        %3037 = vmatpush2.msra.mxu0 0.0
        %3038 = vmatprep.subr.mxu0 0.0
        %3039 = vmatpush2.msra.mxu0 0.0
        %3040 = vmatprep.subr.mxu0 0.0
        %3041 = vmatpush2.msra.mxu0 0.0
        %3042 = vmatprep.subr.mxu0 0.0
        %3043 = vmatpush2.msra.mxu0 0.0
        %3044 = vmatprep.subr.mxu0 0.0
        %3045 = vmatpush2.msra.mxu0 0.0
        %3046 = vmatprep.subr.mxu0 0.0
        %3047 = vmatpush2.msra.mxu0 0.0
        %3048 = vmatprep.subr.mxu0 0.0
        %3049 = vmatpush2.msra.mxu0 0.0
        %3050 = vmatprep.subr.mxu0 0.0
        %3051 = vmatpush2.msra.mxu0 0.0
        %3052 = vmatprep.subr.mxu0 0.0
        %3053 = vmatpush2.msra.mxu0 0.0
        %3054 = vmatprep.subr.mxu0 0.0
        %3055 = vmatpush2.msra.mxu0 0.0
        %3056 = vmatprep.mubr.f32.mxu0 0.0
        %3057 = vmatmul.mubr.f32.gmra.mxu0 %v2096
        %v3058 = vpop.f32.mrf.mxu0
        %v3059 = vadd.f32 0.0, %v3058
        %v3060 = vpop.f32.mrf.mxu0
        %3061 = vmatprep.mubr.f32.mxu0 0.0
        %3062 = vmatmul.mubr.f32.gmra.mxu0 %v2098
        %v3063 = vpop.f32.mrf.mxu0
        %v3064 = vadd.f32 0.0, %v3063
        %v3065 = vpop.f32.mrf.mxu0
        %3066 = vmatprep.mubr.f32.mxu0 0.0
        %3067 = vmatmul.mubr.f32.gmra.mxu0 %v2100
        %v3068 = vpop.f32.mrf.mxu0
        %v3069 = vadd.f32 0.0, %v3068
        %v3070 = vpop.f32.mrf.mxu0
        %3071 = vmatprep.mubr.f32.mxu0 0.0
        %3072 = vmatmul.mubr.f32.gmra.mxu0 %v2102
        %v3073 = vpop.f32.mrf.mxu0
        %v3074 = vadd.f32 0.0, %v3073
        %v3075 = vpop.f32.mrf.mxu0
        %3076 = vmatprep.mubr.f32.mxu0 0.0
        %3077 = vmatmul.mubr.f32.gmra.mxu0 %v2104
        %v3078 = vpop.f32.mrf.mxu0
        %v3079 = vadd.f32 0.0, %v3078
        %v3080 = vpop.f32.mrf.mxu0
        %3081 = vmatprep.mubr.f32.mxu0 0.0
        %3082 = vmatmul.mubr.f32.gmra.mxu0 %v2106
        %v3083 = vpop.f32.mrf.mxu0
        %v3084 = vadd.f32 0.0, %v3083
        %v3085 = vpop.f32.mrf.mxu0
        %3086 = vmatprep.mubr.f32.mxu0 0.0
        %3087 = vmatmul.mubr.f32.gmra.mxu0 %v2622
        %v3088 = vpop.f32.mrf.mxu0
        %v3089 = vadd.f32 0.0, %v3088
        %v3090 = vpop.f32.mrf.mxu0
        %3091 = vmatprep.mubr.f32.mxu0 0.0
        %3092 = vmatmul.mubr.f32.gmra.mxu0 %v2990
        %v3093 = vpop.f32.mrf.mxu0
        %v3094 = vadd.f32 0.0, %v3093
        %v3095 = vpop.f32.mrf.mxu0
        %3096 = vdwg.mxu0
        %v3097 = vadd.f32 %v2973, %v3059
        %v3098 = vadd.f32 %v2974, %v3064
        %v3099 = vadd.f32 %v2975, %v3069
        %v3100 = vadd.f32 %v2976, %v3074
        %v3101 = vadd.f32 %v2977, %v3079
        %v3102 = vadd.f32 %v2978, %v3084
        %v3103 = vadd.f32 %v2979, %v3089
        %v3104 = vadd.f32 %v2980, %v3094
        %v3105 = vrot.slane %v2041, 2
        %v3106 = vrot.slane %v2042, 2
        %v3107 = vsel %vm852, %v3105, %v3106
        %s3108 = scalar_lea.vmem [#allocation6], 256
        %v3109 = vld [vmem:[%s3108] sm:$0xff]
        %v3110 = vld [vmem:[%s3108 + $0x8] sm:$0xff]
        %v3111 = vld [vmem:[%s3108 + $0x10] sm:$0xff]
        %v3112 = vld [vmem:[%s3108 + $0x18] sm:$0xff]
        %v3113 = vsel %vm501, %v3107, 0
        %3115 = vmatprep.subr.mxu0 0.0
        %3116 = vmatpush1.msra.mxu0 0.0
        %3117 = vmatprep.subr.mxu0 0.0
        %3118 = vmatpush1.msra.mxu0 0.0
        %3119 = vmatprep.subr.mxu0 0.0
        %3120 = vmatpush1.msra.mxu0 0.0
        %3121 = vmatprep.subr.mxu0 0.0
        %3122 = vmatpush1.msra.mxu0 0.0
        %3123 = vmatprep.subr.mxu0 0.0
        %3124 = vmatpush1.msra.mxu0 0.0
        %3125 = vmatprep.subr.mxu0 0.0
        %3126 = vmatpush1.msra.mxu0 0.0
        %3127 = vmatprep.subr.mxu0 0.0
        %3128 = vmatpush1.msra.mxu0 0.0
        %3129 = vmatprep.subr.mxu0 0.0
        %3130 = vmatpush1.msra.mxu0 0.0
        %3131 = vmatprep.subr.mxu0 0.0
        %3132 = vmatpush1.msra.mxu0 0.0
        %3133 = vmatprep.subr.mxu0 0.0
        %3134 = vmatpush1.msra.mxu0 0.0
        %3135 = vmatprep.subr.mxu0 0.0
        %3136 = vmatpush1.msra.mxu0 0.0
        %3137 = vmatprep.subr.mxu0 0.0
        %3138 = vmatpush1.msra.mxu0 0.0
        %3139 = vmatprep.subr.mxu0 0.0
        %3140 = vmatpush1.msra.mxu0 %v3112
        %3141 = vmatprep.subr.mxu0 0.0
        %3142 = vmatpush1.msra.mxu0 %v3111
        %3143 = vmatprep.subr.mxu0 0.0
        %3144 = vmatpush1.msra.mxu0 %v3110
        %3145 = vmatprep.subr.mxu0 0.0
        %3146 = vmatpush1.msra.mxu0 %v3109
        %3147 = vmatprep.subr.mxu0 0.0
        %3148 = vmatpush2.msra.mxu0 0.0
        %3149 = vmatprep.subr.mxu0 0.0
        %3150 = vmatpush2.msra.mxu0 0.0
        %3151 = vmatprep.subr.mxu0 0.0
        %3152 = vmatpush2.msra.mxu0 0.0
        %3153 = vmatprep.subr.mxu0 0.0
        %3154 = vmatpush2.msra.mxu0 0.0
        %3155 = vmatprep.subr.mxu0 0.0
        %3156 = vmatpush2.msra.mxu0 0.0
        %3157 = vmatprep.subr.mxu0 0.0
        %3158 = vmatpush2.msra.mxu0 0.0
        %3159 = vmatprep.subr.mxu0 0.0
        %3160 = vmatpush2.msra.mxu0 0.0
        %3161 = vmatprep.subr.mxu0 0.0
        %3162 = vmatpush2.msra.mxu0 0.0
        %3163 = vmatprep.subr.mxu0 0.0
        %3164 = vmatpush2.msra.mxu0 0.0
        %3165 = vmatprep.subr.mxu0 0.0
        %3166 = vmatpush2.msra.mxu0 0.0
        %3167 = vmatprep.subr.mxu0 0.0
        %3168 = vmatpush2.msra.mxu0 0.0
        %3169 = vmatprep.subr.mxu0 0.0
        %3170 = vmatpush2.msra.mxu0 0.0
        %3171 = vmatprep.subr.mxu0 0.0
        %3172 = vmatpush2.msra.mxu0 0.0
        %3173 = vmatprep.subr.mxu0 0.0
        %3174 = vmatpush2.msra.mxu0 0.0
        %3175 = vmatprep.subr.mxu0 0.0
        %3176 = vmatpush2.msra.mxu0 0.0
        %3177 = vmatprep.subr.mxu0 0.0
        %3178 = vmatpush2.msra.mxu0 0.0
        %3179 = vmatprep.mubr.f32.mxu0 0.0
        %3180 = vmatmul.mubr.f32.gmra.mxu0 %v2367
        %v3181 = vpop.f32.mrf.mxu0
        %v3182 = vadd.f32 0.0, %v3181
        %v3183 = vpop.f32.mrf.mxu0
        %3184 = vmatprep.mubr.f32.mxu0 0.0
        %3185 = vmatmul.mubr.f32.gmra.mxu0 %v2369
        %v3186 = vpop.f32.mrf.mxu0
        %v3187 = vadd.f32 0.0, %v3186
        %v3188 = vpop.f32.mrf.mxu0
        %3189 = vmatprep.mubr.f32.mxu0 0.0
        %3190 = vmatmul.mubr.f32.gmra.mxu0 %v2371
        %v3191 = vpop.f32.mrf.mxu0
        %v3192 = vadd.f32 0.0, %v3191
        %v3193 = vpop.f32.mrf.mxu0
        %3194 = vmatprep.mubr.f32.mxu0 0.0
        %3195 = vmatmul.mubr.f32.gmra.mxu0 %v2373
        %v3196 = vpop.f32.mrf.mxu0
        %v3197 = vadd.f32 0.0, %v3196
        %v3198 = vpop.f32.mrf.mxu0
        %3199 = vmatprep.mubr.f32.mxu0 0.0
        %3200 = vmatmul.mubr.f32.gmra.mxu0 %v2375
        %v3201 = vpop.f32.mrf.mxu0
        %v3202 = vadd.f32 0.0, %v3201
        %v3203 = vpop.f32.mrf.mxu0
        %3204 = vmatprep.mubr.f32.mxu0 0.0
        %3205 = vmatmul.mubr.f32.gmra.mxu0 %v2377
        %v3206 = vpop.f32.mrf.mxu0
        %v3207 = vadd.f32 0.0, %v3206
        %v3208 = vpop.f32.mrf.mxu0
        %3209 = vmatprep.mubr.f32.mxu0 0.0
        %3210 = vmatmul.mubr.f32.gmra.mxu0 %v2745
        %v3211 = vpop.f32.mrf.mxu0
        %v3212 = vadd.f32 0.0, %v3211
        %v3213 = vpop.f32.mrf.mxu0
        %3214 = vmatprep.mubr.f32.mxu0 0.0
        %3215 = vmatmul.mubr.f32.gmra.mxu0 %v3113
        %v3216 = vpop.f32.mrf.mxu0
        %v3217 = vadd.f32 0.0, %v3216
        %v3218 = vpop.f32.mrf.mxu0
        %3219 = vdwg.mxu0
        %v3220 = vadd.f32 %v3097, %v3182
        %v3221 = vadd.f32 %v3098, %v3187
        %v3222 = vadd.f32 %v3099, %v3192
        %v3223 = vadd.f32 %v3100, %v3197
        %v3224 = vadd.f32 %v3101, %v3202
        %v3225 = vadd.f32 %v3102, %v3207
        %v3226 = vadd.f32 %v3103, %v3212
        %v3227 = vadd.f32 %v3104, %v3217
        %v3228 = vld [vmem:[%s7] sm:$0x1]
        %v3230 = vlaneseq
        %v3231 = vshrl.u32 %v3230, 7
        %v3232 = vsub.s32 0, %v3231
        %v3233 = vrot.slane %v3228, %v3232
        %v3235 = vadd.f32 %v3220, %v3233
        %v3236 = vadd.f32 %v3221, %v3233
        %v3237 = vadd.f32 %v3222, %v3233
        %v3238 = vadd.f32 %v3223, %v3233
        %v3239 = vadd.f32 %v3224, %v3233
        %v3240 = vadd.f32 %v3225, %v3233
        %v3241 = vadd.f32 %v3226, %v3233
        %v3242 = vadd.f32 %v3227, %v3233
        %v3243 = vmax.f32 %v3235, 0.0
        %v3244 = vmax.f32 %v3236, 0.0
        %v3245 = vmax.f32 %v3237, 0.0
        %v3246 = vmax.f32 %v3238, 0.0
        %v3247 = vmax.f32 %v3239, 0.0
        %v3248 = vmax.f32 %v3240, 0.0
        %v3249 = vmax.f32 %v3241, 0.0
        %v3250 = vmax.f32 %v3242, 0.0
        %3251 = vst.msk [vmem:[%s495] sm:$0xff] %vm501, %v3243
        %3252 = vst.msk [vmem:[%s495 + $0x8] sm:$0xff] %vm501, %v3244
        %3253 = vst.msk [vmem:[%s495 + $0x10] sm:$0xff] %vm501, %v3245
        %3254 = vst.msk [vmem:[%s495 + $0x18] sm:$0xff] %vm501, %v3246
        %3255 = vst.msk [vmem:[%s495 + $0x20] sm:$0xff] %vm501, %v3247
        %3256 = vst.msk [vmem:[%s495 + $0x28] sm:$0xff] %vm501, %v3248
        %3257 = vst.msk [vmem:[%s495 + $0x30] sm:$0xff] %vm501, %v3249
        %3258 = vst.msk [vmem:[%s495 + $0x38] sm:$0xff] %vm501, %v3250
        %3259 = vst.msk [vmem:[%s531 + $0x1] sm:$0xff] %vm501, %v3243
        %3260 = vst.msk [vmem:[%s531 + $0x11] sm:$0xff] %vm501, %v3244
        %3261 = vst.msk [vmem:[%s531 + $0x21] sm:$0xff] %vm501, %v3245
        %3262 = vst.msk [vmem:[%s531 + $0x31] sm:$0xff] %vm501, %v3246
        %3263 = vst.msk [vmem:[%s531 + $0x41] sm:$0xff] %vm501, %v3247
        %3264 = vst.msk [vmem:[%s531 + $0x51] sm:$0xff] %vm501, %v3248
        %3265 = vst.msk [vmem:[%s531 + $0x61] sm:$0xff] %vm501, %v3249
        %3266 = vst.msk [vmem:[%s531 + $0x71] sm:$0xff] %vm501, %v3250
        %v3267 = vld [vmem:[#allocation2] sm:$0xff]
        %v3268 = vld [vmem:[#allocation2 + $0x8] sm:$0x3]
        %v3269 = vld [vmem:[#allocation2 + $0x10] sm:$0xff]
        %v3270 = vld [vmem:[#allocation2 + $0x18] sm:$0x3]
        %v3271 = vld [vmem:[#allocation2 + $0x20] sm:$0xff]
        %v3272 = vld [vmem:[#allocation2 + $0x28] sm:$0x3]
        %v3273 = vld [vmem:[#allocation2 + $0x30] sm:$0xff]
        %v3274 = vld [vmem:[#allocation2 + $0x38] sm:$0x3]
        %v3275 = vld [vmem:[#allocation2 + $0x40] sm:$0xff]
        %v3276 = vld [vmem:[#allocation2 + $0x48] sm:$0x3]
        %v3277 = vld [vmem:[#allocation2 + $0x50] sm:$0xff]
        %v3278 = vld [vmem:[#allocation2 + $0x58] sm:$0x3]
        %v3279 = vld [vmem:[#allocation2 + $0x60] sm:$0xff]
        %v3280 = vld [vmem:[#allocation2 + $0x68] sm:$0x3]
        %v3281 = vld [vmem:[#allocation2 + $0x70] sm:$0xff]
        %v3282 = vld [vmem:[#allocation2 + $0x78] sm:$0x3]
        %v3283 = vld [vmem:[#allocation2 + $0x80] sm:$0xff]
        %v3284 = vld [vmem:[#allocation2 + $0x88] sm:$0x3]
        %v3285 = vld [vmem:[#allocation2 + $0x90] sm:$0xff]
        %v3286 = vld [vmem:[#allocation2 + $0x98] sm:$0x3]
        %v3287 = vld [vmem:[#allocation8] sm:$0xff]
        %v3288 = vld [vmem:[#allocation8 + $0x8] sm:$0xff]
        %v3289 = vld [vmem:[#allocation8 + $0x10] sm:$0xff]
        %v3290 = vld [vmem:[#allocation8 + $0x18] sm:$0xff]
        %v3307 = vrot.slane %v3267, 1
        %v3308 = vrot.slane %v3268, 1
        %v3309 = vsel %vm580, %v3307, %v3308
        %v3310 = vrot.slane %v3269, 1
        %v3311 = vrot.slane %v3270, 1
        %v3312 = vsel %vm580, %v3310, %v3311
        %v3313 = vrot.slane %v3271, 1
        %v3314 = vrot.slane %v3272, 1
        %v3315 = vsel %vm580, %v3313, %v3314
        %v3316 = vrot.slane %v3273, 1
        %v3317 = vrot.slane %v3274, 1
        %v3318 = vsel %vm580, %v3316, %v3317
        %v3319 = vrot.slane %v3275, 1
        %v3320 = vrot.slane %v3276, 1
        %v3321 = vsel %vm580, %v3319, %v3320
        %v3322 = vrot.slane %v3277, 1
        %v3323 = vrot.slane %v3278, 1
        %v3324 = vsel %vm580, %v3322, %v3323
        %v3325 = vrot.slane %v3279, 1
        %v3326 = vrot.slane %v3280, 1
        %v3327 = vsel %vm580, %v3325, %v3326
        %v3328 = vrot.slane %v3281, 1
        %v3329 = vrot.slane %v3282, 1
        %v3330 = vsel %vm580, %v3328, %v3329
        %s3331 = scalar_lea.vmem [#allocation8], 32
        %v3332 = vld [vmem:[%s3331] sm:$0xff]
        %v3333 = vld [vmem:[%s3331 + $0x8] sm:$0xff]
        %v3334 = vld [vmem:[%s3331 + $0x10] sm:$0xff]
        %v3335 = vld [vmem:[%s3331 + $0x18] sm:$0xff]
        %v3336 = vsel %vm501, %v3309, 0
        %v3338 = vsel %vm501, %v3312, 0
        %v3340 = vsel %vm501, %v3315, 0
        %v3342 = vsel %vm501, %v3318, 0
        %v3344 = vsel %vm501, %v3321, 0
        %v3346 = vsel %vm501, %v3324, 0
        %v3348 = vsel %vm501, %v3327, 0
        %v3350 = vsel %vm501, %v3330, 0
        %3352 = vmatprep.subr.mxu0 0.0
        %3353 = vmatpush1.msra.mxu0 0.0
        %3354 = vmatprep.subr.mxu0 0.0
        %3355 = vmatpush1.msra.mxu0 0.0
        %3356 = vmatprep.subr.mxu0 0.0
        %3357 = vmatpush1.msra.mxu0 0.0
        %3358 = vmatprep.subr.mxu0 0.0
        %3359 = vmatpush1.msra.mxu0 0.0
        %3360 = vmatprep.subr.mxu0 0.0
        %3361 = vmatpush1.msra.mxu0 0.0
        %3362 = vmatprep.subr.mxu0 0.0
        %3363 = vmatpush1.msra.mxu0 0.0
        %3364 = vmatprep.subr.mxu0 0.0
        %3365 = vmatpush1.msra.mxu0 0.0
        %3366 = vmatprep.subr.mxu0 0.0
        %3367 = vmatpush1.msra.mxu0 0.0
        %3368 = vmatprep.subr.mxu0 0.0
        %3369 = vmatpush1.msra.mxu0 0.0
        %3370 = vmatprep.subr.mxu0 0.0
        %3371 = vmatpush1.msra.mxu0 0.0
        %3372 = vmatprep.subr.mxu0 0.0
        %3373 = vmatpush1.msra.mxu0 0.0
        %3374 = vmatprep.subr.mxu0 0.0
        %3375 = vmatpush1.msra.mxu0 0.0
        %3376 = vmatprep.subr.mxu0 0.0
        %3377 = vmatpush1.msra.mxu0 %v3335
        %3378 = vmatprep.subr.mxu0 0.0
        %3379 = vmatpush1.msra.mxu0 %v3334
        %3380 = vmatprep.subr.mxu0 0.0
        %3381 = vmatpush1.msra.mxu0 %v3333
        %3382 = vmatprep.subr.mxu0 0.0
        %3383 = vmatpush1.msra.mxu0 %v3332
        %3384 = vmatprep.subr.mxu0 0.0
        %3385 = vmatpush2.msra.mxu0 0.0
        %3386 = vmatprep.subr.mxu0 0.0
        %3387 = vmatpush2.msra.mxu0 0.0
        %3388 = vmatprep.subr.mxu0 0.0
        %3389 = vmatpush2.msra.mxu0 0.0
        %3390 = vmatprep.subr.mxu0 0.0
        %3391 = vmatpush2.msra.mxu0 0.0
        %3392 = vmatprep.subr.mxu0 0.0
        %3393 = vmatpush2.msra.mxu0 0.0
        %3394 = vmatprep.subr.mxu0 0.0
        %3395 = vmatpush2.msra.mxu0 0.0
        %3396 = vmatprep.subr.mxu0 0.0
        %3397 = vmatpush2.msra.mxu0 0.0
        %3398 = vmatprep.subr.mxu0 0.0
        %3399 = vmatpush2.msra.mxu0 0.0
        %3400 = vmatprep.subr.mxu0 0.0
        %3401 = vmatpush2.msra.mxu0 0.0
        %3402 = vmatprep.subr.mxu0 0.0
        %3403 = vmatpush2.msra.mxu0 0.0
        %3404 = vmatprep.subr.mxu0 0.0
        %3405 = vmatpush2.msra.mxu0 0.0
        %3406 = vmatprep.subr.mxu0 0.0
        %3407 = vmatpush2.msra.mxu0 0.0
        %3408 = vmatprep.subr.mxu0 0.0
        %3409 = vmatpush2.msra.mxu0 0.0
        %3410 = vmatprep.subr.mxu0 0.0
        %3411 = vmatpush2.msra.mxu0 0.0
        %3412 = vmatprep.subr.mxu0 0.0
        %3413 = vmatpush2.msra.mxu0 0.0
        %3414 = vmatprep.subr.mxu0 0.0
        %3415 = vmatpush2.msra.mxu0 0.0
        %3416 = vmatprep.mubr.f32.mxu0 0.0
        %3417 = vmatmul.mubr.f32.gmra.mxu0 %v3336
        %v3418 = vpop.f32.mrf.mxu0
        %v3419 = vadd.f32 0.0, %v3418
        %v3420 = vpop.f32.mrf.mxu0
        %3421 = vmatprep.mubr.f32.mxu0 0.0
        %3422 = vmatmul.mubr.f32.gmra.mxu0 %v3338
        %v3423 = vpop.f32.mrf.mxu0
        %v3424 = vadd.f32 0.0, %v3423
        %v3425 = vpop.f32.mrf.mxu0
        %3426 = vmatprep.mubr.f32.mxu0 0.0
        %3427 = vmatmul.mubr.f32.gmra.mxu0 %v3340
        %v3428 = vpop.f32.mrf.mxu0
        %v3429 = vadd.f32 0.0, %v3428
        %v3430 = vpop.f32.mrf.mxu0
        %3431 = vmatprep.mubr.f32.mxu0 0.0
        %3432 = vmatmul.mubr.f32.gmra.mxu0 %v3342
        %v3433 = vpop.f32.mrf.mxu0
        %v3434 = vadd.f32 0.0, %v3433
        %v3435 = vpop.f32.mrf.mxu0
        %3436 = vmatprep.mubr.f32.mxu0 0.0
        %3437 = vmatmul.mubr.f32.gmra.mxu0 %v3344
        %v3438 = vpop.f32.mrf.mxu0
        %v3439 = vadd.f32 0.0, %v3438
        %v3440 = vpop.f32.mrf.mxu0
        %3441 = vmatprep.mubr.f32.mxu0 0.0
        %3442 = vmatmul.mubr.f32.gmra.mxu0 %v3346
        %v3443 = vpop.f32.mrf.mxu0
        %v3444 = vadd.f32 0.0, %v3443
        %v3445 = vpop.f32.mrf.mxu0
        %3446 = vmatprep.mubr.f32.mxu0 0.0
        %3447 = vmatmul.mubr.f32.gmra.mxu0 %v3348
        %v3448 = vpop.f32.mrf.mxu0
        %v3449 = vadd.f32 0.0, %v3448
        %v3450 = vpop.f32.mrf.mxu0
        %3451 = vmatprep.mubr.f32.mxu0 0.0
        %3452 = vmatmul.mubr.f32.gmra.mxu0 %v3350
        %v3453 = vpop.f32.mrf.mxu0
        %v3454 = vadd.f32 0.0, %v3453
        %v3455 = vpop.f32.mrf.mxu0
        %3456 = vdwg.mxu0
        %v3457 = vsel %vm501, %v3267, 0
        %v3459 = vsel %vm501, %v3269, 0
        %v3461 = vsel %vm501, %v3271, 0
        %v3463 = vsel %vm501, %v3273, 0
        %v3465 = vsel %vm501, %v3275, 0
        %v3467 = vsel %vm501, %v3277, 0
        %v3469 = vsel %vm501, %v3279, 0
        %v3471 = vsel %vm501, %v3281, 0
        %3473 = vmatprep.subr.mxu0 0.0
        %3474 = vmatpush1.msra.mxu0 0.0
        %3475 = vmatprep.subr.mxu0 0.0
        %3476 = vmatpush1.msra.mxu0 0.0
        %3477 = vmatprep.subr.mxu0 0.0
        %3478 = vmatpush1.msra.mxu0 0.0
        %3479 = vmatprep.subr.mxu0 0.0
        %3480 = vmatpush1.msra.mxu0 0.0
        %3481 = vmatprep.subr.mxu0 0.0
        %3482 = vmatpush1.msra.mxu0 0.0
        %3483 = vmatprep.subr.mxu0 0.0
        %3484 = vmatpush1.msra.mxu0 0.0
        %3485 = vmatprep.subr.mxu0 0.0
        %3486 = vmatpush1.msra.mxu0 0.0
        %3487 = vmatprep.subr.mxu0 0.0
        %3488 = vmatpush1.msra.mxu0 0.0
        %3489 = vmatprep.subr.mxu0 0.0
        %3490 = vmatpush1.msra.mxu0 0.0
        %3491 = vmatprep.subr.mxu0 0.0
        %3492 = vmatpush1.msra.mxu0 0.0
        %3493 = vmatprep.subr.mxu0 0.0
        %3494 = vmatpush1.msra.mxu0 0.0
        %3495 = vmatprep.subr.mxu0 0.0
        %3496 = vmatpush1.msra.mxu0 0.0
        %3497 = vmatprep.subr.mxu0 0.0
        %3498 = vmatpush1.msra.mxu0 %v3290
        %3499 = vmatprep.subr.mxu0 0.0
        %3500 = vmatpush1.msra.mxu0 %v3289
        %3501 = vmatprep.subr.mxu0 0.0
        %3502 = vmatpush1.msra.mxu0 %v3288
        %3503 = vmatprep.subr.mxu0 0.0
        %3504 = vmatpush1.msra.mxu0 %v3287
        %3505 = vmatprep.subr.mxu0 0.0
        %3506 = vmatpush2.msra.mxu0 0.0
        %3507 = vmatprep.subr.mxu0 0.0
        %3508 = vmatpush2.msra.mxu0 0.0
        %3509 = vmatprep.subr.mxu0 0.0
        %3510 = vmatpush2.msra.mxu0 0.0
        %3511 = vmatprep.subr.mxu0 0.0
        %3512 = vmatpush2.msra.mxu0 0.0
        %3513 = vmatprep.subr.mxu0 0.0
        %3514 = vmatpush2.msra.mxu0 0.0
        %3515 = vmatprep.subr.mxu0 0.0
        %3516 = vmatpush2.msra.mxu0 0.0
        %3517 = vmatprep.subr.mxu0 0.0
        %3518 = vmatpush2.msra.mxu0 0.0
        %3519 = vmatprep.subr.mxu0 0.0
        %3520 = vmatpush2.msra.mxu0 0.0
        %3521 = vmatprep.subr.mxu0 0.0
        %3522 = vmatpush2.msra.mxu0 0.0
        %3523 = vmatprep.subr.mxu0 0.0
        %3524 = vmatpush2.msra.mxu0 0.0
        %3525 = vmatprep.subr.mxu0 0.0
        %3526 = vmatpush2.msra.mxu0 0.0
        %3527 = vmatprep.subr.mxu0 0.0
        %3528 = vmatpush2.msra.mxu0 0.0
        %3529 = vmatprep.subr.mxu0 0.0
        %3530 = vmatpush2.msra.mxu0 0.0
        %3531 = vmatprep.subr.mxu0 0.0
        %3532 = vmatpush2.msra.mxu0 0.0
        %3533 = vmatprep.subr.mxu0 0.0
        %3534 = vmatpush2.msra.mxu0 0.0
        %3535 = vmatprep.subr.mxu0 0.0
        %3536 = vmatpush2.msra.mxu0 0.0
        %3537 = vmatprep.mubr.f32.mxu0 0.0
        %3538 = vmatmul.mubr.f32.gmra.mxu0 %v3457
        %v3539 = vpop.f32.mrf.mxu0
        %v3540 = vadd.f32 %v3419, %v3539
        %v3541 = vpop.f32.mrf.mxu0
        %3542 = vmatprep.mubr.f32.mxu0 0.0
        %3543 = vmatmul.mubr.f32.gmra.mxu0 %v3459
        %v3544 = vpop.f32.mrf.mxu0
        %v3545 = vadd.f32 %v3424, %v3544
        %v3546 = vpop.f32.mrf.mxu0
        %3547 = vmatprep.mubr.f32.mxu0 0.0
        %3548 = vmatmul.mubr.f32.gmra.mxu0 %v3461
        %v3549 = vpop.f32.mrf.mxu0
        %v3550 = vadd.f32 %v3429, %v3549
        %v3551 = vpop.f32.mrf.mxu0
        %3552 = vmatprep.mubr.f32.mxu0 0.0
        %3553 = vmatmul.mubr.f32.gmra.mxu0 %v3463
        %v3554 = vpop.f32.mrf.mxu0
        %v3555 = vadd.f32 %v3434, %v3554
        %v3556 = vpop.f32.mrf.mxu0
        %3557 = vmatprep.mubr.f32.mxu0 0.0
        %3558 = vmatmul.mubr.f32.gmra.mxu0 %v3465
        %v3559 = vpop.f32.mrf.mxu0
        %v3560 = vadd.f32 %v3439, %v3559
        %v3561 = vpop.f32.mrf.mxu0
        %3562 = vmatprep.mubr.f32.mxu0 0.0
        %3563 = vmatmul.mubr.f32.gmra.mxu0 %v3467
        %v3564 = vpop.f32.mrf.mxu0
        %v3565 = vadd.f32 %v3444, %v3564
        %v3566 = vpop.f32.mrf.mxu0
        %3567 = vmatprep.mubr.f32.mxu0 0.0
        %3568 = vmatmul.mubr.f32.gmra.mxu0 %v3469
        %v3569 = vpop.f32.mrf.mxu0
        %v3570 = vadd.f32 %v3449, %v3569
        %v3571 = vpop.f32.mrf.mxu0
        %3572 = vmatprep.mubr.f32.mxu0 0.0
        %3573 = vmatmul.mubr.f32.gmra.mxu0 %v3471
        %v3574 = vpop.f32.mrf.mxu0
        %v3575 = vadd.f32 %v3454, %v3574
        %v3576 = vpop.f32.mrf.mxu0
        %3577 = vdwg.mxu0
        %v3578 = vrot.slane %v3267, 2
        %v3579 = vrot.slane %v3268, 2
        %v3580 = vsel %vm852, %v3578, %v3579
        %v3581 = vrot.slane %v3269, 2
        %v3582 = vrot.slane %v3270, 2
        %v3583 = vsel %vm852, %v3581, %v3582
        %v3584 = vrot.slane %v3271, 2
        %v3585 = vrot.slane %v3272, 2
        %v3586 = vsel %vm852, %v3584, %v3585
        %v3587 = vrot.slane %v3273, 2
        %v3588 = vrot.slane %v3274, 2
        %v3589 = vsel %vm852, %v3587, %v3588
        %v3590 = vrot.slane %v3275, 2
        %v3591 = vrot.slane %v3276, 2
        %v3592 = vsel %vm852, %v3590, %v3591
        %v3593 = vrot.slane %v3277, 2
        %v3594 = vrot.slane %v3278, 2
        %v3595 = vsel %vm852, %v3593, %v3594
        %v3596 = vrot.slane %v3279, 2
        %v3597 = vrot.slane %v3280, 2
        %v3598 = vsel %vm852, %v3596, %v3597
        %v3599 = vrot.slane %v3281, 2
        %v3600 = vrot.slane %v3282, 2
        %v3601 = vsel %vm852, %v3599, %v3600
        %s3602 = scalar_lea.vmem [#allocation8], 64
        %v3603 = vld [vmem:[%s3602] sm:$0xff]
        %v3604 = vld [vmem:[%s3602 + $0x8] sm:$0xff]
        %v3605 = vld [vmem:[%s3602 + $0x10] sm:$0xff]
        %v3606 = vld [vmem:[%s3602 + $0x18] sm:$0xff]
        %v3607 = vsel %vm501, %v3580, 0
        %v3609 = vsel %vm501, %v3583, 0
        %v3611 = vsel %vm501, %v3586, 0
        %v3613 = vsel %vm501, %v3589, 0
        %v3615 = vsel %vm501, %v3592, 0
        %v3617 = vsel %vm501, %v3595, 0
        %v3619 = vsel %vm501, %v3598, 0
        %v3621 = vsel %vm501, %v3601, 0
        %3623 = vmatprep.subr.mxu0 0.0
        %3624 = vmatpush1.msra.mxu0 0.0
        %3625 = vmatprep.subr.mxu0 0.0
        %3626 = vmatpush1.msra.mxu0 0.0
        %3627 = vmatprep.subr.mxu0 0.0
        %3628 = vmatpush1.msra.mxu0 0.0
        %3629 = vmatprep.subr.mxu0 0.0
        %3630 = vmatpush1.msra.mxu0 0.0
        %3631 = vmatprep.subr.mxu0 0.0
        %3632 = vmatpush1.msra.mxu0 0.0
        %3633 = vmatprep.subr.mxu0 0.0
        %3634 = vmatpush1.msra.mxu0 0.0
        %3635 = vmatprep.subr.mxu0 0.0
        %3636 = vmatpush1.msra.mxu0 0.0
        %3637 = vmatprep.subr.mxu0 0.0
        %3638 = vmatpush1.msra.mxu0 0.0
        %3639 = vmatprep.subr.mxu0 0.0
        %3640 = vmatpush1.msra.mxu0 0.0
        %3641 = vmatprep.subr.mxu0 0.0
        %3642 = vmatpush1.msra.mxu0 0.0
        %3643 = vmatprep.subr.mxu0 0.0
        %3644 = vmatpush1.msra.mxu0 0.0
        %3645 = vmatprep.subr.mxu0 0.0
        %3646 = vmatpush1.msra.mxu0 0.0
        %3647 = vmatprep.subr.mxu0 0.0
        %3648 = vmatpush1.msra.mxu0 %v3606
        %3649 = vmatprep.subr.mxu0 0.0
        %3650 = vmatpush1.msra.mxu0 %v3605
        %3651 = vmatprep.subr.mxu0 0.0
        %3652 = vmatpush1.msra.mxu0 %v3604
        %3653 = vmatprep.subr.mxu0 0.0
        %3654 = vmatpush1.msra.mxu0 %v3603
        %3655 = vmatprep.subr.mxu0 0.0
        %3656 = vmatpush2.msra.mxu0 0.0
        %3657 = vmatprep.subr.mxu0 0.0
        %3658 = vmatpush2.msra.mxu0 0.0
        %3659 = vmatprep.subr.mxu0 0.0
        %3660 = vmatpush2.msra.mxu0 0.0
        %3661 = vmatprep.subr.mxu0 0.0
        %3662 = vmatpush2.msra.mxu0 0.0
        %3663 = vmatprep.subr.mxu0 0.0
        %3664 = vmatpush2.msra.mxu0 0.0
        %3665 = vmatprep.subr.mxu0 0.0
        %3666 = vmatpush2.msra.mxu0 0.0
        %3667 = vmatprep.subr.mxu0 0.0
        %3668 = vmatpush2.msra.mxu0 0.0
        %3669 = vmatprep.subr.mxu0 0.0
        %3670 = vmatpush2.msra.mxu0 0.0
        %3671 = vmatprep.subr.mxu0 0.0
        %3672 = vmatpush2.msra.mxu0 0.0
        %3673 = vmatprep.subr.mxu0 0.0
        %3674 = vmatpush2.msra.mxu0 0.0
        %3675 = vmatprep.subr.mxu0 0.0
        %3676 = vmatpush2.msra.mxu0 0.0
        %3677 = vmatprep.subr.mxu0 0.0
        %3678 = vmatpush2.msra.mxu0 0.0
        %3679 = vmatprep.subr.mxu0 0.0
        %3680 = vmatpush2.msra.mxu0 0.0
        %3681 = vmatprep.subr.mxu0 0.0
        %3682 = vmatpush2.msra.mxu0 0.0
        %3683 = vmatprep.subr.mxu0 0.0
        %3684 = vmatpush2.msra.mxu0 0.0
        %3685 = vmatprep.subr.mxu0 0.0
        %3686 = vmatpush2.msra.mxu0 0.0
        %3687 = vmatprep.mubr.f32.mxu0 0.0
        %3688 = vmatmul.mubr.f32.gmra.mxu0 %v3607
        %v3689 = vpop.f32.mrf.mxu0
        %v3690 = vadd.f32 0.0, %v3689
        %v3691 = vpop.f32.mrf.mxu0
        %3692 = vmatprep.mubr.f32.mxu0 0.0
        %3693 = vmatmul.mubr.f32.gmra.mxu0 %v3609
        %v3694 = vpop.f32.mrf.mxu0
        %v3695 = vadd.f32 0.0, %v3694
        %v3696 = vpop.f32.mrf.mxu0
        %3697 = vmatprep.mubr.f32.mxu0 0.0
        %3698 = vmatmul.mubr.f32.gmra.mxu0 %v3611
        %v3699 = vpop.f32.mrf.mxu0
        %v3700 = vadd.f32 0.0, %v3699
        %v3701 = vpop.f32.mrf.mxu0
        %3702 = vmatprep.mubr.f32.mxu0 0.0
        %3703 = vmatmul.mubr.f32.gmra.mxu0 %v3613
        %v3704 = vpop.f32.mrf.mxu0
        %v3705 = vadd.f32 0.0, %v3704
        %v3706 = vpop.f32.mrf.mxu0
        %3707 = vmatprep.mubr.f32.mxu0 0.0
        %3708 = vmatmul.mubr.f32.gmra.mxu0 %v3615
        %v3709 = vpop.f32.mrf.mxu0
        %v3710 = vadd.f32 0.0, %v3709
        %v3711 = vpop.f32.mrf.mxu0
        %3712 = vmatprep.mubr.f32.mxu0 0.0
        %3713 = vmatmul.mubr.f32.gmra.mxu0 %v3617
        %v3714 = vpop.f32.mrf.mxu0
        %v3715 = vadd.f32 0.0, %v3714
        %v3716 = vpop.f32.mrf.mxu0
        %3717 = vmatprep.mubr.f32.mxu0 0.0
        %3718 = vmatmul.mubr.f32.gmra.mxu0 %v3619
        %v3719 = vpop.f32.mrf.mxu0
        %v3720 = vadd.f32 0.0, %v3719
        %v3721 = vpop.f32.mrf.mxu0
        %3722 = vmatprep.mubr.f32.mxu0 0.0
        %3723 = vmatmul.mubr.f32.gmra.mxu0 %v3621
        %v3724 = vpop.f32.mrf.mxu0
        %v3725 = vadd.f32 0.0, %v3724
        %v3726 = vpop.f32.mrf.mxu0
        %3727 = vdwg.mxu0
        %v3728 = vadd.f32 %v3540, %v3690
        %v3729 = vadd.f32 %v3545, %v3695
        %v3730 = vadd.f32 %v3550, %v3700
        %v3731 = vadd.f32 %v3555, %v3705
        %v3732 = vadd.f32 %v3560, %v3710
        %v3733 = vadd.f32 %v3565, %v3715
        %v3734 = vadd.f32 %v3570, %v3720
        %v3735 = vadd.f32 %v3575, %v3725
        %s3736 = scalar_lea.vmem [#allocation8], 96
        %v3737 = vld [vmem:[%s3736] sm:$0xff]
        %v3738 = vld [vmem:[%s3736 + $0x8] sm:$0xff]
        %v3739 = vld [vmem:[%s3736 + $0x10] sm:$0xff]
        %v3740 = vld [vmem:[%s3736 + $0x18] sm:$0xff]
        %v3742 = vsel %vm501, %v3283, 0
        %3744 = vmatprep.subr.mxu0 0.0
        %3745 = vmatpush1.msra.mxu0 0.0
        %3746 = vmatprep.subr.mxu0 0.0
        %3747 = vmatpush1.msra.mxu0 0.0
        %3748 = vmatprep.subr.mxu0 0.0
        %3749 = vmatpush1.msra.mxu0 0.0
        %3750 = vmatprep.subr.mxu0 0.0
        %3751 = vmatpush1.msra.mxu0 0.0
        %3752 = vmatprep.subr.mxu0 0.0
        %3753 = vmatpush1.msra.mxu0 0.0
        %3754 = vmatprep.subr.mxu0 0.0
        %3755 = vmatpush1.msra.mxu0 0.0
        %3756 = vmatprep.subr.mxu0 0.0
        %3757 = vmatpush1.msra.mxu0 0.0
        %3758 = vmatprep.subr.mxu0 0.0
        %3759 = vmatpush1.msra.mxu0 0.0
        %3760 = vmatprep.subr.mxu0 0.0
        %3761 = vmatpush1.msra.mxu0 0.0
        %3762 = vmatprep.subr.mxu0 0.0
        %3763 = vmatpush1.msra.mxu0 0.0
        %3764 = vmatprep.subr.mxu0 0.0
        %3765 = vmatpush1.msra.mxu0 0.0
        %3766 = vmatprep.subr.mxu0 0.0
        %3767 = vmatpush1.msra.mxu0 0.0
        %3768 = vmatprep.subr.mxu0 0.0
        %3769 = vmatpush1.msra.mxu0 %v3740
        %3770 = vmatprep.subr.mxu0 0.0
        %3771 = vmatpush1.msra.mxu0 %v3739
        %3772 = vmatprep.subr.mxu0 0.0
        %3773 = vmatpush1.msra.mxu0 %v3738
        %3774 = vmatprep.subr.mxu0 0.0
        %3775 = vmatpush1.msra.mxu0 %v3737
        %3776 = vmatprep.subr.mxu0 0.0
        %3777 = vmatpush2.msra.mxu0 0.0
        %3778 = vmatprep.subr.mxu0 0.0
        %3779 = vmatpush2.msra.mxu0 0.0
        %3780 = vmatprep.subr.mxu0 0.0
        %3781 = vmatpush2.msra.mxu0 0.0
        %3782 = vmatprep.subr.mxu0 0.0
        %3783 = vmatpush2.msra.mxu0 0.0
        %3784 = vmatprep.subr.mxu0 0.0
        %3785 = vmatpush2.msra.mxu0 0.0
        %3786 = vmatprep.subr.mxu0 0.0
        %3787 = vmatpush2.msra.mxu0 0.0
        %3788 = vmatprep.subr.mxu0 0.0
        %3789 = vmatpush2.msra.mxu0 0.0
        %3790 = vmatprep.subr.mxu0 0.0
        %3791 = vmatpush2.msra.mxu0 0.0
        %3792 = vmatprep.subr.mxu0 0.0
        %3793 = vmatpush2.msra.mxu0 0.0
        %3794 = vmatprep.subr.mxu0 0.0
        %3795 = vmatpush2.msra.mxu0 0.0
        %3796 = vmatprep.subr.mxu0 0.0
        %3797 = vmatpush2.msra.mxu0 0.0
        %3798 = vmatprep.subr.mxu0 0.0
        %3799 = vmatpush2.msra.mxu0 0.0
        %3800 = vmatprep.subr.mxu0 0.0
        %3801 = vmatpush2.msra.mxu0 0.0
        %3802 = vmatprep.subr.mxu0 0.0
        %3803 = vmatpush2.msra.mxu0 0.0
        %3804 = vmatprep.subr.mxu0 0.0
        %3805 = vmatpush2.msra.mxu0 0.0
        %3806 = vmatprep.subr.mxu0 0.0
        %3807 = vmatpush2.msra.mxu0 0.0
        %3808 = vmatprep.mubr.f32.mxu0 0.0
        %3809 = vmatmul.mubr.f32.gmra.mxu0 %v3459
        %v3810 = vpop.f32.mrf.mxu0
        %v3811 = vadd.f32 0.0, %v3810
        %v3812 = vpop.f32.mrf.mxu0
        %3813 = vmatprep.mubr.f32.mxu0 0.0
        %3814 = vmatmul.mubr.f32.gmra.mxu0 %v3461
        %v3815 = vpop.f32.mrf.mxu0
        %v3816 = vadd.f32 0.0, %v3815
        %v3817 = vpop.f32.mrf.mxu0
        %3818 = vmatprep.mubr.f32.mxu0 0.0
        %3819 = vmatmul.mubr.f32.gmra.mxu0 %v3463
        %v3820 = vpop.f32.mrf.mxu0
        %v3821 = vadd.f32 0.0, %v3820
        %v3822 = vpop.f32.mrf.mxu0
        %3823 = vmatprep.mubr.f32.mxu0 0.0
        %3824 = vmatmul.mubr.f32.gmra.mxu0 %v3465
        %v3825 = vpop.f32.mrf.mxu0
        %v3826 = vadd.f32 0.0, %v3825
        %v3827 = vpop.f32.mrf.mxu0
        %3828 = vmatprep.mubr.f32.mxu0 0.0
        %3829 = vmatmul.mubr.f32.gmra.mxu0 %v3467
        %v3830 = vpop.f32.mrf.mxu0
        %v3831 = vadd.f32 0.0, %v3830
        %v3832 = vpop.f32.mrf.mxu0
        %3833 = vmatprep.mubr.f32.mxu0 0.0
        %3834 = vmatmul.mubr.f32.gmra.mxu0 %v3469
        %v3835 = vpop.f32.mrf.mxu0
        %v3836 = vadd.f32 0.0, %v3835
        %v3837 = vpop.f32.mrf.mxu0
        %3838 = vmatprep.mubr.f32.mxu0 0.0
        %3839 = vmatmul.mubr.f32.gmra.mxu0 %v3471
        %v3840 = vpop.f32.mrf.mxu0
        %v3841 = vadd.f32 0.0, %v3840
        %v3842 = vpop.f32.mrf.mxu0
        %3843 = vmatprep.mubr.f32.mxu0 0.0
        %3844 = vmatmul.mubr.f32.gmra.mxu0 %v3742
        %v3845 = vpop.f32.mrf.mxu0
        %v3846 = vadd.f32 0.0, %v3845
        %v3847 = vpop.f32.mrf.mxu0
        %3848 = vdwg.mxu0
        %v3849 = vadd.f32 %v3728, %v3811
        %v3850 = vadd.f32 %v3729, %v3816
        %v3851 = vadd.f32 %v3730, %v3821
        %v3852 = vadd.f32 %v3731, %v3826
        %v3853 = vadd.f32 %v3732, %v3831
        %v3854 = vadd.f32 %v3733, %v3836
        %v3855 = vadd.f32 %v3734, %v3841
        %v3856 = vadd.f32 %v3735, %v3846
        %v3858 = vrot.slane %v3283, 1
        %v3859 = vrot.slane %v3284, 1
        %v3860 = vsel %vm580, %v3858, %v3859
        %s3861 = scalar_lea.vmem [#allocation8], 128
        %v3862 = vld [vmem:[%s3861] sm:$0xff]
        %v3863 = vld [vmem:[%s3861 + $0x8] sm:$0xff]
        %v3864 = vld [vmem:[%s3861 + $0x10] sm:$0xff]
        %v3865 = vld [vmem:[%s3861 + $0x18] sm:$0xff]
        %v3866 = vsel %vm501, %v3860, 0
        %3868 = vmatprep.subr.mxu0 0.0
        %3869 = vmatpush1.msra.mxu0 0.0
        %3870 = vmatprep.subr.mxu0 0.0
        %3871 = vmatpush1.msra.mxu0 0.0
        %3872 = vmatprep.subr.mxu0 0.0
        %3873 = vmatpush1.msra.mxu0 0.0
        %3874 = vmatprep.subr.mxu0 0.0
        %3875 = vmatpush1.msra.mxu0 0.0
        %3876 = vmatprep.subr.mxu0 0.0
        %3877 = vmatpush1.msra.mxu0 0.0
        %3878 = vmatprep.subr.mxu0 0.0
        %3879 = vmatpush1.msra.mxu0 0.0
        %3880 = vmatprep.subr.mxu0 0.0
        %3881 = vmatpush1.msra.mxu0 0.0
        %3882 = vmatprep.subr.mxu0 0.0
        %3883 = vmatpush1.msra.mxu0 0.0
        %3884 = vmatprep.subr.mxu0 0.0
        %3885 = vmatpush1.msra.mxu0 0.0
        %3886 = vmatprep.subr.mxu0 0.0
        %3887 = vmatpush1.msra.mxu0 0.0
        %3888 = vmatprep.subr.mxu0 0.0
        %3889 = vmatpush1.msra.mxu0 0.0
        %3890 = vmatprep.subr.mxu0 0.0
        %3891 = vmatpush1.msra.mxu0 0.0
        %3892 = vmatprep.subr.mxu0 0.0
        %3893 = vmatpush1.msra.mxu0 %v3865
        %3894 = vmatprep.subr.mxu0 0.0
        %3895 = vmatpush1.msra.mxu0 %v3864
        %3896 = vmatprep.subr.mxu0 0.0
        %3897 = vmatpush1.msra.mxu0 %v3863
        %3898 = vmatprep.subr.mxu0 0.0
        %3899 = vmatpush1.msra.mxu0 %v3862
        %3900 = vmatprep.subr.mxu0 0.0
        %3901 = vmatpush2.msra.mxu0 0.0
        %3902 = vmatprep.subr.mxu0 0.0
        %3903 = vmatpush2.msra.mxu0 0.0
        %3904 = vmatprep.subr.mxu0 0.0
        %3905 = vmatpush2.msra.mxu0 0.0
        %3906 = vmatprep.subr.mxu0 0.0
        %3907 = vmatpush2.msra.mxu0 0.0
        %3908 = vmatprep.subr.mxu0 0.0
        %3909 = vmatpush2.msra.mxu0 0.0
        %3910 = vmatprep.subr.mxu0 0.0
        %3911 = vmatpush2.msra.mxu0 0.0
        %3912 = vmatprep.subr.mxu0 0.0
        %3913 = vmatpush2.msra.mxu0 0.0
        %3914 = vmatprep.subr.mxu0 0.0
        %3915 = vmatpush2.msra.mxu0 0.0
        %3916 = vmatprep.subr.mxu0 0.0
        %3917 = vmatpush2.msra.mxu0 0.0
        %3918 = vmatprep.subr.mxu0 0.0
        %3919 = vmatpush2.msra.mxu0 0.0
        %3920 = vmatprep.subr.mxu0 0.0
        %3921 = vmatpush2.msra.mxu0 0.0
        %3922 = vmatprep.subr.mxu0 0.0
        %3923 = vmatpush2.msra.mxu0 0.0
        %3924 = vmatprep.subr.mxu0 0.0
        %3925 = vmatpush2.msra.mxu0 0.0
        %3926 = vmatprep.subr.mxu0 0.0
        %3927 = vmatpush2.msra.mxu0 0.0
        %3928 = vmatprep.subr.mxu0 0.0
        %3929 = vmatpush2.msra.mxu0 0.0
        %3930 = vmatprep.subr.mxu0 0.0
        %3931 = vmatpush2.msra.mxu0 0.0
        %3932 = vmatprep.mubr.f32.mxu0 0.0
        %3933 = vmatmul.mubr.f32.gmra.mxu0 %v3338
        %v3934 = vpop.f32.mrf.mxu0
        %v3935 = vadd.f32 0.0, %v3934
        %v3936 = vpop.f32.mrf.mxu0
        %3937 = vmatprep.mubr.f32.mxu0 0.0
        %3938 = vmatmul.mubr.f32.gmra.mxu0 %v3340
        %v3939 = vpop.f32.mrf.mxu0
        %v3940 = vadd.f32 0.0, %v3939
        %v3941 = vpop.f32.mrf.mxu0
        %3942 = vmatprep.mubr.f32.mxu0 0.0
        %3943 = vmatmul.mubr.f32.gmra.mxu0 %v3342
        %v3944 = vpop.f32.mrf.mxu0
        %v3945 = vadd.f32 0.0, %v3944
        %v3946 = vpop.f32.mrf.mxu0
        %3947 = vmatprep.mubr.f32.mxu0 0.0
        %3948 = vmatmul.mubr.f32.gmra.mxu0 %v3344
        %v3949 = vpop.f32.mrf.mxu0
        %v3950 = vadd.f32 0.0, %v3949
        %v3951 = vpop.f32.mrf.mxu0
        %3952 = vmatprep.mubr.f32.mxu0 0.0
        %3953 = vmatmul.mubr.f32.gmra.mxu0 %v3346
        %v3954 = vpop.f32.mrf.mxu0
        %v3955 = vadd.f32 0.0, %v3954
        %v3956 = vpop.f32.mrf.mxu0
        %3957 = vmatprep.mubr.f32.mxu0 0.0
        %3958 = vmatmul.mubr.f32.gmra.mxu0 %v3348
        %v3959 = vpop.f32.mrf.mxu0
        %v3960 = vadd.f32 0.0, %v3959
        %v3961 = vpop.f32.mrf.mxu0
        %3962 = vmatprep.mubr.f32.mxu0 0.0
        %3963 = vmatmul.mubr.f32.gmra.mxu0 %v3350
        %v3964 = vpop.f32.mrf.mxu0
        %v3965 = vadd.f32 0.0, %v3964
        %v3966 = vpop.f32.mrf.mxu0
        %3967 = vmatprep.mubr.f32.mxu0 0.0
        %3968 = vmatmul.mubr.f32.gmra.mxu0 %v3866
        %v3969 = vpop.f32.mrf.mxu0
        %v3970 = vadd.f32 0.0, %v3969
        %v3971 = vpop.f32.mrf.mxu0
        %3972 = vdwg.mxu0
        %v3973 = vadd.f32 %v3849, %v3935
        %v3974 = vadd.f32 %v3850, %v3940
        %v3975 = vadd.f32 %v3851, %v3945
        %v3976 = vadd.f32 %v3852, %v3950
        %v3977 = vadd.f32 %v3853, %v3955
        %v3978 = vadd.f32 %v3854, %v3960
        %v3979 = vadd.f32 %v3855, %v3965
        %v3980 = vadd.f32 %v3856, %v3970
        %v3981 = vrot.slane %v3283, 2
        %v3982 = vrot.slane %v3284, 2
        %v3983 = vsel %vm852, %v3981, %v3982
        %s3984 = scalar_lea.vmem [#allocation8], 160
        %v3985 = vld [vmem:[%s3984] sm:$0xff]
        %v3986 = vld [vmem:[%s3984 + $0x8] sm:$0xff]
        %v3987 = vld [vmem:[%s3984 + $0x10] sm:$0xff]
        %v3988 = vld [vmem:[%s3984 + $0x18] sm:$0xff]
        %v3989 = vsel %vm501, %v3983, 0
        %3991 = vmatprep.subr.mxu0 0.0
        %3992 = vmatpush1.msra.mxu0 0.0
        %3993 = vmatprep.subr.mxu0 0.0
        %3994 = vmatpush1.msra.mxu0 0.0
        %3995 = vmatprep.subr.mxu0 0.0
        %3996 = vmatpush1.msra.mxu0 0.0
        %3997 = vmatprep.subr.mxu0 0.0
        %3998 = vmatpush1.msra.mxu0 0.0
        %3999 = vmatprep.subr.mxu0 0.0
        %4000 = vmatpush1.msra.mxu0 0.0
        %4001 = vmatprep.subr.mxu0 0.0
        %4002 = vmatpush1.msra.mxu0 0.0
        %4003 = vmatprep.subr.mxu0 0.0
        %4004 = vmatpush1.msra.mxu0 0.0
        %4005 = vmatprep.subr.mxu0 0.0
        %4006 = vmatpush1.msra.mxu0 0.0
        %4007 = vmatprep.subr.mxu0 0.0
        %4008 = vmatpush1.msra.mxu0 0.0
        %4009 = vmatprep.subr.mxu0 0.0
        %4010 = vmatpush1.msra.mxu0 0.0
        %4011 = vmatprep.subr.mxu0 0.0
        %4012 = vmatpush1.msra.mxu0 0.0
        %4013 = vmatprep.subr.mxu0 0.0
        %4014 = vmatpush1.msra.mxu0 0.0
        %4015 = vmatprep.subr.mxu0 0.0
        %4016 = vmatpush1.msra.mxu0 %v3988
        %4017 = vmatprep.subr.mxu0 0.0
        %4018 = vmatpush1.msra.mxu0 %v3987
        %4019 = vmatprep.subr.mxu0 0.0
        %4020 = vmatpush1.msra.mxu0 %v3986
        %4021 = vmatprep.subr.mxu0 0.0
        %4022 = vmatpush1.msra.mxu0 %v3985
        %4023 = vmatprep.subr.mxu0 0.0
        %4024 = vmatpush2.msra.mxu0 0.0
        %4025 = vmatprep.subr.mxu0 0.0
        %4026 = vmatpush2.msra.mxu0 0.0
        %4027 = vmatprep.subr.mxu0 0.0
        %4028 = vmatpush2.msra.mxu0 0.0
        %4029 = vmatprep.subr.mxu0 0.0
        %4030 = vmatpush2.msra.mxu0 0.0
        %4031 = vmatprep.subr.mxu0 0.0
        %4032 = vmatpush2.msra.mxu0 0.0
        %4033 = vmatprep.subr.mxu0 0.0
        %4034 = vmatpush2.msra.mxu0 0.0
        %4035 = vmatprep.subr.mxu0 0.0
        %4036 = vmatpush2.msra.mxu0 0.0
        %4037 = vmatprep.subr.mxu0 0.0
        %4038 = vmatpush2.msra.mxu0 0.0
        %4039 = vmatprep.subr.mxu0 0.0
        %4040 = vmatpush2.msra.mxu0 0.0
        %4041 = vmatprep.subr.mxu0 0.0
        %4042 = vmatpush2.msra.mxu0 0.0
        %4043 = vmatprep.subr.mxu0 0.0
        %4044 = vmatpush2.msra.mxu0 0.0
        %4045 = vmatprep.subr.mxu0 0.0
        %4046 = vmatpush2.msra.mxu0 0.0
        %4047 = vmatprep.subr.mxu0 0.0
        %4048 = vmatpush2.msra.mxu0 0.0
        %4049 = vmatprep.subr.mxu0 0.0
        %4050 = vmatpush2.msra.mxu0 0.0
        %4051 = vmatprep.subr.mxu0 0.0
        %4052 = vmatpush2.msra.mxu0 0.0
        %4053 = vmatprep.subr.mxu0 0.0
        %4054 = vmatpush2.msra.mxu0 0.0
        %4055 = vmatprep.mubr.f32.mxu0 0.0
        %4056 = vmatmul.mubr.f32.gmra.mxu0 %v3609
        %v4057 = vpop.f32.mrf.mxu0
        %v4058 = vadd.f32 0.0, %v4057
        %v4059 = vpop.f32.mrf.mxu0
        %4060 = vmatprep.mubr.f32.mxu0 0.0
        %4061 = vmatmul.mubr.f32.gmra.mxu0 %v3611
        %v4062 = vpop.f32.mrf.mxu0
        %v4063 = vadd.f32 0.0, %v4062
        %v4064 = vpop.f32.mrf.mxu0
        %4065 = vmatprep.mubr.f32.mxu0 0.0
        %4066 = vmatmul.mubr.f32.gmra.mxu0 %v3613
        %v4067 = vpop.f32.mrf.mxu0
        %v4068 = vadd.f32 0.0, %v4067
        %v4069 = vpop.f32.mrf.mxu0
        %4070 = vmatprep.mubr.f32.mxu0 0.0
        %4071 = vmatmul.mubr.f32.gmra.mxu0 %v3615
        %v4072 = vpop.f32.mrf.mxu0
        %v4073 = vadd.f32 0.0, %v4072
        %v4074 = vpop.f32.mrf.mxu0
        %4075 = vmatprep.mubr.f32.mxu0 0.0
        %4076 = vmatmul.mubr.f32.gmra.mxu0 %v3617
        %v4077 = vpop.f32.mrf.mxu0
        %v4078 = vadd.f32 0.0, %v4077
        %v4079 = vpop.f32.mrf.mxu0
        %4080 = vmatprep.mubr.f32.mxu0 0.0
        %4081 = vmatmul.mubr.f32.gmra.mxu0 %v3619
        %v4082 = vpop.f32.mrf.mxu0
        %v4083 = vadd.f32 0.0, %v4082
        %v4084 = vpop.f32.mrf.mxu0
        %4085 = vmatprep.mubr.f32.mxu0 0.0
        %4086 = vmatmul.mubr.f32.gmra.mxu0 %v3621
        %v4087 = vpop.f32.mrf.mxu0
        %v4088 = vadd.f32 0.0, %v4087
        %v4089 = vpop.f32.mrf.mxu0
        %4090 = vmatprep.mubr.f32.mxu0 0.0
        %4091 = vmatmul.mubr.f32.gmra.mxu0 %v3989
        %v4092 = vpop.f32.mrf.mxu0
        %v4093 = vadd.f32 0.0, %v4092
        %v4094 = vpop.f32.mrf.mxu0
        %4095 = vdwg.mxu0
        %v4096 = vadd.f32 %v3973, %v4058
        %v4097 = vadd.f32 %v3974, %v4063
        %v4098 = vadd.f32 %v3975, %v4068
        %v4099 = vadd.f32 %v3976, %v4073
        %v4100 = vadd.f32 %v3977, %v4078
        %v4101 = vadd.f32 %v3978, %v4083
        %v4102 = vadd.f32 %v3979, %v4088
        %v4103 = vadd.f32 %v3980, %v4093
        %s4104 = scalar_lea.vmem [#allocation8], 192
        %v4105 = vld [vmem:[%s4104] sm:$0xff]
        %v4106 = vld [vmem:[%s4104 + $0x8] sm:$0xff]
        %v4107 = vld [vmem:[%s4104 + $0x10] sm:$0xff]
        %v4108 = vld [vmem:[%s4104 + $0x18] sm:$0xff]
        %v4110 = vsel %vm501, %v3285, 0
        %4112 = vmatprep.subr.mxu0 0.0
        %4113 = vmatpush1.msra.mxu0 0.0
        %4114 = vmatprep.subr.mxu0 0.0
        %4115 = vmatpush1.msra.mxu0 0.0
        %4116 = vmatprep.subr.mxu0 0.0
        %4117 = vmatpush1.msra.mxu0 0.0
        %4118 = vmatprep.subr.mxu0 0.0
        %4119 = vmatpush1.msra.mxu0 0.0
        %4120 = vmatprep.subr.mxu0 0.0
        %4121 = vmatpush1.msra.mxu0 0.0
        %4122 = vmatprep.subr.mxu0 0.0
        %4123 = vmatpush1.msra.mxu0 0.0
        %4124 = vmatprep.subr.mxu0 0.0
        %4125 = vmatpush1.msra.mxu0 0.0
        %4126 = vmatprep.subr.mxu0 0.0
        %4127 = vmatpush1.msra.mxu0 0.0
        %4128 = vmatprep.subr.mxu0 0.0
        %4129 = vmatpush1.msra.mxu0 0.0
        %4130 = vmatprep.subr.mxu0 0.0
        %4131 = vmatpush1.msra.mxu0 0.0
        %4132 = vmatprep.subr.mxu0 0.0
        %4133 = vmatpush1.msra.mxu0 0.0
        %4134 = vmatprep.subr.mxu0 0.0
        %4135 = vmatpush1.msra.mxu0 0.0
        %4136 = vmatprep.subr.mxu0 0.0
        %4137 = vmatpush1.msra.mxu0 %v4108
        %4138 = vmatprep.subr.mxu0 0.0
        %4139 = vmatpush1.msra.mxu0 %v4107
        %4140 = vmatprep.subr.mxu0 0.0
        %4141 = vmatpush1.msra.mxu0 %v4106
        %4142 = vmatprep.subr.mxu0 0.0
        %4143 = vmatpush1.msra.mxu0 %v4105
        %4144 = vmatprep.subr.mxu0 0.0
        %4145 = vmatpush2.msra.mxu0 0.0
        %4146 = vmatprep.subr.mxu0 0.0
        %4147 = vmatpush2.msra.mxu0 0.0
        %4148 = vmatprep.subr.mxu0 0.0
        %4149 = vmatpush2.msra.mxu0 0.0
        %4150 = vmatprep.subr.mxu0 0.0
        %4151 = vmatpush2.msra.mxu0 0.0
        %4152 = vmatprep.subr.mxu0 0.0
        %4153 = vmatpush2.msra.mxu0 0.0
        %4154 = vmatprep.subr.mxu0 0.0
        %4155 = vmatpush2.msra.mxu0 0.0
        %4156 = vmatprep.subr.mxu0 0.0
        %4157 = vmatpush2.msra.mxu0 0.0
        %4158 = vmatprep.subr.mxu0 0.0
        %4159 = vmatpush2.msra.mxu0 0.0
        %4160 = vmatprep.subr.mxu0 0.0
        %4161 = vmatpush2.msra.mxu0 0.0
        %4162 = vmatprep.subr.mxu0 0.0
        %4163 = vmatpush2.msra.mxu0 0.0
        %4164 = vmatprep.subr.mxu0 0.0
        %4165 = vmatpush2.msra.mxu0 0.0
        %4166 = vmatprep.subr.mxu0 0.0
        %4167 = vmatpush2.msra.mxu0 0.0
        %4168 = vmatprep.subr.mxu0 0.0
        %4169 = vmatpush2.msra.mxu0 0.0
        %4170 = vmatprep.subr.mxu0 0.0
        %4171 = vmatpush2.msra.mxu0 0.0
        %4172 = vmatprep.subr.mxu0 0.0
        %4173 = vmatpush2.msra.mxu0 0.0
        %4174 = vmatprep.subr.mxu0 0.0
        %4175 = vmatpush2.msra.mxu0 0.0
        %4176 = vmatprep.mubr.f32.mxu0 0.0
        %4177 = vmatmul.mubr.f32.gmra.mxu0 %v3461
        %v4178 = vpop.f32.mrf.mxu0
        %v4179 = vadd.f32 0.0, %v4178
        %v4180 = vpop.f32.mrf.mxu0
        %4181 = vmatprep.mubr.f32.mxu0 0.0
        %4182 = vmatmul.mubr.f32.gmra.mxu0 %v3463
        %v4183 = vpop.f32.mrf.mxu0
        %v4184 = vadd.f32 0.0, %v4183
        %v4185 = vpop.f32.mrf.mxu0
        %4186 = vmatprep.mubr.f32.mxu0 0.0
        %4187 = vmatmul.mubr.f32.gmra.mxu0 %v3465
        %v4188 = vpop.f32.mrf.mxu0
        %v4189 = vadd.f32 0.0, %v4188
        %v4190 = vpop.f32.mrf.mxu0
        %4191 = vmatprep.mubr.f32.mxu0 0.0
        %4192 = vmatmul.mubr.f32.gmra.mxu0 %v3467
        %v4193 = vpop.f32.mrf.mxu0
        %v4194 = vadd.f32 0.0, %v4193
        %v4195 = vpop.f32.mrf.mxu0
        %4196 = vmatprep.mubr.f32.mxu0 0.0
        %4197 = vmatmul.mubr.f32.gmra.mxu0 %v3469
        %v4198 = vpop.f32.mrf.mxu0
        %v4199 = vadd.f32 0.0, %v4198
        %v4200 = vpop.f32.mrf.mxu0
        %4201 = vmatprep.mubr.f32.mxu0 0.0
        %4202 = vmatmul.mubr.f32.gmra.mxu0 %v3471
        %v4203 = vpop.f32.mrf.mxu0
        %v4204 = vadd.f32 0.0, %v4203
        %v4205 = vpop.f32.mrf.mxu0
        %4206 = vmatprep.mubr.f32.mxu0 0.0
        %4207 = vmatmul.mubr.f32.gmra.mxu0 %v3742
        %v4208 = vpop.f32.mrf.mxu0
        %v4209 = vadd.f32 0.0, %v4208
        %v4210 = vpop.f32.mrf.mxu0
        %4211 = vmatprep.mubr.f32.mxu0 0.0
        %4212 = vmatmul.mubr.f32.gmra.mxu0 %v4110
        %v4213 = vpop.f32.mrf.mxu0
        %v4214 = vadd.f32 0.0, %v4213
        %v4215 = vpop.f32.mrf.mxu0
        %4216 = vdwg.mxu0
        %v4217 = vadd.f32 %v4096, %v4179
        %v4218 = vadd.f32 %v4097, %v4184
        %v4219 = vadd.f32 %v4098, %v4189
        %v4220 = vadd.f32 %v4099, %v4194
        %v4221 = vadd.f32 %v4100, %v4199
        %v4222 = vadd.f32 %v4101, %v4204
        %v4223 = vadd.f32 %v4102, %v4209
        %v4224 = vadd.f32 %v4103, %v4214
        %v4226 = vrot.slane %v3285, 1
        %v4227 = vrot.slane %v3286, 1
        %v4228 = vsel %vm580, %v4226, %v4227
        %s4229 = scalar_lea.vmem [#allocation8], 224
        %v4230 = vld [vmem:[%s4229] sm:$0xff]
        %v4231 = vld [vmem:[%s4229 + $0x8] sm:$0xff]
        %v4232 = vld [vmem:[%s4229 + $0x10] sm:$0xff]
        %v4233 = vld [vmem:[%s4229 + $0x18] sm:$0xff]
        %v4234 = vsel %vm501, %v4228, 0
        %4236 = vmatprep.subr.mxu0 0.0
        %4237 = vmatpush1.msra.mxu0 0.0
        %4238 = vmatprep.subr.mxu0 0.0
        %4239 = vmatpush1.msra.mxu0 0.0
        %4240 = vmatprep.subr.mxu0 0.0
        %4241 = vmatpush1.msra.mxu0 0.0
        %4242 = vmatprep.subr.mxu0 0.0
        %4243 = vmatpush1.msra.mxu0 0.0
        %4244 = vmatprep.subr.mxu0 0.0
        %4245 = vmatpush1.msra.mxu0 0.0
        %4246 = vmatprep.subr.mxu0 0.0
        %4247 = vmatpush1.msra.mxu0 0.0
        %4248 = vmatprep.subr.mxu0 0.0
        %4249 = vmatpush1.msra.mxu0 0.0
        %4250 = vmatprep.subr.mxu0 0.0
        %4251 = vmatpush1.msra.mxu0 0.0
        %4252 = vmatprep.subr.mxu0 0.0
        %4253 = vmatpush1.msra.mxu0 0.0
        %4254 = vmatprep.subr.mxu0 0.0
        %4255 = vmatpush1.msra.mxu0 0.0
        %4256 = vmatprep.subr.mxu0 0.0
        %4257 = vmatpush1.msra.mxu0 0.0
        %4258 = vmatprep.subr.mxu0 0.0
        %4259 = vmatpush1.msra.mxu0 0.0
        %4260 = vmatprep.subr.mxu0 0.0
        %4261 = vmatpush1.msra.mxu0 %v4233
        %4262 = vmatprep.subr.mxu0 0.0
        %4263 = vmatpush1.msra.mxu0 %v4232
        %4264 = vmatprep.subr.mxu0 0.0
        %4265 = vmatpush1.msra.mxu0 %v4231
        %4266 = vmatprep.subr.mxu0 0.0
        %4267 = vmatpush1.msra.mxu0 %v4230
        %4268 = vmatprep.subr.mxu0 0.0
        %4269 = vmatpush2.msra.mxu0 0.0
        %4270 = vmatprep.subr.mxu0 0.0
        %4271 = vmatpush2.msra.mxu0 0.0
        %4272 = vmatprep.subr.mxu0 0.0
        %4273 = vmatpush2.msra.mxu0 0.0
        %4274 = vmatprep.subr.mxu0 0.0
        %4275 = vmatpush2.msra.mxu0 0.0
        %4276 = vmatprep.subr.mxu0 0.0
        %4277 = vmatpush2.msra.mxu0 0.0
        %4278 = vmatprep.subr.mxu0 0.0
        %4279 = vmatpush2.msra.mxu0 0.0
        %4280 = vmatprep.subr.mxu0 0.0
        %4281 = vmatpush2.msra.mxu0 0.0
        %4282 = vmatprep.subr.mxu0 0.0
        %4283 = vmatpush2.msra.mxu0 0.0
        %4284 = vmatprep.subr.mxu0 0.0
        %4285 = vmatpush2.msra.mxu0 0.0
        %4286 = vmatprep.subr.mxu0 0.0
        %4287 = vmatpush2.msra.mxu0 0.0
        %4288 = vmatprep.subr.mxu0 0.0
        %4289 = vmatpush2.msra.mxu0 0.0
        %4290 = vmatprep.subr.mxu0 0.0
        %4291 = vmatpush2.msra.mxu0 0.0
        %4292 = vmatprep.subr.mxu0 0.0
        %4293 = vmatpush2.msra.mxu0 0.0
        %4294 = vmatprep.subr.mxu0 0.0
        %4295 = vmatpush2.msra.mxu0 0.0
        %4296 = vmatprep.subr.mxu0 0.0
        %4297 = vmatpush2.msra.mxu0 0.0
        %4298 = vmatprep.subr.mxu0 0.0
        %4299 = vmatpush2.msra.mxu0 0.0
        %4300 = vmatprep.mubr.f32.mxu0 0.0
        %4301 = vmatmul.mubr.f32.gmra.mxu0 %v3340
        %v4302 = vpop.f32.mrf.mxu0
        %v4303 = vadd.f32 0.0, %v4302
        %v4304 = vpop.f32.mrf.mxu0
        %4305 = vmatprep.mubr.f32.mxu0 0.0
        %4306 = vmatmul.mubr.f32.gmra.mxu0 %v3342
        %v4307 = vpop.f32.mrf.mxu0
        %v4308 = vadd.f32 0.0, %v4307
        %v4309 = vpop.f32.mrf.mxu0
        %4310 = vmatprep.mubr.f32.mxu0 0.0
        %4311 = vmatmul.mubr.f32.gmra.mxu0 %v3344
        %v4312 = vpop.f32.mrf.mxu0
        %v4313 = vadd.f32 0.0, %v4312
        %v4314 = vpop.f32.mrf.mxu0
        %4315 = vmatprep.mubr.f32.mxu0 0.0
        %4316 = vmatmul.mubr.f32.gmra.mxu0 %v3346
        %v4317 = vpop.f32.mrf.mxu0
        %v4318 = vadd.f32 0.0, %v4317
        %v4319 = vpop.f32.mrf.mxu0
        %4320 = vmatprep.mubr.f32.mxu0 0.0
        %4321 = vmatmul.mubr.f32.gmra.mxu0 %v3348
        %v4322 = vpop.f32.mrf.mxu0
        %v4323 = vadd.f32 0.0, %v4322
        %v4324 = vpop.f32.mrf.mxu0
        %4325 = vmatprep.mubr.f32.mxu0 0.0
        %4326 = vmatmul.mubr.f32.gmra.mxu0 %v3350
        %v4327 = vpop.f32.mrf.mxu0
        %v4328 = vadd.f32 0.0, %v4327
        %v4329 = vpop.f32.mrf.mxu0
        %4330 = vmatprep.mubr.f32.mxu0 0.0
        %4331 = vmatmul.mubr.f32.gmra.mxu0 %v3866
        %v4332 = vpop.f32.mrf.mxu0
        %v4333 = vadd.f32 0.0, %v4332
        %v4334 = vpop.f32.mrf.mxu0
        %4335 = vmatprep.mubr.f32.mxu0 0.0
        %4336 = vmatmul.mubr.f32.gmra.mxu0 %v4234
        %v4337 = vpop.f32.mrf.mxu0
        %v4338 = vadd.f32 0.0, %v4337
        %v4339 = vpop.f32.mrf.mxu0
        %4340 = vdwg.mxu0
        %v4341 = vadd.f32 %v4217, %v4303
        %v4342 = vadd.f32 %v4218, %v4308
        %v4343 = vadd.f32 %v4219, %v4313
        %v4344 = vadd.f32 %v4220, %v4318
        %v4345 = vadd.f32 %v4221, %v4323
        %v4346 = vadd.f32 %v4222, %v4328
        %v4347 = vadd.f32 %v4223, %v4333
        %v4348 = vadd.f32 %v4224, %v4338
        %v4349 = vrot.slane %v3285, 2
        %v4350 = vrot.slane %v3286, 2
        %v4351 = vsel %vm852, %v4349, %v4350
        %s4352 = scalar_lea.vmem [#allocation8], 256
        %v4353 = vld [vmem:[%s4352] sm:$0xff]
        %v4354 = vld [vmem:[%s4352 + $0x8] sm:$0xff]
        %v4355 = vld [vmem:[%s4352 + $0x10] sm:$0xff]
        %v4356 = vld [vmem:[%s4352 + $0x18] sm:$0xff]
        %v4357 = vsel %vm501, %v4351, 0
        %4359 = vmatprep.subr.mxu0 0.0
        %4360 = vmatpush1.msra.mxu0 0.0
        %4361 = vmatprep.subr.mxu0 0.0
        %4362 = vmatpush1.msra.mxu0 0.0
        %4363 = vmatprep.subr.mxu0 0.0
        %4364 = vmatpush1.msra.mxu0 0.0
        %4365 = vmatprep.subr.mxu0 0.0
        %4366 = vmatpush1.msra.mxu0 0.0
        %4367 = vmatprep.subr.mxu0 0.0
        %4368 = vmatpush1.msra.mxu0 0.0
        %4369 = vmatprep.subr.mxu0 0.0
        %4370 = vmatpush1.msra.mxu0 0.0
        %4371 = vmatprep.subr.mxu0 0.0
        %4372 = vmatpush1.msra.mxu0 0.0
        %4373 = vmatprep.subr.mxu0 0.0
        %4374 = vmatpush1.msra.mxu0 0.0
        %4375 = vmatprep.subr.mxu0 0.0
        %4376 = vmatpush1.msra.mxu0 0.0
        %4377 = vmatprep.subr.mxu0 0.0
        %4378 = vmatpush1.msra.mxu0 0.0
        %4379 = vmatprep.subr.mxu0 0.0
        %4380 = vmatpush1.msra.mxu0 0.0
        %4381 = vmatprep.subr.mxu0 0.0
        %4382 = vmatpush1.msra.mxu0 0.0
        %4383 = vmatprep.subr.mxu0 0.0
        %4384 = vmatpush1.msra.mxu0 %v4356
        %4385 = vmatprep.subr.mxu0 0.0
        %4386 = vmatpush1.msra.mxu0 %v4355
        %4387 = vmatprep.subr.mxu0 0.0
        %4388 = vmatpush1.msra.mxu0 %v4354
        %4389 = vmatprep.subr.mxu0 0.0
        %4390 = vmatpush1.msra.mxu0 %v4353
        %4391 = vmatprep.subr.mxu0 0.0
        %4392 = vmatpush2.msra.mxu0 0.0
        %4393 = vmatprep.subr.mxu0 0.0
        %4394 = vmatpush2.msra.mxu0 0.0
        %4395 = vmatprep.subr.mxu0 0.0
        %4396 = vmatpush2.msra.mxu0 0.0
        %4397 = vmatprep.subr.mxu0 0.0
        %4398 = vmatpush2.msra.mxu0 0.0
        %4399 = vmatprep.subr.mxu0 0.0
        %4400 = vmatpush2.msra.mxu0 0.0
        %4401 = vmatprep.subr.mxu0 0.0
        %4402 = vmatpush2.msra.mxu0 0.0
        %4403 = vmatprep.subr.mxu0 0.0
        %4404 = vmatpush2.msra.mxu0 0.0
        %4405 = vmatprep.subr.mxu0 0.0
        %4406 = vmatpush2.msra.mxu0 0.0
        %4407 = vmatprep.subr.mxu0 0.0
        %4408 = vmatpush2.msra.mxu0 0.0
        %4409 = vmatprep.subr.mxu0 0.0
        %4410 = vmatpush2.msra.mxu0 0.0
        %4411 = vmatprep.subr.mxu0 0.0
        %4412 = vmatpush2.msra.mxu0 0.0
        %4413 = vmatprep.subr.mxu0 0.0
        %4414 = vmatpush2.msra.mxu0 0.0
        %4415 = vmatprep.subr.mxu0 0.0
        %4416 = vmatpush2.msra.mxu0 0.0
        %4417 = vmatprep.subr.mxu0 0.0
        %4418 = vmatpush2.msra.mxu0 0.0
        %4419 = vmatprep.subr.mxu0 0.0
        %4420 = vmatpush2.msra.mxu0 0.0
        %4421 = vmatprep.subr.mxu0 0.0
        %4422 = vmatpush2.msra.mxu0 0.0
        %4423 = vmatprep.mubr.f32.mxu0 0.0
        %4424 = vmatmul.mubr.f32.gmra.mxu0 %v3611
        %v4425 = vpop.f32.mrf.mxu0
        %v4426 = vadd.f32 0.0, %v4425
        %v4427 = vpop.f32.mrf.mxu0
        %4428 = vmatprep.mubr.f32.mxu0 0.0
        %4429 = vmatmul.mubr.f32.gmra.mxu0 %v3613
        %v4430 = vpop.f32.mrf.mxu0
        %v4431 = vadd.f32 0.0, %v4430
        %v4432 = vpop.f32.mrf.mxu0
        %4433 = vmatprep.mubr.f32.mxu0 0.0
        %4434 = vmatmul.mubr.f32.gmra.mxu0 %v3615
        %v4435 = vpop.f32.mrf.mxu0
        %v4436 = vadd.f32 0.0, %v4435
        %v4437 = vpop.f32.mrf.mxu0
        %4438 = vmatprep.mubr.f32.mxu0 0.0
        %4439 = vmatmul.mubr.f32.gmra.mxu0 %v3617
        %v4440 = vpop.f32.mrf.mxu0
        %v4441 = vadd.f32 0.0, %v4440
        %v4442 = vpop.f32.mrf.mxu0
        %4443 = vmatprep.mubr.f32.mxu0 0.0
        %4444 = vmatmul.mubr.f32.gmra.mxu0 %v3619
        %v4445 = vpop.f32.mrf.mxu0
        %v4446 = vadd.f32 0.0, %v4445
        %v4447 = vpop.f32.mrf.mxu0
        %4448 = vmatprep.mubr.f32.mxu0 0.0
        %4449 = vmatmul.mubr.f32.gmra.mxu0 %v3621
        %v4450 = vpop.f32.mrf.mxu0
        %v4451 = vadd.f32 0.0, %v4450
        %v4452 = vpop.f32.mrf.mxu0
        %4453 = vmatprep.mubr.f32.mxu0 0.0
        %4454 = vmatmul.mubr.f32.gmra.mxu0 %v3989
        %v4455 = vpop.f32.mrf.mxu0
        %v4456 = vadd.f32 0.0, %v4455
        %v4457 = vpop.f32.mrf.mxu0
        %4458 = vmatprep.mubr.f32.mxu0 0.0
        %4459 = vmatmul.mubr.f32.gmra.mxu0 %v4357
        %v4460 = vpop.f32.mrf.mxu0
        %v4461 = vadd.f32 0.0, %v4460
        %v4462 = vpop.f32.mrf.mxu0
        %4463 = vdwg.mxu0
        %v4464 = vadd.f32 %v4341, %v4426
        %v4465 = vadd.f32 %v4342, %v4431
        %v4466 = vadd.f32 %v4343, %v4436
        %v4467 = vadd.f32 %v4344, %v4441
        %v4468 = vadd.f32 %v4345, %v4446
        %v4469 = vadd.f32 %v4346, %v4451
        %v4470 = vadd.f32 %v4347, %v4456
        %v4471 = vadd.f32 %v4348, %v4461
        %v4472 = vld [vmem:[%s9] sm:$0x1]
        %v4474 = vlaneseq
        %v4475 = vshrl.u32 %v4474, 7
        %v4476 = vsub.s32 0, %v4475
        %v4477 = vrot.slane %v4472, %v4476
        %v4479 = vadd.f32 %v4464, %v4477
        %v4480 = vadd.f32 %v4465, %v4477
        %v4481 = vadd.f32 %v4466, %v4477
        %v4482 = vadd.f32 %v4467, %v4477
        %v4483 = vadd.f32 %v4468, %v4477
        %v4484 = vadd.f32 %v4469, %v4477
        %v4485 = vadd.f32 %v4470, %v4477
        %v4486 = vadd.f32 %v4471, %v4477
        %v4487 = vadd.f32 %v4479, %v3243
        %v4488 = vadd.f32 %v4480, %v3244
        %v4489 = vadd.f32 %v4481, %v3245
        %v4490 = vadd.f32 %v4482, %v3246
        %v4491 = vadd.f32 %v4483, %v3247
        %v4492 = vadd.f32 %v4484, %v3248
        %v4493 = vadd.f32 %v4485, %v3249
        %v4494 = vadd.f32 %v4486, %v3250
        %v4495 = vmax.f32 %v4487, 0.0
        %v4496 = vmax.f32 %v4488, 0.0
        %v4497 = vmax.f32 %v4489, 0.0
        %v4498 = vmax.f32 %v4490, 0.0
        %v4499 = vmax.f32 %v4491, 0.0
        %v4500 = vmax.f32 %v4492, 0.0
        %v4501 = vmax.f32 %v4493, 0.0
        %v4502 = vmax.f32 %v4494, 0.0
        %4503 = vst.msk [vmem:[%s500] sm:$0xff] %vm501, %v4495
        %4504 = vst.msk [vmem:[%s500 + $0x8] sm:$0xff] %vm501, %v4496
        %4505 = vst.msk [vmem:[%s500 + $0x10] sm:$0xff] %vm501, %v4497
        %4506 = vst.msk [vmem:[%s500 + $0x18] sm:$0xff] %vm501, %v4498
        %4507 = vst.msk [vmem:[%s500 + $0x20] sm:$0xff] %vm501, %v4499
        %4508 = vst.msk [vmem:[%s500 + $0x28] sm:$0xff] %vm501, %v4500
        %4509 = vst.msk [vmem:[%s500 + $0x30] sm:$0xff] %vm501, %v4501
        %4510 = vst.msk [vmem:[%s500 + $0x38] sm:$0xff] %vm501, %v4502
        %s4511 = sand.u32 %s257, 1
        %s4512 = scalar_lea.sflag [#allocation5], %s4511
        %s4513 = sand.u32 %s257, 1
        %s4514 = smul.addr %s4513, 64
        %s4515 = scalar_lea.vmem [#allocation9], %s4514
        %p4516 = scmp.lt.s32.totalorder %s29, 1
        %s4517 = scalar_select %p4516, %s29, 1
        %s4518 = smul.addr %s4517, 8
        %s4519 = smul.addr %s4518, 8
        %s4520 = scalar_lea.vmem %s11, %s4519
        %p4521 = scmp.lt.s32.totalorder %s29, 1
        %s4522 = scalar_select %p4521, %s29, 1
        %s4523 = smul.addr %s4522, 8
        %s4524 = smul.addr %s4523, 8
        %s4525 = scalar_lea.vmem %s12, %s4524
        // Predicated region
        $region73: #{tpu_custom_call.1} parent=59 // pred_check
          %p4526 = pneg %p267
        $region74: #{tpu_custom_call.1} parent=59 // pred_check_branch
          %4528 = sbr.rel (%p4526) target = $region76
        $region75: #{tpu_custom_call.1} parent=59 // pred_region
          %s4530 = ssub.s32 1024, 1024
          %4531 = vsyncadd %s4512, %s4530
          %s4532 = smul.addr %s29, 8
          %s4533 = smul.addr %s4532, 128
          %s4534 = scalar_lea.hbm %s10, %s4533
          %s4535 = sshll.u32 %s4515, 4
          %s4536 = int_to_ptr.vmem [resolvable:$true] %s4535
          %4541 = dma.vmem_to_hbm [thread:$0]  %s4536, 1024, %s4534, %s4512, 128, 128, 8
        $region76: #{tpu_custom_call.1} parent=59 // pred_fallthru
          _
        // Predicated region
        $region77: #{tpu_custom_call.1} parent=59 // pred_check
          %p4542 = pneg %p293
        $region78: #{tpu_custom_call.1} parent=59 // pred_check_branch
          %4544 = sbr.rel (%p4542) target = $region80
        $region79: #{tpu_custom_call.1} parent=59 // pred_region
          _
        $region80: #{tpu_custom_call.1} parent=59 // pred_fallthru
          _
        // Predicated region
        $region81: #{tpu_custom_call.1} parent=59 // pred_check
          %p4545 = pneg %p319
        $region82: #{tpu_custom_call.1} parent=59 // pred_check_branch
          %4547 = sbr.rel (%p4545) target = $region84
        $region83: #{tpu_custom_call.1} parent=59 // pred_region
          _
        $region84: #{tpu_custom_call.1} parent=59 // pred_fallthru
          _
      $region60: #{tpu_custom_call.1} parent=5 // pred_fallthru
        _
      %p4548 = scmp.le.s32.totalorder 2, %s24
      // Predicated region
      $region85: #{tpu_custom_call.1} parent=5 // pred_check
        %p4549 = pneg %p4548
      $region86: #{tpu_custom_call.1} parent=5 // pred_check_branch
        %4551 = sbr.rel (%p4549) target = $region88
      $region87: #{tpu_custom_call.1} parent=5 // pred_region
        %s4552 = ssub.s32 %s24, 2
        // Predicated region
        $region89: #{tpu_custom_call.1} parent=87 // pred_check
          %p4553 = pneg %p273
        $region90: #{tpu_custom_call.1} parent=87 // pred_check_branch
          %4555 = sbr.rel (%p4553) target = $region92
        $region91: #{tpu_custom_call.1} parent=87 // pred_region
          %s4556 = sand.u32 %s258, 1
          %s4557 = scalar_lea.sflag [#allocation5], %s4556
          %s4558 = sand.u32 %s258, 1
          %s4559 = smul.addr %s4558, 64
          %s4560 = scalar_lea.vmem [#allocation9], %s4559
          %4561 = dma.done %s4557, 1024
        $region92: #{tpu_custom_call.1} parent=87 // pred_fallthru
          _
        // Predicated region
        $region93: #{tpu_custom_call.1} parent=87 // pred_check
          %p4562 = pneg %p299
        $region94: #{tpu_custom_call.1} parent=87 // pred_check_branch
          %4564 = sbr.rel (%p4562) target = $region96
        $region95: #{tpu_custom_call.1} parent=87 // pred_region
          %p4565 = scmp.lt.s32.totalorder %s30, 1
          %s4566 = scalar_select %p4565, %s30, 1
          %s4567 = smul.addr %s4566, 8
          %s4568 = smul.addr %s4567, 8
          %s4569 = scalar_lea.vmem %s11, %s4568
        $region96: #{tpu_custom_call.1} parent=87 // pred_fallthru
          _
        // Predicated region
        $region97: #{tpu_custom_call.1} parent=87 // pred_check
          %p4570 = pneg %p325
        $region98: #{tpu_custom_call.1} parent=87 // pred_check_branch
          %4572 = sbr.rel (%p4570) target = $region100
        $region99: #{tpu_custom_call.1} parent=87 // pred_region
          %p4573 = scmp.lt.s32.totalorder %s30, 1
          %s4574 = scalar_select %p4573, %s30, 1
          %s4575 = smul.addr %s4574, 8
          %s4576 = smul.addr %s4575, 8
          %s4577 = scalar_lea.vmem %s12, %s4576
        $region100: #{tpu_custom_call.1} parent=87 // pred_fallthru
          _
      $region88: #{tpu_custom_call.1} parent=5 // pred_fallthru
        _
    $region6: #{tpu_custom_call.1} parent=1 // loop_footer
      %s28 = sadd.s32 1, %s24
    $region7: #{tpu_custom_call.1} parent=1 // loop_footer_branch
      %23 = sbr.rel target = $region3
    $region8: #{tpu_custom_call.1} parent=1 // loop_exit
      _
    %4578 = vsyncpa [#allocation4], 1
    %s4579 = scalar_lea.sflag [#allocation4], 1
    %4580 = vsyncpa %s4579, 1
    %4581 = vsyncpa [#allocation7], 1
    %4582 = vsyncpa [#allocation5], 1
    %s4583 = scalar_lea.sflag [#allocation5], 1
    %4584 = vsyncpa %s4583, 1

</llo_original>
